<compile_context>
chip_gen: v7x
topology: tpu7x:2x2x1
jax: 0.10.0
libtpu: 0.0.40
codegen_flags: <defaults>
</compile_context>

<pallas_src>
import functools

import jax
import jax.numpy as jnp
from jax.experimental import pallas as pl
from jax.experimental.pallas import tpu as pltpu


# ----------------------------------------------------------------------------
# Fused whole-model kernel (one grid step = one batch element)
# ----------------------------------------------------------------------------
def _bert_kernel(
    ys_ref, riw, rib,
    qw, qb, kw, kb, vw, vb, ow, ob,
    l1w, l1b, l2w, l2b, n1g, n1b, n2g, n2b,
    fg, fb, row, rob,
    o_ref,
    *, n_layer, n_head, head_dim, ln_eps,
):
    def mm(a, b):
        # bf16 MXU operands, f32 accumulation (native on v6e/v7x, fine on v5e).
        return jnp.dot(a.astype(jnp.bfloat16), b.astype(jnp.bfloat16),
                       preferred_element_type=jnp.float32)

    def layer_norm(h, g, b):
        # keep LN statistics / elementwise math in f32 (v5e has no bf16 VPU/EUP)
        mu = jnp.mean(h, axis=-1, keepdims=True)
        var = jnp.mean((h - mu) ** 2, axis=-1, keepdims=True)
        return (h - mu) * jax.lax.rsqrt(var + ln_eps) * g + b

    scale = 1.0 / (head_dim ** 0.5)

    # _read_in : (S, Din) @ (Din, E) + b  ->  (S, E)
    x = mm(ys_ref[0], riw[...]) + rib[...]

    for l in range(n_layer):
        xb = x.astype(jnp.bfloat16)

        # --- multi-head self-attention ---------------------------------
        # per-head weights (static ref indexing, no transposes); the head
        # concat is folded into the out-proj accumulation.
        attn = jnp.zeros_like(x)
        for h in range(n_head):
            q = (mm(xb, qw[l, h]) + qb[l, h]) * scale      # (S, Dh), scale q not s
            k = mm(xb, kw[l, h]) + kb[l, h]                # (S, Dh)
            v = mm(xb, vw[l, h]) + vb[l, h]                # (S, Dh)
            s = mm(q, k.T)                                 # (S, S)
            s = s - jnp.max(s, axis=-1, keepdims=True)
            p = jnp.exp(s)
            p = p * pl.reciprocal(jnp.sum(p, axis=-1, keepdims=True), approx=True)
            attn = attn + mm(mm(p, v), ow[l, h])           # accumulate into (S, E)
        # post-LN residual 1 (dropout = 0)
        x = layer_norm(attn + ob[l] + x, n1g[l], n1b[l])

        # --- feed-forward (dim_feedforward = n_embd, relu) --------------
        xb = x.astype(jnp.bfloat16)
        ff = jnp.maximum(mm(xb, l1w[l]) + l1b[l], 0.0)
        ff = mm(ff, l2w[l]) + l2b[l]
        x = layer_norm(ff + x, n2g[l], n2b[l])

    # final TransformerEncoder norm
    x = layer_norm(x, fg[...], fb[...])

    # _read_out
    o_ref[0] = mm(x, row[...]) + rob[...]


# ----------------------------------------------------------------------------
# Wrapper: one pallas_call over grid=(batch,), everything else VMEM-resident
# ----------------------------------------------------------------------------
def bert_forward(ys, params, *, n_embd, n_head, n_layer):
    B, S, Din = ys.shape
    Dout = params["read_out_w"].shape[1]
    Dh = n_embd // n_head

    args = (
        ys,
        params["read_in_w"], params["read_in_b"],
        params["qw"], params["qb"], params["kw"], params["kb"],
        params["vw"], params["vb"], params["ow"], params["ob"],
        params["l1w"], params["l1b"], params["l2w"], params["l2b"],
        params["n1g"], params["n1b"], params["n2g"], params["n2b"],
        params["final_g"], params["final_b"],
        params["read_out_w"], params["read_out_b"],
    )

    def resident_spec(a):
        # whole array in VMEM, same block for every grid step
        nd = a.ndim
        return pl.BlockSpec(a.shape, lambda b, _nd=nd: (0,) * _nd)

    in_specs = [pl.BlockSpec((1, S, Din), lambda b: (b, 0, 0))]
    in_specs += [resident_spec(a) for a in args[1:]]

    kernel = functools.partial(
        _bert_kernel, n_layer=n_layer, n_head=n_head, head_dim=Dh, ln_eps=1e-5)

    return pl.pallas_call(
        kernel,
        out_shape=jax.ShapeDtypeStruct((B, S, Dout), jnp.float32),
        grid=(B,),
        in_specs=in_specs,
        out_specs=pl.BlockSpec((1, S, Dout), lambda b: (b, 0, 0)),
        compiler_params=pltpu.CompilerParams(
            # batch axis shards across v7x's 2 TensorCores; harmless on v5e/v6e
            dimension_semantics=("parallel",),
        ),
    )(*args)


# ----------------------------------------------------------------------------
# Parameter construction (deterministic, synthetic), pre-packed per head so the
# kernel never needs lane-slicing or transposes.
# ----------------------------------------------------------------------------
def init_params(key, n_dims_obs, n_dims_state, n_embd, n_layer, n_head):
    E, L, H = n_embd, n_layer, n_head
    Dh = E // H

    def dense(k, fan_in, fan_out):
        # stored already transposed: (fan_in, fan_out) so y = x @ w + b
        return 0.02 * jax.random.normal(k, (fan_in, fan_out), jnp.float32)

    keys = jax.random.split(key, 2 + 4 * L)
    params = {
        "read_in_w": dense(keys[0], n_dims_obs, E),
        "read_in_b": jnp.zeros((1, E), jnp.float32),
        "read_out_w": dense(keys[1], E, n_dims_state),
        "read_out_b": jnp.zeros((1, n_dims_state), jnp.float32),
        "final_g": jnp.ones((1, E), jnp.float32),
        "final_b": jnp.zeros((1, E), jnp.float32),
    }

    qw, kw, vw, ow, l1w, l2w = [], [], [], [], [], []
    for l in range(L):
        kk = keys[2 + 4 * l: 2 + 4 * (l + 1)]
        in_proj = dense(kk[0], E, 3 * E)                 # packed q,k,v (E, 3E)
        w_q, w_k, w_v = jnp.split(in_proj, 3, axis=1)
        # per-head column slices -> (H, E, Dh)
        qw.append(w_q.reshape(E, H, Dh).transpose(1, 0, 2))
        kw.append(w_k.reshape(E, H, Dh).transpose(1, 0, 2))
        vw.append(w_v.reshape(E, H, Dh).transpose(1, 0, 2))
        # out-proj per-head row slices -> (H, Dh, E); sum_h o_h @ W[h] == concat @ W
        ow.append(dense(kk[1], E, E).reshape(H, Dh, E))
        l1w.append(dense(kk[2], E, E))                   # dim_feedforward = n_embd
        l2w.append(dense(kk[3], E, E))

    params.update({
        "qw": jnp.stack(qw), "kw": jnp.stack(kw), "vw": jnp.stack(vw),
        "ow": jnp.stack(ow),
        "qb": jnp.zeros((L, H, 1, Dh), jnp.float32),
        "kb": jnp.zeros((L, H, 1, Dh), jnp.float32),
        "vb": jnp.zeros((L, H, 1, Dh), jnp.float32),
        "ob": jnp.zeros((L, 1, E), jnp.float32),
        "l1w": jnp.stack(l1w), "l2w": jnp.stack(l2w),
        "l1b": jnp.zeros((L, 1, E), jnp.float32),
        "l2b": jnp.zeros((L, 1, E), jnp.float32),
        "n1g": jnp.ones((L, 1, E), jnp.float32),
        "n1b": jnp.zeros((L, 1, E), jnp.float32),
        "n2g": jnp.ones((L, 1, E), jnp.float32),
        "n2b": jnp.zeros((L, 1, E), jnp.float32),
    })
    return params


# ----------------------------------------------------------------------------
if __name__ == "__main__":
    # small, forward-consistent shapes
    n_dims_obs = 6
    n_dims_state = 4
    n_positions = 8          # seq length
    n_embd = 32
    n_layer = 2
    n_head = 4
    batch = 2

    key = jax.random.PRNGKey(0)
    k_param, k_data = jax.random.split(key)
    params = init_params(k_param, n_dims_obs, n_dims_state, n_embd, n_layer, n_head)

    ys = jax.random.normal(k_data, (batch, n_positions, n_dims_obs), jnp.float32)

    fwd = jax.jit(functools.partial(
        bert_forward, n_embd=n_embd, n_head=n_head, n_layer=n_layer))
    pred = fwd(ys, params)
    jax.block_until_ready(pred)

    assert pred.shape == (batch, n_positions, n_dims_state)
    assert pred.dtype == jnp.float32
    print("KERNEL_OK")
</pallas_src>

<mosaic_0001>
module attributes {stable_mosaic.version = 11 : i64} {
  func.func @_bert_kernel(%arg0: i32, %arg1: memref<1x8x6xf32, #tpu.memory_space<vmem>>, %arg2: memref<6x32xf32, #tpu.memory_space<vmem>>, %arg3: memref<1x32xf32, #tpu.memory_space<vmem>>, %arg4: memref<2x4x32x8xf32, #tpu.memory_space<vmem>>, %arg5: memref<2x4x1x8xf32, #tpu.memory_space<vmem>>, %arg6: memref<2x4x32x8xf32, #tpu.memory_space<vmem>>, %arg7: memref<2x4x1x8xf32, #tpu.memory_space<vmem>>, %arg8: memref<2x4x32x8xf32, #tpu.memory_space<vmem>>, %arg9: memref<2x4x1x8xf32, #tpu.memory_space<vmem>>, %arg10: memref<2x4x8x32xf32, #tpu.memory_space<vmem>>, %arg11: memref<2x1x32xf32, #tpu.memory_space<vmem>>, %arg12: memref<2x32x32xf32, #tpu.memory_space<vmem>>, %arg13: memref<2x1x32xf32, #tpu.memory_space<vmem>>, %arg14: memref<2x32x32xf32, #tpu.memory_space<vmem>>, %arg15: memref<2x1x32xf32, #tpu.memory_space<vmem>>, %arg16: memref<2x1x32xf32, #tpu.memory_space<vmem>>, %arg17: memref<2x1x32xf32, #tpu.memory_space<vmem>>, %arg18: memref<2x1x32xf32, #tpu.memory_space<vmem>>, %arg19: memref<2x1x32xf32, #tpu.memory_space<vmem>>, %arg20: memref<1x32xf32, #tpu.memory_space<vmem>>, %arg21: memref<1x32xf32, #tpu.memory_space<vmem>>, %arg22: memref<32x4xf32, #tpu.memory_space<vmem>>, %arg23: memref<1x4xf32, #tpu.memory_space<vmem>>, %arg24: memref<1x8x4xf32, #tpu.memory_space<vmem>>) attributes {dimension_semantics = [#tpu.dimension_semantics<parallel>], iteration_bounds = array<i64: 2>, scalar_prefetch = 0 : i64, scratch_operands = 0 : i64, tpu.core_type = #tpu.core_type<tc>, window_params = [{transform_indices = @transform_0, window_bounds = array<i64: 1, 8, 6>}, {pipeline_mode = #tpu.pipeline_mode<synchronous>, transform_indices = @transform_1, window_bounds = array<i64: 6, 32>}, {pipeline_mode = #tpu.pipeline_mode<synchronous>, transform_indices = @transform_2, window_bounds = array<i64: 1, 32>}, {pipeline_mode = #tpu.pipeline_mode<synchronous>, transform_indices = @transform_3, window_bounds = array<i64: 2, 4, 32, 8>}, {pipeline_mode = #tpu.pipeline_mode<synchronous>, transform_indices = @transform_4, window_bounds = array<i64: 2, 4, 1, 8>}, {pipeline_mode = #tpu.pipeline_mode<synchronous>, transform_indices = @transform_5, window_bounds = array<i64: 2, 4, 32, 8>}, {pipeline_mode = #tpu.pipeline_mode<synchronous>, transform_indices = @transform_6, window_bounds = array<i64: 2, 4, 1, 8>}, {pipeline_mode = #tpu.pipeline_mode<synchronous>, transform_indices = @transform_7, window_bounds = array<i64: 2, 4, 32, 8>}, {pipeline_mode = #tpu.pipeline_mode<synchronous>, transform_indices = @transform_8, window_bounds = array<i64: 2, 4, 1, 8>}, {pipeline_mode = #tpu.pipeline_mode<synchronous>, transform_indices = @transform_9, window_bounds = array<i64: 2, 4, 8, 32>}, {pipeline_mode = #tpu.pipeline_mode<synchronous>, transform_indices = @transform_10, window_bounds = array<i64: 2, 1, 32>}, {pipeline_mode = #tpu.pipeline_mode<synchronous>, transform_indices = @transform_11, window_bounds = array<i64: 2, 32, 32>}, {pipeline_mode = #tpu.pipeline_mode<synchronous>, transform_indices = @transform_12, window_bounds = array<i64: 2, 1, 32>}, {pipeline_mode = #tpu.pipeline_mode<synchronous>, transform_indices = @transform_13, window_bounds = array<i64: 2, 32, 32>}, {pipeline_mode = #tpu.pipeline_mode<synchronous>, transform_indices = @transform_14, window_bounds = array<i64: 2, 1, 32>}, {pipeline_mode = #tpu.pipeline_mode<synchronous>, transform_indices = @transform_15, window_bounds = array<i64: 2, 1, 32>}, {pipeline_mode = #tpu.pipeline_mode<synchronous>, transform_indices = @transform_16, window_bounds = array<i64: 2, 1, 32>}, {pipeline_mode = #tpu.pipeline_mode<synchronous>, transform_indices = @transform_17, window_bounds = array<i64: 2, 1, 32>}, {pipeline_mode = #tpu.pipeline_mode<synchronous>, transform_indices = @transform_18, window_bounds = array<i64: 2, 1, 32>}, {pipeline_mode = #tpu.pipeline_mode<synchronous>, transform_indices = @transform_19, window_bounds = array<i64: 1, 32>}, {pipeline_mode = #tpu.pipeline_mode<synchronous>, transform_indices = @transform_20, window_bounds = array<i64: 1, 32>}, {pipeline_mode = #tpu.pipeline_mode<synchronous>, transform_indices = @transform_21, window_bounds = array<i64: 32, 4>}, {pipeline_mode = #tpu.pipeline_mode<synchronous>, transform_indices = @transform_22, window_bounds = array<i64: 1, 4>}, {transform_indices = @transform_23, window_bounds = array<i64: 1, 8, 4>}]} {
    %c0 = arith.constant 0 : index
    %c0_0 = arith.constant 0 : index
    %c0_1 = arith.constant 0 : index
    %0 = vector.load %arg1[%c0, %c0_0, %c0_1] : memref<1x8x6xf32, #tpu.memory_space<vmem>>, vector<1x8x6xf32>
    %1 = vector.shape_cast %0 : vector<1x8x6xf32> to vector<8x6xf32>
    %c0_2 = arith.constant 0 : index
    %c0_3 = arith.constant 0 : index
    %2 = vector.load %arg2[%c0_2, %c0_3] : memref<6x32xf32, #tpu.memory_space<vmem>>, vector<6x32xf32>
    %3 = arith.truncf %1 : vector<8x6xf32> to vector<8x6xbf16>
    %4 = arith.truncf %2 : vector<6x32xf32> to vector<6x32xbf16>
    %cst = arith.constant dense<0.000000e+00> : vector<8x32xf32>
    %5 = tpu.matmul %3, %4, %cst {dimension_numbers = #tpu.dot_dimension_numbers<[1], [0], [0], [1], [0, 0, 1, 1], [], []>} : vector<8x6xbf16>, vector<6x32xbf16>, vector<8x32xf32> -> vector<8x32xf32>
    %c0_4 = arith.constant 0 : index
    %c0_5 = arith.constant 0 : index
    %6 = vector.load %arg3[%c0_4, %c0_5] : memref<1x32xf32, #tpu.memory_space<vmem>>, vector<1x32xf32>
    %7 = vector.broadcast %6 : vector<1x32xf32> to vector<8x32xf32>
    %8 = arith.addf %5, %7 : vector<8x32xf32>
    %9 = arith.truncf %8 : vector<8x32xf32> to vector<8x32xbf16>
    %cst_6 = arith.constant 0.000000e+00 : f32
    %10 = vector.broadcast %cst_6 : f32 to vector<8x32xf32>
    %c0_7 = arith.constant 0 : index
    %c0_8 = arith.constant 0 : index
    %c0_9 = arith.constant 0 : index
    %c0_10 = arith.constant 0 : index
    %11 = vector.load %arg4[%c0_7, %c0_8, %c0_9, %c0_10] : memref<2x4x32x8xf32, #tpu.memory_space<vmem>>, vector<1x1x32x8xf32>
    %12 = vector.shape_cast %11 : vector<1x1x32x8xf32> to vector<32x8xf32>
    %13 = arith.truncf %12 : vector<32x8xf32> to vector<32x8xbf16>
    %cst_11 = arith.constant dense<0.000000e+00> : vector<8x8xf32>
    %14 = tpu.matmul %9, %13, %cst_11 {dimension_numbers = #tpu.dot_dimension_numbers<[1], [0], [0], [1], [0, 0, 1, 1], [], []>} : vector<8x32xbf16>, vector<32x8xbf16>, vector<8x8xf32> -> vector<8x8xf32>
    %c0_12 = arith.constant 0 : index
    %c0_13 = arith.constant 0 : index
    %c0_14 = arith.constant 0 : index
    %c0_15 = arith.constant 0 : index
    %15 = vector.load %arg5[%c0_12, %c0_13, %c0_14, %c0_15] : memref<2x4x1x8xf32, #tpu.memory_space<vmem>>, vector<1x1x1x8xf32>
    %16 = vector.shape_cast %15 : vector<1x1x1x8xf32> to vector<1x8xf32>
    %17 = vector.broadcast %16 : vector<1x8xf32> to vector<8x8xf32>
    %18 = arith.addf %14, %17 : vector<8x8xf32>
    %cst_16 = arith.constant 0.353553385 : f32
    %19 = vector.broadcast %cst_16 : f32 to vector<8x8xf32>
    %20 = arith.mulf %18, %19 : vector<8x8xf32>
    %c0_17 = arith.constant 0 : index
    %c0_18 = arith.constant 0 : index
    %c0_19 = arith.constant 0 : index
    %c0_20 = arith.constant 0 : index
    %21 = vector.load %arg6[%c0_17, %c0_18, %c0_19, %c0_20] : memref<2x4x32x8xf32, #tpu.memory_space<vmem>>, vector<1x1x32x8xf32>
    %22 = vector.shape_cast %21 : vector<1x1x32x8xf32> to vector<32x8xf32>
    %23 = arith.truncf %22 : vector<32x8xf32> to vector<32x8xbf16>
    %cst_21 = arith.constant dense<0.000000e+00> : vector<8x8xf32>
    %24 = tpu.matmul %9, %23, %cst_21 {dimension_numbers = #tpu.dot_dimension_numbers<[1], [0], [0], [1], [0, 0, 1, 1], [], []>} : vector<8x32xbf16>, vector<32x8xbf16>, vector<8x8xf32> -> vector<8x8xf32>
    %c0_22 = arith.constant 0 : index
    %c0_23 = arith.constant 0 : index
    %c0_24 = arith.constant 0 : index
    %c0_25 = arith.constant 0 : index
    %25 = vector.load %arg7[%c0_22, %c0_23, %c0_24, %c0_25] : memref<2x4x1x8xf32, #tpu.memory_space<vmem>>, vector<1x1x1x8xf32>
    %26 = vector.shape_cast %25 : vector<1x1x1x8xf32> to vector<1x8xf32>
    %27 = vector.broadcast %26 : vector<1x8xf32> to vector<8x8xf32>
    %28 = arith.addf %24, %27 : vector<8x8xf32>
    %c0_26 = arith.constant 0 : index
    %c0_27 = arith.constant 0 : index
    %c0_28 = arith.constant 0 : index
    %c0_29 = arith.constant 0 : index
    %29 = vector.load %arg8[%c0_26, %c0_27, %c0_28, %c0_29] : memref<2x4x32x8xf32, #tpu.memory_space<vmem>>, vector<1x1x32x8xf32>
    %30 = vector.shape_cast %29 : vector<1x1x32x8xf32> to vector<32x8xf32>
    %31 = arith.truncf %30 : vector<32x8xf32> to vector<32x8xbf16>
    %cst_30 = arith.constant dense<0.000000e+00> : vector<8x8xf32>
    %32 = tpu.matmul %9, %31, %cst_30 {dimension_numbers = #tpu.dot_dimension_numbers<[1], [0], [0], [1], [0, 0, 1, 1], [], []>} : vector<8x32xbf16>, vector<32x8xbf16>, vector<8x8xf32> -> vector<8x8xf32>
    %c0_31 = arith.constant 0 : index
    %c0_32 = arith.constant 0 : index
    %c0_33 = arith.constant 0 : index
    %c0_34 = arith.constant 0 : index
    %33 = vector.load %arg9[%c0_31, %c0_32, %c0_33, %c0_34] : memref<2x4x1x8xf32, #tpu.memory_space<vmem>>, vector<1x1x1x8xf32>
    %34 = vector.shape_cast %33 : vector<1x1x1x8xf32> to vector<1x8xf32>
    %35 = vector.broadcast %34 : vector<1x8xf32> to vector<8x8xf32>
    %36 = arith.addf %32, %35 : vector<8x8xf32>
    %37 = tpu.transpose %28, [1, 0] : vector<8x8xf32> -> vector<8x8xf32>
    %38 = arith.truncf %20 : vector<8x8xf32> to vector<8x8xbf16>
    %39 = arith.truncf %37 : vector<8x8xf32> to vector<8x8xbf16>
    %cst_35 = arith.constant dense<0.000000e+00> : vector<8x8xf32>
    %40 = tpu.matmul %38, %39, %cst_35 {dimension_numbers = #tpu.dot_dimension_numbers<[1], [0], [0], [1], [0, 0, 1, 1], [], []>} : vector<8x8xbf16>, vector<8x8xbf16>, vector<8x8xf32> -> vector<8x8xf32>
    %cst_36 = arith.constant dense<0xFF800000> : vector<8xf32>
    %41 = vector.multi_reduction <maximumf>, %40, %cst_36 [1] : vector<8x8xf32> to vector<8xf32>
    %42 = vector.shape_cast %41 : vector<8xf32> to vector<8x1xf32>
    %43 = vector.broadcast %42 : vector<8x1xf32> to vector<8x8xf32>
    %44 = arith.subf %40, %43 : vector<8x8xf32>
    %45 = math.exp %44 : vector<8x8xf32>
    %cst_37 = arith.constant dense<0.000000e+00> : vector<8xf32>
    %46 = vector.multi_reduction <add>, %45, %cst_37 [1] : vector<8x8xf32> to vector<8xf32>
    %47 = vector.shape_cast %46 : vector<8xf32> to vector<8x1xf32>
    %48 = tpu.reciprocal %47 {approx = true} : vector<8x1xf32> -> vector<8x1xf32>
    %49 = vector.broadcast %48 : vector<8x1xf32> to vector<8x8xf32>
    %50 = arith.mulf %45, %49 : vector<8x8xf32>
    %51 = arith.truncf %50 : vector<8x8xf32> to vector<8x8xbf16>
    %52 = arith.truncf %36 : vector<8x8xf32> to vector<8x8xbf16>
    %cst_38 = arith.constant dense<0.000000e+00> : vector<8x8xf32>
    %53 = tpu.matmul %51, %52, %cst_38 {dimension_numbers = #tpu.dot_dimension_numbers<[1], [0], [0], [1], [0, 0, 1, 1], [], []>} : vector<8x8xbf16>, vector<8x8xbf16>, vector<8x8xf32> -> vector<8x8xf32>
    %c0_39 = arith.constant 0 : index
    %c0_40 = arith.constant 0 : index
    %c0_41 = arith.constant 0 : index
    %c0_42 = arith.constant 0 : index
    %54 = vector.load %arg10[%c0_39, %c0_40, %c0_41, %c0_42] : memref<2x4x8x32xf32, #tpu.memory_space<vmem>>, vector<1x1x8x32xf32>
    %55 = vector.shape_cast %54 : vector<1x1x8x32xf32> to vector<8x32xf32>
    %56 = arith.truncf %53 : vector<8x8xf32> to vector<8x8xbf16>
    %57 = arith.truncf %55 : vector<8x32xf32> to vector<8x32xbf16>
    %cst_43 = arith.constant dense<0.000000e+00> : vector<8x32xf32>
    %58 = tpu.matmul %56, %57, %cst_43 {dimension_numbers = #tpu.dot_dimension_numbers<[1], [0], [0], [1], [0, 0, 1, 1], [], []>} : vector<8x8xbf16>, vector<8x32xbf16>, vector<8x32xf32> -> vector<8x32xf32>
    %59 = arith.addf %10, %58 : vector<8x32xf32>
    %c0_44 = arith.constant 0 : index
    %c1 = arith.constant 1 : index
    %c0_45 = arith.constant 0 : index
    %c0_46 = arith.constant 0 : index
    %60 = vector.load %arg4[%c0_44, %c1, %c0_45, %c0_46] : memref<2x4x32x8xf32, #tpu.memory_space<vmem>>, vector<1x1x32x8xf32>
    %61 = vector.shape_cast %60 : vector<1x1x32x8xf32> to vector<32x8xf32>
    %62 = arith.truncf %61 : vector<32x8xf32> to vector<32x8xbf16>
    %cst_47 = arith.constant dense<0.000000e+00> : vector<8x8xf32>
    %63 = tpu.matmul %9, %62, %cst_47 {dimension_numbers = #tpu.dot_dimension_numbers<[1], [0], [0], [1], [0, 0, 1, 1], [], []>} : vector<8x32xbf16>, vector<32x8xbf16>, vector<8x8xf32> -> vector<8x8xf32>
    %c0_48 = arith.constant 0 : index
    %c1_49 = arith.constant 1 : index
    %c0_50 = arith.constant 0 : index
    %c0_51 = arith.constant 0 : index
    %64 = vector.load %arg5[%c0_48, %c1_49, %c0_50, %c0_51] : memref<2x4x1x8xf32, #tpu.memory_space<vmem>>, vector<1x1x1x8xf32>
    %65 = vector.shape_cast %64 : vector<1x1x1x8xf32> to vector<1x8xf32>
    %66 = vector.broadcast %65 : vector<1x8xf32> to vector<8x8xf32>
    %67 = arith.addf %63, %66 : vector<8x8xf32>
    %cst_52 = arith.constant 0.353553385 : f32
    %68 = vector.broadcast %cst_52 : f32 to vector<8x8xf32>
    %69 = arith.mulf %67, %68 : vector<8x8xf32>
    %c0_53 = arith.constant 0 : index
    %c1_54 = arith.constant 1 : index
    %c0_55 = arith.constant 0 : index
    %c0_56 = arith.constant 0 : index
    %70 = vector.load %arg6[%c0_53, %c1_54, %c0_55, %c0_56] : memref<2x4x32x8xf32, #tpu.memory_space<vmem>>, vector<1x1x32x8xf32>
    %71 = vector.shape_cast %70 : vector<1x1x32x8xf32> to vector<32x8xf32>
    %72 = arith.truncf %71 : vector<32x8xf32> to vector<32x8xbf16>
    %cst_57 = arith.constant dense<0.000000e+00> : vector<8x8xf32>
    %73 = tpu.matmul %9, %72, %cst_57 {dimension_numbers = #tpu.dot_dimension_numbers<[1], [0], [0], [1], [0, 0, 1, 1], [], []>} : vector<8x32xbf16>, vector<32x8xbf16>, vector<8x8xf32> -> vector<8x8xf32>
    %c0_58 = arith.constant 0 : index
    %c1_59 = arith.constant 1 : index
    %c0_60 = arith.constant 0 : index
    %c0_61 = arith.constant 0 : index
    %74 = vector.load %arg7[%c0_58, %c1_59, %c0_60, %c0_61] : memref<2x4x1x8xf32, #tpu.memory_space<vmem>>, vector<1x1x1x8xf32>
    %75 = vector.shape_cast %74 : vector<1x1x1x8xf32> to vector<1x8xf32>
    %76 = vector.broadcast %75 : vector<1x8xf32> to vector<8x8xf32>
    %77 = arith.addf %73, %76 : vector<8x8xf32>
    %c0_62 = arith.constant 0 : index
    %c1_63 = arith.constant 1 : index
    %c0_64 = arith.constant 0 : index
    %c0_65 = arith.constant 0 : index
    %78 = vector.load %arg8[%c0_62, %c1_63, %c0_64, %c0_65] : memref<2x4x32x8xf32, #tpu.memory_space<vmem>>, vector<1x1x32x8xf32>
    %79 = vector.shape_cast %78 : vector<1x1x32x8xf32> to vector<32x8xf32>
    %80 = arith.truncf %79 : vector<32x8xf32> to vector<32x8xbf16>
    %cst_66 = arith.constant dense<0.000000e+00> : vector<8x8xf32>
    %81 = tpu.matmul %9, %80, %cst_66 {dimension_numbers = #tpu.dot_dimension_numbers<[1], [0], [0], [1], [0, 0, 1, 1], [], []>} : vector<8x32xbf16>, vector<32x8xbf16>, vector<8x8xf32> -> vector<8x8xf32>
    %c0_67 = arith.constant 0 : index
    %c1_68 = arith.constant 1 : index
    %c0_69 = arith.constant 0 : index
    %c0_70 = arith.constant 0 : index
    %82 = vector.load %arg9[%c0_67, %c1_68, %c0_69, %c0_70] : memref<2x4x1x8xf32, #tpu.memory_space<vmem>>, vector<1x1x1x8xf32>
    %83 = vector.shape_cast %82 : vector<1x1x1x8xf32> to vector<1x8xf32>
    %84 = vector.broadcast %83 : vector<1x8xf32> to vector<8x8xf32>
    %85 = arith.addf %81, %84 : vector<8x8xf32>
    %86 = tpu.transpose %77, [1, 0] : vector<8x8xf32> -> vector<8x8xf32>
    %87 = arith.truncf %69 : vector<8x8xf32> to vector<8x8xbf16>
    %88 = arith.truncf %86 : vector<8x8xf32> to vector<8x8xbf16>
    %cst_71 = arith.constant dense<0.000000e+00> : vector<8x8xf32>
    %89 = tpu.matmul %87, %88, %cst_71 {dimension_numbers = #tpu.dot_dimension_numbers<[1], [0], [0], [1], [0, 0, 1, 1], [], []>} : vector<8x8xbf16>, vector<8x8xbf16>, vector<8x8xf32> -> vector<8x8xf32>
    %cst_72 = arith.constant dense<0xFF800000> : vector<8xf32>
    %90 = vector.multi_reduction <maximumf>, %89, %cst_72 [1] : vector<8x8xf32> to vector<8xf32>
    %91 = vector.shape_cast %90 : vector<8xf32> to vector<8x1xf32>
    %92 = vector.broadcast %91 : vector<8x1xf32> to vector<8x8xf32>
    %93 = arith.subf %89, %92 : vector<8x8xf32>
    %94 = math.exp %93 : vector<8x8xf32>
    %cst_73 = arith.constant dense<0.000000e+00> : vector<8xf32>
    %95 = vector.multi_reduction <add>, %94, %cst_73 [1] : vector<8x8xf32> to vector<8xf32>
    %96 = vector.shape_cast %95 : vector<8xf32> to vector<8x1xf32>
    %97 = tpu.reciprocal %96 {approx = true} : vector<8x1xf32> -> vector<8x1xf32>
    %98 = vector.broadcast %97 : vector<8x1xf32> to vector<8x8xf32>
    %99 = arith.mulf %94, %98 : vector<8x8xf32>
    %100 = arith.truncf %99 : vector<8x8xf32> to vector<8x8xbf16>
    %101 = arith.truncf %85 : vector<8x8xf32> to vector<8x8xbf16>
    %cst_74 = arith.constant dense<0.000000e+00> : vector<8x8xf32>
    %102 = tpu.matmul %100, %101, %cst_74 {dimension_numbers = #tpu.dot_dimension_numbers<[1], [0], [0], [1], [0, 0, 1, 1], [], []>} : vector<8x8xbf16>, vector<8x8xbf16>, vector<8x8xf32> -> vector<8x8xf32>
    %c0_75 = arith.constant 0 : index
    %c1_76 = arith.constant 1 : index
    %c0_77 = arith.constant 0 : index
    %c0_78 = arith.constant 0 : index
    %103 = vector.load %arg10[%c0_75, %c1_76, %c0_77, %c0_78] : memref<2x4x8x32xf32, #tpu.memory_space<vmem>>, vector<1x1x8x32xf32>
    %104 = vector.shape_cast %103 : vector<1x1x8x32xf32> to vector<8x32xf32>
    %105 = arith.truncf %102 : vector<8x8xf32> to vector<8x8xbf16>
    %106 = arith.truncf %104 : vector<8x32xf32> to vector<8x32xbf16>
    %cst_79 = arith.constant dense<0.000000e+00> : vector<8x32xf32>
    %107 = tpu.matmul %105, %106, %cst_79 {dimension_numbers = #tpu.dot_dimension_numbers<[1], [0], [0], [1], [0, 0, 1, 1], [], []>} : vector<8x8xbf16>, vector<8x32xbf16>, vector<8x32xf32> -> vector<8x32xf32>
    %108 = arith.addf %59, %107 : vector<8x32xf32>
    %c0_80 = arith.constant 0 : index
    %c2 = arith.constant 2 : index
    %c0_81 = arith.constant 0 : index
    %c0_82 = arith.constant 0 : index
    %109 = vector.load %arg4[%c0_80, %c2, %c0_81, %c0_82] : memref<2x4x32x8xf32, #tpu.memory_space<vmem>>, vector<1x1x32x8xf32>
    %110 = vector.shape_cast %109 : vector<1x1x32x8xf32> to vector<32x8xf32>
    %111 = arith.truncf %110 : vector<32x8xf32> to vector<32x8xbf16>
    %cst_83 = arith.constant dense<0.000000e+00> : vector<8x8xf32>
    %112 = tpu.matmul %9, %111, %cst_83 {dimension_numbers = #tpu.dot_dimension_numbers<[1], [0], [0], [1], [0, 0, 1, 1], [], []>} : vector<8x32xbf16>, vector<32x8xbf16>, vector<8x8xf32> -> vector<8x8xf32>
    %c0_84 = arith.constant 0 : index
    %c2_85 = arith.constant 2 : index
    %c0_86 = arith.constant 0 : index
    %c0_87 = arith.constant 0 : index
    %113 = vector.load %arg5[%c0_84, %c2_85, %c0_86, %c0_87] : memref<2x4x1x8xf32, #tpu.memory_space<vmem>>, vector<1x1x1x8xf32>
    %114 = vector.shape_cast %113 : vector<1x1x1x8xf32> to vector<1x8xf32>
    %115 = vector.broadcast %114 : vector<1x8xf32> to vector<8x8xf32>
    %116 = arith.addf %112, %115 : vector<8x8xf32>
    %cst_88 = arith.constant 0.353553385 : f32
    %117 = vector.broadcast %cst_88 : f32 to vector<8x8xf32>
    %118 = arith.mulf %116, %117 : vector<8x8xf32>
    %c0_89 = arith.constant 0 : index
    %c2_90 = arith.constant 2 : index
    %c0_91 = arith.constant 0 : index
    %c0_92 = arith.constant 0 : index
    %119 = vector.load %arg6[%c0_89, %c2_90, %c0_91, %c0_92] : memref<2x4x32x8xf32, #tpu.memory_space<vmem>>, vector<1x1x32x8xf32>
    %120 = vector.shape_cast %119 : vector<1x1x32x8xf32> to vector<32x8xf32>
    %121 = arith.truncf %120 : vector<32x8xf32> to vector<32x8xbf16>
    %cst_93 = arith.constant dense<0.000000e+00> : vector<8x8xf32>
    %122 = tpu.matmul %9, %121, %cst_93 {dimension_numbers = #tpu.dot_dimension_numbers<[1], [0], [0], [1], [0, 0, 1, 1], [], []>} : vector<8x32xbf16>, vector<32x8xbf16>, vector<8x8xf32> -> vector<8x8xf32>
    %c0_94 = arith.constant 0 : index
    %c2_95 = arith.constant 2 : index
    %c0_96 = arith.constant 0 : index
    %c0_97 = arith.constant 0 : index
    %123 = vector.load %arg7[%c0_94, %c2_95, %c0_96, %c0_97] : memref<2x4x1x8xf32, #tpu.memory_space<vmem>>, vector<1x1x1x8xf32>
    %124 = vector.shape_cast %123 : vector<1x1x1x8xf32> to vector<1x8xf32>
    %125 = vector.broadcast %124 : vector<1x8xf32> to vector<8x8xf32>
    %126 = arith.addf %122, %125 : vector<8x8xf32>
    %c0_98 = arith.constant 0 : index
    %c2_99 = arith.constant 2 : index
    %c0_100 = arith.constant 0 : index
    %c0_101 = arith.constant 0 : index
    %127 = vector.load %arg8[%c0_98, %c2_99, %c0_100, %c0_101] : memref<2x4x32x8xf32, #tpu.memory_space<vmem>>, vector<1x1x32x8xf32>
    %128 = vector.shape_cast %127 : vector<1x1x32x8xf32> to vector<32x8xf32>
    %129 = arith.truncf %128 : vector<32x8xf32> to vector<32x8xbf16>
    %cst_102 = arith.constant dense<0.000000e+00> : vector<8x8xf32>
    %130 = tpu.matmul %9, %129, %cst_102 {dimension_numbers = #tpu.dot_dimension_numbers<[1], [0], [0], [1], [0, 0, 1, 1], [], []>} : vector<8x32xbf16>, vector<32x8xbf16>, vector<8x8xf32> -> vector<8x8xf32>
    %c0_103 = arith.constant 0 : index
    %c2_104 = arith.constant 2 : index
    %c0_105 = arith.constant 0 : index
    %c0_106 = arith.constant 0 : index
    %131 = vector.load %arg9[%c0_103, %c2_104, %c0_105, %c0_106] : memref<2x4x1x8xf32, #tpu.memory_space<vmem>>, vector<1x1x1x8xf32>
    %132 = vector.shape_cast %131 : vector<1x1x1x8xf32> to vector<1x8xf32>
    %133 = vector.broadcast %132 : vector<1x8xf32> to vector<8x8xf32>
    %134 = arith.addf %130, %133 : vector<8x8xf32>
    %135 = tpu.transpose %126, [1, 0] : vector<8x8xf32> -> vector<8x8xf32>
    %136 = arith.truncf %118 : vector<8x8xf32> to vector<8x8xbf16>
    %137 = arith.truncf %135 : vector<8x8xf32> to vector<8x8xbf16>
    %cst_107 = arith.constant dense<0.000000e+00> : vector<8x8xf32>
    %138 = tpu.matmul %136, %137, %cst_107 {dimension_numbers = #tpu.dot_dimension_numbers<[1], [0], [0], [1], [0, 0, 1, 1], [], []>} : vector<8x8xbf16>, vector<8x8xbf16>, vector<8x8xf32> -> vector<8x8xf32>
    %cst_108 = arith.constant dense<0xFF800000> : vector<8xf32>
    %139 = vector.multi_reduction <maximumf>, %138, %cst_108 [1] : vector<8x8xf32> to vector<8xf32>
    %140 = vector.shape_cast %139 : vector<8xf32> to vector<8x1xf32>
    %141 = vector.broadcast %140 : vector<8x1xf32> to vector<8x8xf32>
    %142 = arith.subf %138, %141 : vector<8x8xf32>
    %143 = math.exp %142 : vector<8x8xf32>
    %cst_109 = arith.constant dense<0.000000e+00> : vector<8xf32>
    %144 = vector.multi_reduction <add>, %143, %cst_109 [1] : vector<8x8xf32> to vector<8xf32>
    %145 = vector.shape_cast %144 : vector<8xf32> to vector<8x1xf32>
    %146 = tpu.reciprocal %145 {approx = true} : vector<8x1xf32> -> vector<8x1xf32>
    %147 = vector.broadcast %146 : vector<8x1xf32> to vector<8x8xf32>
    %148 = arith.mulf %143, %147 : vector<8x8xf32>
    %149 = arith.truncf %148 : vector<8x8xf32> to vector<8x8xbf16>
    %150 = arith.truncf %134 : vector<8x8xf32> to vector<8x8xbf16>
    %cst_110 = arith.constant dense<0.000000e+00> : vector<8x8xf32>
    %151 = tpu.matmul %149, %150, %cst_110 {dimension_numbers = #tpu.dot_dimension_numbers<[1], [0], [0], [1], [0, 0, 1, 1], [], []>} : vector<8x8xbf16>, vector<8x8xbf16>, vector<8x8xf32> -> vector<8x8xf32>
    %c0_111 = arith.constant 0 : index
    %c2_112 = arith.constant 2 : index
    %c0_113 = arith.constant 0 : index
    %c0_114 = arith.constant 0 : index
    %152 = vector.load %arg10[%c0_111, %c2_112, %c0_113, %c0_114] : memref<2x4x8x32xf32, #tpu.memory_space<vmem>>, vector<1x1x8x32xf32>
    %153 = vector.shape_cast %152 : vector<1x1x8x32xf32> to vector<8x32xf32>
    %154 = arith.truncf %151 : vector<8x8xf32> to vector<8x8xbf16>
    %155 = arith.truncf %153 : vector<8x32xf32> to vector<8x32xbf16>
    %cst_115 = arith.constant dense<0.000000e+00> : vector<8x32xf32>
    %156 = tpu.matmul %154, %155, %cst_115 {dimension_numbers = #tpu.dot_dimension_numbers<[1], [0], [0], [1], [0, 0, 1, 1], [], []>} : vector<8x8xbf16>, vector<8x32xbf16>, vector<8x32xf32> -> vector<8x32xf32>
    %157 = arith.addf %108, %156 : vector<8x32xf32>
    %c0_116 = arith.constant 0 : index
    %c3 = arith.constant 3 : index
    %c0_117 = arith.constant 0 : index
    %c0_118 = arith.constant 0 : index
    %158 = vector.load %arg4[%c0_116, %c3, %c0_117, %c0_118] : memref<2x4x32x8xf32, #tpu.memory_space<vmem>>, vector<1x1x32x8xf32>
    %159 = vector.shape_cast %158 : vector<1x1x32x8xf32> to vector<32x8xf32>
    %160 = arith.truncf %159 : vector<32x8xf32> to vector<32x8xbf16>
    %cst_119 = arith.constant dense<0.000000e+00> : vector<8x8xf32>
    %161 = tpu.matmul %9, %160, %cst_119 {dimension_numbers = #tpu.dot_dimension_numbers<[1], [0], [0], [1], [0, 0, 1, 1], [], []>} : vector<8x32xbf16>, vector<32x8xbf16>, vector<8x8xf32> -> vector<8x8xf32>
    %c0_120 = arith.constant 0 : index
    %c3_121 = arith.constant 3 : index
    %c0_122 = arith.constant 0 : index
    %c0_123 = arith.constant 0 : index
    %162 = vector.load %arg5[%c0_120, %c3_121, %c0_122, %c0_123] : memref<2x4x1x8xf32, #tpu.memory_space<vmem>>, vector<1x1x1x8xf32>
    %163 = vector.shape_cast %162 : vector<1x1x1x8xf32> to vector<1x8xf32>
    %164 = vector.broadcast %163 : vector<1x8xf32> to vector<8x8xf32>
    %165 = arith.addf %161, %164 : vector<8x8xf32>
    %cst_124 = arith.constant 0.353553385 : f32
    %166 = vector.broadcast %cst_124 : f32 to vector<8x8xf32>
    %167 = arith.mulf %165, %166 : vector<8x8xf32>
    %c0_125 = arith.constant 0 : index
    %c3_126 = arith.constant 3 : index
    %c0_127 = arith.constant 0 : index
    %c0_128 = arith.constant 0 : index
    %168 = vector.load %arg6[%c0_125, %c3_126, %c0_127, %c0_128] : memref<2x4x32x8xf32, #tpu.memory_space<vmem>>, vector<1x1x32x8xf32>
    %169 = vector.shape_cast %168 : vector<1x1x32x8xf32> to vector<32x8xf32>
    %170 = arith.truncf %169 : vector<32x8xf32> to vector<32x8xbf16>
    %cst_129 = arith.constant dense<0.000000e+00> : vector<8x8xf32>
    %171 = tpu.matmul %9, %170, %cst_129 {dimension_numbers = #tpu.dot_dimension_numbers<[1], [0], [0], [1], [0, 0, 1, 1], [], []>} : vector<8x32xbf16>, vector<32x8xbf16>, vector<8x8xf32> -> vector<8x8xf32>
    %c0_130 = arith.constant 0 : index
    %c3_131 = arith.constant 3 : index
    %c0_132 = arith.constant 0 : index
    %c0_133 = arith.constant 0 : index
    %172 = vector.load %arg7[%c0_130, %c3_131, %c0_132, %c0_133] : memref<2x4x1x8xf32, #tpu.memory_space<vmem>>, vector<1x1x1x8xf32>
    %173 = vector.shape_cast %172 : vector<1x1x1x8xf32> to vector<1x8xf32>
    %174 = vector.broadcast %173 : vector<1x8xf32> to vector<8x8xf32>
    %175 = arith.addf %171, %174 : vector<8x8xf32>
    %c0_134 = arith.constant 0 : index
    %c3_135 = arith.constant 3 : index
    %c0_136 = arith.constant 0 : index
    %c0_137 = arith.constant 0 : index
    %176 = vector.load %arg8[%c0_134, %c3_135, %c0_136, %c0_137] : memref<2x4x32x8xf32, #tpu.memory_space<vmem>>, vector<1x1x32x8xf32>
    %177 = vector.shape_cast %176 : vector<1x1x32x8xf32> to vector<32x8xf32>
    %178 = arith.truncf %177 : vector<32x8xf32> to vector<32x8xbf16>
    %cst_138 = arith.constant dense<0.000000e+00> : vector<8x8xf32>
    %179 = tpu.matmul %9, %178, %cst_138 {dimension_numbers = #tpu.dot_dimension_numbers<[1], [0], [0], [1], [0, 0, 1, 1], [], []>} : vector<8x32xbf16>, vector<32x8xbf16>, vector<8x8xf32> -> vector<8x8xf32>
    %c0_139 = arith.constant 0 : index
    %c3_140 = arith.constant 3 : index
    %c0_141 = arith.constant 0 : index
    %c0_142 = arith.constant 0 : index
    %180 = vector.load %arg9[%c0_139, %c3_140, %c0_141, %c0_142] : memref<2x4x1x8xf32, #tpu.memory_space<vmem>>, vector<1x1x1x8xf32>
    %181 = vector.shape_cast %180 : vector<1x1x1x8xf32> to vector<1x8xf32>
    %182 = vector.broadcast %181 : vector<1x8xf32> to vector<8x8xf32>
    %183 = arith.addf %179, %182 : vector<8x8xf32>
    %184 = tpu.transpose %175, [1, 0] : vector<8x8xf32> -> vector<8x8xf32>
    %185 = arith.truncf %167 : vector<8x8xf32> to vector<8x8xbf16>
    %186 = arith.truncf %184 : vector<8x8xf32> to vector<8x8xbf16>
    %cst_143 = arith.constant dense<0.000000e+00> : vector<8x8xf32>
    %187 = tpu.matmul %185, %186, %cst_143 {dimension_numbers = #tpu.dot_dimension_numbers<[1], [0], [0], [1], [0, 0, 1, 1], [], []>} : vector<8x8xbf16>, vector<8x8xbf16>, vector<8x8xf32> -> vector<8x8xf32>
    %cst_144 = arith.constant dense<0xFF800000> : vector<8xf32>
    %188 = vector.multi_reduction <maximumf>, %187, %cst_144 [1] : vector<8x8xf32> to vector<8xf32>
    %189 = vector.shape_cast %188 : vector<8xf32> to vector<8x1xf32>
    %190 = vector.broadcast %189 : vector<8x1xf32> to vector<8x8xf32>
    %191 = arith.subf %187, %190 : vector<8x8xf32>
    %192 = math.exp %191 : vector<8x8xf32>
    %cst_145 = arith.constant dense<0.000000e+00> : vector<8xf32>
    %193 = vector.multi_reduction <add>, %192, %cst_145 [1] : vector<8x8xf32> to vector<8xf32>
    %194 = vector.shape_cast %193 : vector<8xf32> to vector<8x1xf32>
    %195 = tpu.reciprocal %194 {approx = true} : vector<8x1xf32> -> vector<8x1xf32>
    %196 = vector.broadcast %195 : vector<8x1xf32> to vector<8x8xf32>
    %197 = arith.mulf %192, %196 : vector<8x8xf32>
    %198 = arith.truncf %197 : vector<8x8xf32> to vector<8x8xbf16>
    %199 = arith.truncf %183 : vector<8x8xf32> to vector<8x8xbf16>
    %cst_146 = arith.constant dense<0.000000e+00> : vector<8x8xf32>
    %200 = tpu.matmul %198, %199, %cst_146 {dimension_numbers = #tpu.dot_dimension_numbers<[1], [0], [0], [1], [0, 0, 1, 1], [], []>} : vector<8x8xbf16>, vector<8x8xbf16>, vector<8x8xf32> -> vector<8x8xf32>
    %c0_147 = arith.constant 0 : index
    %c3_148 = arith.constant 3 : index
    %c0_149 = arith.constant 0 : index
    %c0_150 = arith.constant 0 : index
    %201 = vector.load %arg10[%c0_147, %c3_148, %c0_149, %c0_150] : memref<2x4x8x32xf32, #tpu.memory_space<vmem>>, vector<1x1x8x32xf32>
    %202 = vector.shape_cast %201 : vector<1x1x8x32xf32> to vector<8x32xf32>
    %203 = arith.truncf %200 : vector<8x8xf32> to vector<8x8xbf16>
    %204 = arith.truncf %202 : vector<8x32xf32> to vector<8x32xbf16>
    %cst_151 = arith.constant dense<0.000000e+00> : vector<8x32xf32>
    %205 = tpu.matmul %203, %204, %cst_151 {dimension_numbers = #tpu.dot_dimension_numbers<[1], [0], [0], [1], [0, 0, 1, 1], [], []>} : vector<8x8xbf16>, vector<8x32xbf16>, vector<8x32xf32> -> vector<8x32xf32>
    %206 = arith.addf %157, %205 : vector<8x32xf32>
    %c0_152 = arith.constant 0 : index
    %c0_153 = arith.constant 0 : index
    %c0_154 = arith.constant 0 : index
    %207 = vector.load %arg11[%c0_152, %c0_153, %c0_154] : memref<2x1x32xf32, #tpu.memory_space<vmem>>, vector<1x1x32xf32>
    %208 = vector.shape_cast %207 : vector<1x1x32xf32> to vector<1x32xf32>
    %209 = vector.broadcast %208 : vector<1x32xf32> to vector<8x32xf32>
    %210 = arith.addf %206, %209 : vector<8x32xf32>
    %211 = arith.addf %210, %8 : vector<8x32xf32>
    %c0_155 = arith.constant 0 : index
    %c0_156 = arith.constant 0 : index
    %c0_157 = arith.constant 0 : index
    %212 = vector.load %arg16[%c0_155, %c0_156, %c0_157] : memref<2x1x32xf32, #tpu.memory_space<vmem>>, vector<1x1x32xf32>
    %213 = vector.shape_cast %212 : vector<1x1x32xf32> to vector<1x32xf32>
    %c0_158 = arith.constant 0 : index
    %c0_159 = arith.constant 0 : index
    %c0_160 = arith.constant 0 : index
    %214 = vector.load %arg17[%c0_158, %c0_159, %c0_160] : memref<2x1x32xf32, #tpu.memory_space<vmem>>, vector<1x1x32xf32>
    %215 = vector.shape_cast %214 : vector<1x1x32xf32> to vector<1x32xf32>
    %cst_161 = arith.constant dense<0.000000e+00> : vector<8xf32>
    %216 = vector.multi_reduction <add>, %211, %cst_161 [1] : vector<8x32xf32> to vector<8xf32>
    %217 = vector.shape_cast %216 : vector<8xf32> to vector<8x1xf32>
    %cst_162 = arith.constant 3.200000e+01 : f32
    %218 = vector.broadcast %cst_162 : f32 to vector<8x1xf32>
    %219 = arith.divf %217, %218 : vector<8x1xf32>
    %220 = vector.broadcast %219 : vector<8x1xf32> to vector<8x32xf32>
    %221 = arith.subf %211, %220 : vector<8x32xf32>
    %222 = arith.mulf %221, %221 : vector<8x32xf32>
    %cst_163 = arith.constant dense<0.000000e+00> : vector<8xf32>
    %223 = vector.multi_reduction <add>, %222, %cst_163 [1] : vector<8x32xf32> to vector<8xf32>
    %224 = vector.shape_cast %223 : vector<8xf32> to vector<8x1xf32>
    %cst_164 = arith.constant 3.200000e+01 : f32
    %225 = vector.broadcast %cst_164 : f32 to vector<8x1xf32>
    %226 = arith.divf %224, %225 : vector<8x1xf32>
    %227 = vector.broadcast %219 : vector<8x1xf32> to vector<8x32xf32>
    %228 = arith.subf %211, %227 : vector<8x32xf32>
    %cst_165 = arith.constant 9.99999974E-6 : f32
    %229 = vector.broadcast %cst_165 : f32 to vector<8x1xf32>
    %230 = arith.addf %226, %229 : vector<8x1xf32>
    %231 = math.rsqrt %230 : vector<8x1xf32>
    %232 = vector.broadcast %231 : vector<8x1xf32> to vector<8x32xf32>
    %233 = arith.mulf %228, %232 : vector<8x32xf32>
    %234 = vector.broadcast %213 : vector<1x32xf32> to vector<8x32xf32>
    %235 = arith.mulf %233, %234 : vector<8x32xf32>
    %236 = vector.broadcast %215 : vector<1x32xf32> to vector<8x32xf32>
    %237 = arith.addf %235, %236 : vector<8x32xf32>
    %238 = arith.truncf %237 : vector<8x32xf32> to vector<8x32xbf16>
    %c0_166 = arith.constant 0 : index
    %c0_167 = arith.constant 0 : index
    %c0_168 = arith.constant 0 : index
    %239 = vector.load %arg12[%c0_166, %c0_167, %c0_168] : memref<2x32x32xf32, #tpu.memory_space<vmem>>, vector<1x32x32xf32>
    %240 = vector.shape_cast %239 : vector<1x32x32xf32> to vector<32x32xf32>
    %241 = arith.truncf %240 : vector<32x32xf32> to vector<32x32xbf16>
    %cst_169 = arith.constant dense<0.000000e+00> : vector<8x32xf32>
    %242 = tpu.matmul %238, %241, %cst_169 {dimension_numbers = #tpu.dot_dimension_numbers<[1], [0], [0], [1], [0, 0, 1, 1], [], []>} : vector<8x32xbf16>, vector<32x32xbf16>, vector<8x32xf32> -> vector<8x32xf32>
    %c0_170 = arith.constant 0 : index
    %c0_171 = arith.constant 0 : index
    %c0_172 = arith.constant 0 : index
    %243 = vector.load %arg13[%c0_170, %c0_171, %c0_172] : memref<2x1x32xf32, #tpu.memory_space<vmem>>, vector<1x1x32xf32>
    %244 = vector.shape_cast %243 : vector<1x1x32xf32> to vector<1x32xf32>
    %245 = vector.broadcast %244 : vector<1x32xf32> to vector<8x32xf32>
    %246 = arith.addf %242, %245 : vector<8x32xf32>
    %cst_173 = arith.constant 0.000000e+00 : f32
    %247 = vector.broadcast %cst_173 : f32 to vector<8x32xf32>
    %248 = arith.maximumf %246, %247 : vector<8x32xf32>
    %c0_174 = arith.constant 0 : index
    %c0_175 = arith.constant 0 : index
    %c0_176 = arith.constant 0 : index
    %249 = vector.load %arg14[%c0_174, %c0_175, %c0_176] : memref<2x32x32xf32, #tpu.memory_space<vmem>>, vector<1x32x32xf32>
    %250 = vector.shape_cast %249 : vector<1x32x32xf32> to vector<32x32xf32>
    %251 = arith.truncf %248 : vector<8x32xf32> to vector<8x32xbf16>
    %252 = arith.truncf %250 : vector<32x32xf32> to vector<32x32xbf16>
    %cst_177 = arith.constant dense<0.000000e+00> : vector<8x32xf32>
    %253 = tpu.matmul %251, %252, %cst_177 {dimension_numbers = #tpu.dot_dimension_numbers<[1], [0], [0], [1], [0, 0, 1, 1], [], []>} : vector<8x32xbf16>, vector<32x32xbf16>, vector<8x32xf32> -> vector<8x32xf32>
    %c0_178 = arith.constant 0 : index
    %c0_179 = arith.constant 0 : index
    %c0_180 = arith.constant 0 : index
    %254 = vector.load %arg15[%c0_178, %c0_179, %c0_180] : memref<2x1x32xf32, #tpu.memory_space<vmem>>, vector<1x1x32xf32>
    %255 = vector.shape_cast %254 : vector<1x1x32xf32> to vector<1x32xf32>
    %256 = vector.broadcast %255 : vector<1x32xf32> to vector<8x32xf32>
    %257 = arith.addf %253, %256 : vector<8x32xf32>
    %258 = arith.addf %257, %237 : vector<8x32xf32>
    %c0_181 = arith.constant 0 : index
    %c0_182 = arith.constant 0 : index
    %c0_183 = arith.constant 0 : index
    %259 = vector.load %arg18[%c0_181, %c0_182, %c0_183] : memref<2x1x32xf32, #tpu.memory_space<vmem>>, vector<1x1x32xf32>
    %260 = vector.shape_cast %259 : vector<1x1x32xf32> to vector<1x32xf32>
    %c0_184 = arith.constant 0 : index
    %c0_185 = arith.constant 0 : index
    %c0_186 = arith.constant 0 : index
    %261 = vector.load %arg19[%c0_184, %c0_185, %c0_186] : memref<2x1x32xf32, #tpu.memory_space<vmem>>, vector<1x1x32xf32>
    %262 = vector.shape_cast %261 : vector<1x1x32xf32> to vector<1x32xf32>
    %cst_187 = arith.constant dense<0.000000e+00> : vector<8xf32>
    %263 = vector.multi_reduction <add>, %258, %cst_187 [1] : vector<8x32xf32> to vector<8xf32>
    %264 = vector.shape_cast %263 : vector<8xf32> to vector<8x1xf32>
    %cst_188 = arith.constant 3.200000e+01 : f32
    %265 = vector.broadcast %cst_188 : f32 to vector<8x1xf32>
    %266 = arith.divf %264, %265 : vector<8x1xf32>
    %267 = vector.broadcast %266 : vector<8x1xf32> to vector<8x32xf32>
    %268 = arith.subf %258, %267 : vector<8x32xf32>
    %269 = arith.mulf %268, %268 : vector<8x32xf32>
    %cst_189 = arith.constant dense<0.000000e+00> : vector<8xf32>
    %270 = vector.multi_reduction <add>, %269, %cst_189 [1] : vector<8x32xf32> to vector<8xf32>
    %271 = vector.shape_cast %270 : vector<8xf32> to vector<8x1xf32>
    %cst_190 = arith.constant 3.200000e+01 : f32
    %272 = vector.broadcast %cst_190 : f32 to vector<8x1xf32>
    %273 = arith.divf %271, %272 : vector<8x1xf32>
    %274 = vector.broadcast %266 : vector<8x1xf32> to vector<8x32xf32>
    %275 = arith.subf %258, %274 : vector<8x32xf32>
    %cst_191 = arith.constant 9.99999974E-6 : f32
    %276 = vector.broadcast %cst_191 : f32 to vector<8x1xf32>
    %277 = arith.addf %273, %276 : vector<8x1xf32>
    %278 = math.rsqrt %277 : vector<8x1xf32>
    %279 = vector.broadcast %278 : vector<8x1xf32> to vector<8x32xf32>
    %280 = arith.mulf %275, %279 : vector<8x32xf32>
    %281 = vector.broadcast %260 : vector<1x32xf32> to vector<8x32xf32>
    %282 = arith.mulf %280, %281 : vector<8x32xf32>
    %283 = vector.broadcast %262 : vector<1x32xf32> to vector<8x32xf32>
    %284 = arith.addf %282, %283 : vector<8x32xf32>
    %285 = arith.truncf %284 : vector<8x32xf32> to vector<8x32xbf16>
    %cst_192 = arith.constant 0.000000e+00 : f32
    %286 = vector.broadcast %cst_192 : f32 to vector<8x32xf32>
    %c1_193 = arith.constant 1 : index
    %c0_194 = arith.constant 0 : index
    %c0_195 = arith.constant 0 : index
    %c0_196 = arith.constant 0 : index
    %287 = vector.load %arg4[%c1_193, %c0_194, %c0_195, %c0_196] : memref<2x4x32x8xf32, #tpu.memory_space<vmem>>, vector<1x1x32x8xf32>
    %288 = vector.shape_cast %287 : vector<1x1x32x8xf32> to vector<32x8xf32>
    %289 = arith.truncf %288 : vector<32x8xf32> to vector<32x8xbf16>
    %cst_197 = arith.constant dense<0.000000e+00> : vector<8x8xf32>
    %290 = tpu.matmul %285, %289, %cst_197 {dimension_numbers = #tpu.dot_dimension_numbers<[1], [0], [0], [1], [0, 0, 1, 1], [], []>} : vector<8x32xbf16>, vector<32x8xbf16>, vector<8x8xf32> -> vector<8x8xf32>
    %c1_198 = arith.constant 1 : index
    %c0_199 = arith.constant 0 : index
    %c0_200 = arith.constant 0 : index
    %c0_201 = arith.constant 0 : index
    %291 = vector.load %arg5[%c1_198, %c0_199, %c0_200, %c0_201] : memref<2x4x1x8xf32, #tpu.memory_space<vmem>>, vector<1x1x1x8xf32>
    %292 = vector.shape_cast %291 : vector<1x1x1x8xf32> to vector<1x8xf32>
    %293 = vector.broadcast %292 : vector<1x8xf32> to vector<8x8xf32>
    %294 = arith.addf %290, %293 : vector<8x8xf32>
    %cst_202 = arith.constant 0.353553385 : f32
    %295 = vector.broadcast %cst_202 : f32 to vector<8x8xf32>
    %296 = arith.mulf %294, %295 : vector<8x8xf32>
    %c1_203 = arith.constant 1 : index
    %c0_204 = arith.constant 0 : index
    %c0_205 = arith.constant 0 : index
    %c0_206 = arith.constant 0 : index
    %297 = vector.load %arg6[%c1_203, %c0_204, %c0_205, %c0_206] : memref<2x4x32x8xf32, #tpu.memory_space<vmem>>, vector<1x1x32x8xf32>
    %298 = vector.shape_cast %297 : vector<1x1x32x8xf32> to vector<32x8xf32>
    %299 = arith.truncf %298 : vector<32x8xf32> to vector<32x8xbf16>
    %cst_207 = arith.constant dense<0.000000e+00> : vector<8x8xf32>
    %300 = tpu.matmul %285, %299, %cst_207 {dimension_numbers = #tpu.dot_dimension_numbers<[1], [0], [0], [1], [0, 0, 1, 1], [], []>} : vector<8x32xbf16>, vector<32x8xbf16>, vector<8x8xf32> -> vector<8x8xf32>
    %c1_208 = arith.constant 1 : index
    %c0_209 = arith.constant 0 : index
    %c0_210 = arith.constant 0 : index
    %c0_211 = arith.constant 0 : index
    %301 = vector.load %arg7[%c1_208, %c0_209, %c0_210, %c0_211] : memref<2x4x1x8xf32, #tpu.memory_space<vmem>>, vector<1x1x1x8xf32>
    %302 = vector.shape_cast %301 : vector<1x1x1x8xf32> to vector<1x8xf32>
    %303 = vector.broadcast %302 : vector<1x8xf32> to vector<8x8xf32>
    %304 = arith.addf %300, %303 : vector<8x8xf32>
    %c1_212 = arith.constant 1 : index
    %c0_213 = arith.constant 0 : index
    %c0_214 = arith.constant 0 : index
    %c0_215 = arith.constant 0 : index
    %305 = vector.load %arg8[%c1_212, %c0_213, %c0_214, %c0_215] : memref<2x4x32x8xf32, #tpu.memory_space<vmem>>, vector<1x1x32x8xf32>
    %306 = vector.shape_cast %305 : vector<1x1x32x8xf32> to vector<32x8xf32>
    %307 = arith.truncf %306 : vector<32x8xf32> to vector<32x8xbf16>
    %cst_216 = arith.constant dense<0.000000e+00> : vector<8x8xf32>
    %308 = tpu.matmul %285, %307, %cst_216 {dimension_numbers = #tpu.dot_dimension_numbers<[1], [0], [0], [1], [0, 0, 1, 1], [], []>} : vector<8x32xbf16>, vector<32x8xbf16>, vector<8x8xf32> -> vector<8x8xf32>
    %c1_217 = arith.constant 1 : index
    %c0_218 = arith.constant 0 : index
    %c0_219 = arith.constant 0 : index
    %c0_220 = arith.constant 0 : index
    %309 = vector.load %arg9[%c1_217, %c0_218, %c0_219, %c0_220] : memref<2x4x1x8xf32, #tpu.memory_space<vmem>>, vector<1x1x1x8xf32>
    %310 = vector.shape_cast %309 : vector<1x1x1x8xf32> to vector<1x8xf32>
    %311 = vector.broadcast %310 : vector<1x8xf32> to vector<8x8xf32>
    %312 = arith.addf %308, %311 : vector<8x8xf32>
    %313 = tpu.transpose %304, [1, 0] : vector<8x8xf32> -> vector<8x8xf32>
    %314 = arith.truncf %296 : vector<8x8xf32> to vector<8x8xbf16>
    %315 = arith.truncf %313 : vector<8x8xf32> to vector<8x8xbf16>
    %cst_221 = arith.constant dense<0.000000e+00> : vector<8x8xf32>
    %316 = tpu.matmul %314, %315, %cst_221 {dimension_numbers = #tpu.dot_dimension_numbers<[1], [0], [0], [1], [0, 0, 1, 1], [], []>} : vector<8x8xbf16>, vector<8x8xbf16>, vector<8x8xf32> -> vector<8x8xf32>
    %cst_222 = arith.constant dense<0xFF800000> : vector<8xf32>
    %317 = vector.multi_reduction <maximumf>, %316, %cst_222 [1] : vector<8x8xf32> to vector<8xf32>
    %318 = vector.shape_cast %317 : vector<8xf32> to vector<8x1xf32>
    %319 = vector.broadcast %318 : vector<8x1xf32> to vector<8x8xf32>
    %320 = arith.subf %316, %319 : vector<8x8xf32>
    %321 = math.exp %320 : vector<8x8xf32>
    %cst_223 = arith.constant dense<0.000000e+00> : vector<8xf32>
    %322 = vector.multi_reduction <add>, %321, %cst_223 [1] : vector<8x8xf32> to vector<8xf32>
    %323 = vector.shape_cast %322 : vector<8xf32> to vector<8x1xf32>
    %324 = tpu.reciprocal %323 {approx = true} : vector<8x1xf32> -> vector<8x1xf32>
    %325 = vector.broadcast %324 : vector<8x1xf32> to vector<8x8xf32>
    %326 = arith.mulf %321, %325 : vector<8x8xf32>
    %327 = arith.truncf %326 : vector<8x8xf32> to vector<8x8xbf16>
    %328 = arith.truncf %312 : vector<8x8xf32> to vector<8x8xbf16>
    %cst_224 = arith.constant dense<0.000000e+00> : vector<8x8xf32>
    %329 = tpu.matmul %327, %328, %cst_224 {dimension_numbers = #tpu.dot_dimension_numbers<[1], [0], [0], [1], [0, 0, 1, 1], [], []>} : vector<8x8xbf16>, vector<8x8xbf16>, vector<8x8xf32> -> vector<8x8xf32>
    %c1_225 = arith.constant 1 : index
    %c0_226 = arith.constant 0 : index
    %c0_227 = arith.constant 0 : index
    %c0_228 = arith.constant 0 : index
    %330 = vector.load %arg10[%c1_225, %c0_226, %c0_227, %c0_228] : memref<2x4x8x32xf32, #tpu.memory_space<vmem>>, vector<1x1x8x32xf32>
    %331 = vector.shape_cast %330 : vector<1x1x8x32xf32> to vector<8x32xf32>
    %332 = arith.truncf %329 : vector<8x8xf32> to vector<8x8xbf16>
    %333 = arith.truncf %331 : vector<8x32xf32> to vector<8x32xbf16>
    %cst_229 = arith.constant dense<0.000000e+00> : vector<8x32xf32>
    %334 = tpu.matmul %332, %333, %cst_229 {dimension_numbers = #tpu.dot_dimension_numbers<[1], [0], [0], [1], [0, 0, 1, 1], [], []>} : vector<8x8xbf16>, vector<8x32xbf16>, vector<8x32xf32> -> vector<8x32xf32>
    %335 = arith.addf %286, %334 : vector<8x32xf32>
    %c1_230 = arith.constant 1 : index
    %c1_231 = arith.constant 1 : index
    %c0_232 = arith.constant 0 : index
    %c0_233 = arith.constant 0 : index
    %336 = vector.load %arg4[%c1_230, %c1_231, %c0_232, %c0_233] : memref<2x4x32x8xf32, #tpu.memory_space<vmem>>, vector<1x1x32x8xf32>
    %337 = vector.shape_cast %336 : vector<1x1x32x8xf32> to vector<32x8xf32>
    %338 = arith.truncf %337 : vector<32x8xf32> to vector<32x8xbf16>
    %cst_234 = arith.constant dense<0.000000e+00> : vector<8x8xf32>
    %339 = tpu.matmul %285, %338, %cst_234 {dimension_numbers = #tpu.dot_dimension_numbers<[1], [0], [0], [1], [0, 0, 1, 1], [], []>} : vector<8x32xbf16>, vector<32x8xbf16>, vector<8x8xf32> -> vector<8x8xf32>
    %c1_235 = arith.constant 1 : index
    %c1_236 = arith.constant 1 : index
    %c0_237 = arith.constant 0 : index
    %c0_238 = arith.constant 0 : index
    %340 = vector.load %arg5[%c1_235, %c1_236, %c0_237, %c0_238] : memref<2x4x1x8xf32, #tpu.memory_space<vmem>>, vector<1x1x1x8xf32>
    %341 = vector.shape_cast %340 : vector<1x1x1x8xf32> to vector<1x8xf32>
    %342 = vector.broadcast %341 : vector<1x8xf32> to vector<8x8xf32>
    %343 = arith.addf %339, %342 : vector<8x8xf32>
    %cst_239 = arith.constant 0.353553385 : f32
    %344 = vector.broadcast %cst_239 : f32 to vector<8x8xf32>
    %345 = arith.mulf %343, %344 : vector<8x8xf32>
    %c1_240 = arith.constant 1 : index
    %c1_241 = arith.constant 1 : index
    %c0_242 = arith.constant 0 : index
    %c0_243 = arith.constant 0 : index
    %346 = vector.load %arg6[%c1_240, %c1_241, %c0_242, %c0_243] : memref<2x4x32x8xf32, #tpu.memory_space<vmem>>, vector<1x1x32x8xf32>
    %347 = vector.shape_cast %346 : vector<1x1x32x8xf32> to vector<32x8xf32>
    %348 = arith.truncf %347 : vector<32x8xf32> to vector<32x8xbf16>
    %cst_244 = arith.constant dense<0.000000e+00> : vector<8x8xf32>
    %349 = tpu.matmul %285, %348, %cst_244 {dimension_numbers = #tpu.dot_dimension_numbers<[1], [0], [0], [1], [0, 0, 1, 1], [], []>} : vector<8x32xbf16>, vector<32x8xbf16>, vector<8x8xf32> -> vector<8x8xf32>
    %c1_245 = arith.constant 1 : index
    %c1_246 = arith.constant 1 : index
    %c0_247 = arith.constant 0 : index
    %c0_248 = arith.constant 0 : index
    %350 = vector.load %arg7[%c1_245, %c1_246, %c0_247, %c0_248] : memref<2x4x1x8xf32, #tpu.memory_space<vmem>>, vector<1x1x1x8xf32>
    %351 = vector.shape_cast %350 : vector<1x1x1x8xf32> to vector<1x8xf32>
    %352 = vector.broadcast %351 : vector<1x8xf32> to vector<8x8xf32>
    %353 = arith.addf %349, %352 : vector<8x8xf32>
    %c1_249 = arith.constant 1 : index
    %c1_250 = arith.constant 1 : index
    %c0_251 = arith.constant 0 : index
    %c0_252 = arith.constant 0 : index
    %354 = vector.load %arg8[%c1_249, %c1_250, %c0_251, %c0_252] : memref<2x4x32x8xf32, #tpu.memory_space<vmem>>, vector<1x1x32x8xf32>
    %355 = vector.shape_cast %354 : vector<1x1x32x8xf32> to vector<32x8xf32>
    %356 = arith.truncf %355 : vector<32x8xf32> to vector<32x8xbf16>
    %cst_253 = arith.constant dense<0.000000e+00> : vector<8x8xf32>
    %357 = tpu.matmul %285, %356, %cst_253 {dimension_numbers = #tpu.dot_dimension_numbers<[1], [0], [0], [1], [0, 0, 1, 1], [], []>} : vector<8x32xbf16>, vector<32x8xbf16>, vector<8x8xf32> -> vector<8x8xf32>
    %c1_254 = arith.constant 1 : index
    %c1_255 = arith.constant 1 : index
    %c0_256 = arith.constant 0 : index
    %c0_257 = arith.constant 0 : index
    %358 = vector.load %arg9[%c1_254, %c1_255, %c0_256, %c0_257] : memref<2x4x1x8xf32, #tpu.memory_space<vmem>>, vector<1x1x1x8xf32>
    %359 = vector.shape_cast %358 : vector<1x1x1x8xf32> to vector<1x8xf32>
    %360 = vector.broadcast %359 : vector<1x8xf32> to vector<8x8xf32>
    %361 = arith.addf %357, %360 : vector<8x8xf32>
    %362 = tpu.transpose %353, [1, 0] : vector<8x8xf32> -> vector<8x8xf32>
    %363 = arith.truncf %345 : vector<8x8xf32> to vector<8x8xbf16>
    %364 = arith.truncf %362 : vector<8x8xf32> to vector<8x8xbf16>
    %cst_258 = arith.constant dense<0.000000e+00> : vector<8x8xf32>
    %365 = tpu.matmul %363, %364, %cst_258 {dimension_numbers = #tpu.dot_dimension_numbers<[1], [0], [0], [1], [0, 0, 1, 1], [], []>} : vector<8x8xbf16>, vector<8x8xbf16>, vector<8x8xf32> -> vector<8x8xf32>
    %cst_259 = arith.constant dense<0xFF800000> : vector<8xf32>
    %366 = vector.multi_reduction <maximumf>, %365, %cst_259 [1] : vector<8x8xf32> to vector<8xf32>
    %367 = vector.shape_cast %366 : vector<8xf32> to vector<8x1xf32>
    %368 = vector.broadcast %367 : vector<8x1xf32> to vector<8x8xf32>
    %369 = arith.subf %365, %368 : vector<8x8xf32>
    %370 = math.exp %369 : vector<8x8xf32>
    %cst_260 = arith.constant dense<0.000000e+00> : vector<8xf32>
    %371 = vector.multi_reduction <add>, %370, %cst_260 [1] : vector<8x8xf32> to vector<8xf32>
    %372 = vector.shape_cast %371 : vector<8xf32> to vector<8x1xf32>
    %373 = tpu.reciprocal %372 {approx = true} : vector<8x1xf32> -> vector<8x1xf32>
    %374 = vector.broadcast %373 : vector<8x1xf32> to vector<8x8xf32>
    %375 = arith.mulf %370, %374 : vector<8x8xf32>
    %376 = arith.truncf %375 : vector<8x8xf32> to vector<8x8xbf16>
    %377 = arith.truncf %361 : vector<8x8xf32> to vector<8x8xbf16>
    %cst_261 = arith.constant dense<0.000000e+00> : vector<8x8xf32>
    %378 = tpu.matmul %376, %377, %cst_261 {dimension_numbers = #tpu.dot_dimension_numbers<[1], [0], [0], [1], [0, 0, 1, 1], [], []>} : vector<8x8xbf16>, vector<8x8xbf16>, vector<8x8xf32> -> vector<8x8xf32>
    %c1_262 = arith.constant 1 : index
    %c1_263 = arith.constant 1 : index
    %c0_264 = arith.constant 0 : index
    %c0_265 = arith.constant 0 : index
    %379 = vector.load %arg10[%c1_262, %c1_263, %c0_264, %c0_265] : memref<2x4x8x32xf32, #tpu.memory_space<vmem>>, vector<1x1x8x32xf32>
    %380 = vector.shape_cast %379 : vector<1x1x8x32xf32> to vector<8x32xf32>
    %381 = arith.truncf %378 : vector<8x8xf32> to vector<8x8xbf16>
    %382 = arith.truncf %380 : vector<8x32xf32> to vector<8x32xbf16>
    %cst_266 = arith.constant dense<0.000000e+00> : vector<8x32xf32>
    %383 = tpu.matmul %381, %382, %cst_266 {dimension_numbers = #tpu.dot_dimension_numbers<[1], [0], [0], [1], [0, 0, 1, 1], [], []>} : vector<8x8xbf16>, vector<8x32xbf16>, vector<8x32xf32> -> vector<8x32xf32>
    %384 = arith.addf %335, %383 : vector<8x32xf32>
    %c1_267 = arith.constant 1 : index
    %c2_268 = arith.constant 2 : index
    %c0_269 = arith.constant 0 : index
    %c0_270 = arith.constant 0 : index
    %385 = vector.load %arg4[%c1_267, %c2_268, %c0_269, %c0_270] : memref<2x4x32x8xf32, #tpu.memory_space<vmem>>, vector<1x1x32x8xf32>
    %386 = vector.shape_cast %385 : vector<1x1x32x8xf32> to vector<32x8xf32>
    %387 = arith.truncf %386 : vector<32x8xf32> to vector<32x8xbf16>
    %cst_271 = arith.constant dense<0.000000e+00> : vector<8x8xf32>
    %388 = tpu.matmul %285, %387, %cst_271 {dimension_numbers = #tpu.dot_dimension_numbers<[1], [0], [0], [1], [0, 0, 1, 1], [], []>} : vector<8x32xbf16>, vector<32x8xbf16>, vector<8x8xf32> -> vector<8x8xf32>
    %c1_272 = arith.constant 1 : index
    %c2_273 = arith.constant 2 : index
    %c0_274 = arith.constant 0 : index
    %c0_275 = arith.constant 0 : index
    %389 = vector.load %arg5[%c1_272, %c2_273, %c0_274, %c0_275] : memref<2x4x1x8xf32, #tpu.memory_space<vmem>>, vector<1x1x1x8xf32>
    %390 = vector.shape_cast %389 : vector<1x1x1x8xf32> to vector<1x8xf32>
    %391 = vector.broadcast %390 : vector<1x8xf32> to vector<8x8xf32>
    %392 = arith.addf %388, %391 : vector<8x8xf32>
    %cst_276 = arith.constant 0.353553385 : f32
    %393 = vector.broadcast %cst_276 : f32 to vector<8x8xf32>
    %394 = arith.mulf %392, %393 : vector<8x8xf32>
    %c1_277 = arith.constant 1 : index
    %c2_278 = arith.constant 2 : index
    %c0_279 = arith.constant 0 : index
    %c0_280 = arith.constant 0 : index
    %395 = vector.load %arg6[%c1_277, %c2_278, %c0_279, %c0_280] : memref<2x4x32x8xf32, #tpu.memory_space<vmem>>, vector<1x1x32x8xf32>
    %396 = vector.shape_cast %395 : vector<1x1x32x8xf32> to vector<32x8xf32>
    %397 = arith.truncf %396 : vector<32x8xf32> to vector<32x8xbf16>
    %cst_281 = arith.constant dense<0.000000e+00> : vector<8x8xf32>
    %398 = tpu.matmul %285, %397, %cst_281 {dimension_numbers = #tpu.dot_dimension_numbers<[1], [0], [0], [1], [0, 0, 1, 1], [], []>} : vector<8x32xbf16>, vector<32x8xbf16>, vector<8x8xf32> -> vector<8x8xf32>
    %c1_282 = arith.constant 1 : index
    %c2_283 = arith.constant 2 : index
    %c0_284 = arith.constant 0 : index
    %c0_285 = arith.constant 0 : index
    %399 = vector.load %arg7[%c1_282, %c2_283, %c0_284, %c0_285] : memref<2x4x1x8xf32, #tpu.memory_space<vmem>>, vector<1x1x1x8xf32>
    %400 = vector.shape_cast %399 : vector<1x1x1x8xf32> to vector<1x8xf32>
    %401 = vector.broadcast %400 : vector<1x8xf32> to vector<8x8xf32>
    %402 = arith.addf %398, %401 : vector<8x8xf32>
    %c1_286 = arith.constant 1 : index
    %c2_287 = arith.constant 2 : index
    %c0_288 = arith.constant 0 : index
    %c0_289 = arith.constant 0 : index
    %403 = vector.load %arg8[%c1_286, %c2_287, %c0_288, %c0_289] : memref<2x4x32x8xf32, #tpu.memory_space<vmem>>, vector<1x1x32x8xf32>
    %404 = vector.shape_cast %403 : vector<1x1x32x8xf32> to vector<32x8xf32>
    %405 = arith.truncf %404 : vector<32x8xf32> to vector<32x8xbf16>
    %cst_290 = arith.constant dense<0.000000e+00> : vector<8x8xf32>
    %406 = tpu.matmul %285, %405, %cst_290 {dimension_numbers = #tpu.dot_dimension_numbers<[1], [0], [0], [1], [0, 0, 1, 1], [], []>} : vector<8x32xbf16>, vector<32x8xbf16>, vector<8x8xf32> -> vector<8x8xf32>
    %c1_291 = arith.constant 1 : index
    %c2_292 = arith.constant 2 : index
    %c0_293 = arith.constant 0 : index
    %c0_294 = arith.constant 0 : index
    %407 = vector.load %arg9[%c1_291, %c2_292, %c0_293, %c0_294] : memref<2x4x1x8xf32, #tpu.memory_space<vmem>>, vector<1x1x1x8xf32>
    %408 = vector.shape_cast %407 : vector<1x1x1x8xf32> to vector<1x8xf32>
    %409 = vector.broadcast %408 : vector<1x8xf32> to vector<8x8xf32>
    %410 = arith.addf %406, %409 : vector<8x8xf32>
    %411 = tpu.transpose %402, [1, 0] : vector<8x8xf32> -> vector<8x8xf32>
    %412 = arith.truncf %394 : vector<8x8xf32> to vector<8x8xbf16>
    %413 = arith.truncf %411 : vector<8x8xf32> to vector<8x8xbf16>
    %cst_295 = arith.constant dense<0.000000e+00> : vector<8x8xf32>
    %414 = tpu.matmul %412, %413, %cst_295 {dimension_numbers = #tpu.dot_dimension_numbers<[1], [0], [0], [1], [0, 0, 1, 1], [], []>} : vector<8x8xbf16>, vector<8x8xbf16>, vector<8x8xf32> -> vector<8x8xf32>
    %cst_296 = arith.constant dense<0xFF800000> : vector<8xf32>
    %415 = vector.multi_reduction <maximumf>, %414, %cst_296 [1] : vector<8x8xf32> to vector<8xf32>
    %416 = vector.shape_cast %415 : vector<8xf32> to vector<8x1xf32>
    %417 = vector.broadcast %416 : vector<8x1xf32> to vector<8x8xf32>
    %418 = arith.subf %414, %417 : vector<8x8xf32>
    %419 = math.exp %418 : vector<8x8xf32>
    %cst_297 = arith.constant dense<0.000000e+00> : vector<8xf32>
    %420 = vector.multi_reduction <add>, %419, %cst_297 [1] : vector<8x8xf32> to vector<8xf32>
    %421 = vector.shape_cast %420 : vector<8xf32> to vector<8x1xf32>
    %422 = tpu.reciprocal %421 {approx = true} : vector<8x1xf32> -> vector<8x1xf32>
    %423 = vector.broadcast %422 : vector<8x1xf32> to vector<8x8xf32>
    %424 = arith.mulf %419, %423 : vector<8x8xf32>
    %425 = arith.truncf %424 : vector<8x8xf32> to vector<8x8xbf16>
    %426 = arith.truncf %410 : vector<8x8xf32> to vector<8x8xbf16>
    %cst_298 = arith.constant dense<0.000000e+00> : vector<8x8xf32>
    %427 = tpu.matmul %425, %426, %cst_298 {dimension_numbers = #tpu.dot_dimension_numbers<[1], [0], [0], [1], [0, 0, 1, 1], [], []>} : vector<8x8xbf16>, vector<8x8xbf16>, vector<8x8xf32> -> vector<8x8xf32>
    %c1_299 = arith.constant 1 : index
    %c2_300 = arith.constant 2 : index
    %c0_301 = arith.constant 0 : index
    %c0_302 = arith.constant 0 : index
    %428 = vector.load %arg10[%c1_299, %c2_300, %c0_301, %c0_302] : memref<2x4x8x32xf32, #tpu.memory_space<vmem>>, vector<1x1x8x32xf32>
    %429 = vector.shape_cast %428 : vector<1x1x8x32xf32> to vector<8x32xf32>
    %430 = arith.truncf %427 : vector<8x8xf32> to vector<8x8xbf16>
    %431 = arith.truncf %429 : vector<8x32xf32> to vector<8x32xbf16>
    %cst_303 = arith.constant dense<0.000000e+00> : vector<8x32xf32>
    %432 = tpu.matmul %430, %431, %cst_303 {dimension_numbers = #tpu.dot_dimension_numbers<[1], [0], [0], [1], [0, 0, 1, 1], [], []>} : vector<8x8xbf16>, vector<8x32xbf16>, vector<8x32xf32> -> vector<8x32xf32>
    %433 = arith.addf %384, %432 : vector<8x32xf32>
    %c1_304 = arith.constant 1 : index
    %c3_305 = arith.constant 3 : index
    %c0_306 = arith.constant 0 : index
    %c0_307 = arith.constant 0 : index
    %434 = vector.load %arg4[%c1_304, %c3_305, %c0_306, %c0_307] : memref<2x4x32x8xf32, #tpu.memory_space<vmem>>, vector<1x1x32x8xf32>
    %435 = vector.shape_cast %434 : vector<1x1x32x8xf32> to vector<32x8xf32>
    %436 = arith.truncf %435 : vector<32x8xf32> to vector<32x8xbf16>
    %cst_308 = arith.constant dense<0.000000e+00> : vector<8x8xf32>
    %437 = tpu.matmul %285, %436, %cst_308 {dimension_numbers = #tpu.dot_dimension_numbers<[1], [0], [0], [1], [0, 0, 1, 1], [], []>} : vector<8x32xbf16>, vector<32x8xbf16>, vector<8x8xf32> -> vector<8x8xf32>
    %c1_309 = arith.constant 1 : index
    %c3_310 = arith.constant 3 : index
    %c0_311 = arith.constant 0 : index
    %c0_312 = arith.constant 0 : index
    %438 = vector.load %arg5[%c1_309, %c3_310, %c0_311, %c0_312] : memref<2x4x1x8xf32, #tpu.memory_space<vmem>>, vector<1x1x1x8xf32>
    %439 = vector.shape_cast %438 : vector<1x1x1x8xf32> to vector<1x8xf32>
    %440 = vector.broadcast %439 : vector<1x8xf32> to vector<8x8xf32>
    %441 = arith.addf %437, %440 : vector<8x8xf32>
    %cst_313 = arith.constant 0.353553385 : f32
    %442 = vector.broadcast %cst_313 : f32 to vector<8x8xf32>
    %443 = arith.mulf %441, %442 : vector<8x8xf32>
    %c1_314 = arith.constant 1 : index
    %c3_315 = arith.constant 3 : index
    %c0_316 = arith.constant 0 : index
    %c0_317 = arith.constant 0 : index
    %444 = vector.load %arg6[%c1_314, %c3_315, %c0_316, %c0_317] : memref<2x4x32x8xf32, #tpu.memory_space<vmem>>, vector<1x1x32x8xf32>
    %445 = vector.shape_cast %444 : vector<1x1x32x8xf32> to vector<32x8xf32>
    %446 = arith.truncf %445 : vector<32x8xf32> to vector<32x8xbf16>
    %cst_318 = arith.constant dense<0.000000e+00> : vector<8x8xf32>
    %447 = tpu.matmul %285, %446, %cst_318 {dimension_numbers = #tpu.dot_dimension_numbers<[1], [0], [0], [1], [0, 0, 1, 1], [], []>} : vector<8x32xbf16>, vector<32x8xbf16>, vector<8x8xf32> -> vector<8x8xf32>
    %c1_319 = arith.constant 1 : index
    %c3_320 = arith.constant 3 : index
    %c0_321 = arith.constant 0 : index
    %c0_322 = arith.constant 0 : index
    %448 = vector.load %arg7[%c1_319, %c3_320, %c0_321, %c0_322] : memref<2x4x1x8xf32, #tpu.memory_space<vmem>>, vector<1x1x1x8xf32>
    %449 = vector.shape_cast %448 : vector<1x1x1x8xf32> to vector<1x8xf32>
    %450 = vector.broadcast %449 : vector<1x8xf32> to vector<8x8xf32>
    %451 = arith.addf %447, %450 : vector<8x8xf32>
    %c1_323 = arith.constant 1 : index
    %c3_324 = arith.constant 3 : index
    %c0_325 = arith.constant 0 : index
    %c0_326 = arith.constant 0 : index
    %452 = vector.load %arg8[%c1_323, %c3_324, %c0_325, %c0_326] : memref<2x4x32x8xf32, #tpu.memory_space<vmem>>, vector<1x1x32x8xf32>
    %453 = vector.shape_cast %452 : vector<1x1x32x8xf32> to vector<32x8xf32>
    %454 = arith.truncf %453 : vector<32x8xf32> to vector<32x8xbf16>
    %cst_327 = arith.constant dense<0.000000e+00> : vector<8x8xf32>
    %455 = tpu.matmul %285, %454, %cst_327 {dimension_numbers = #tpu.dot_dimension_numbers<[1], [0], [0], [1], [0, 0, 1, 1], [], []>} : vector<8x32xbf16>, vector<32x8xbf16>, vector<8x8xf32> -> vector<8x8xf32>
    %c1_328 = arith.constant 1 : index
    %c3_329 = arith.constant 3 : index
    %c0_330 = arith.constant 0 : index
    %c0_331 = arith.constant 0 : index
    %456 = vector.load %arg9[%c1_328, %c3_329, %c0_330, %c0_331] : memref<2x4x1x8xf32, #tpu.memory_space<vmem>>, vector<1x1x1x8xf32>
    %457 = vector.shape_cast %456 : vector<1x1x1x8xf32> to vector<1x8xf32>
    %458 = vector.broadcast %457 : vector<1x8xf32> to vector<8x8xf32>
    %459 = arith.addf %455, %458 : vector<8x8xf32>
    %460 = tpu.transpose %451, [1, 0] : vector<8x8xf32> -> vector<8x8xf32>
    %461 = arith.truncf %443 : vector<8x8xf32> to vector<8x8xbf16>
    %462 = arith.truncf %460 : vector<8x8xf32> to vector<8x8xbf16>
    %cst_332 = arith.constant dense<0.000000e+00> : vector<8x8xf32>
    %463 = tpu.matmul %461, %462, %cst_332 {dimension_numbers = #tpu.dot_dimension_numbers<[1], [0], [0], [1], [0, 0, 1, 1], [], []>} : vector<8x8xbf16>, vector<8x8xbf16>, vector<8x8xf32> -> vector<8x8xf32>
    %cst_333 = arith.constant dense<0xFF800000> : vector<8xf32>
    %464 = vector.multi_reduction <maximumf>, %463, %cst_333 [1] : vector<8x8xf32> to vector<8xf32>
    %465 = vector.shape_cast %464 : vector<8xf32> to vector<8x1xf32>
    %466 = vector.broadcast %465 : vector<8x1xf32> to vector<8x8xf32>
    %467 = arith.subf %463, %466 : vector<8x8xf32>
    %468 = math.exp %467 : vector<8x8xf32>
    %cst_334 = arith.constant dense<0.000000e+00> : vector<8xf32>
    %469 = vector.multi_reduction <add>, %468, %cst_334 [1] : vector<8x8xf32> to vector<8xf32>
    %470 = vector.shape_cast %469 : vector<8xf32> to vector<8x1xf32>
    %471 = tpu.reciprocal %470 {approx = true} : vector<8x1xf32> -> vector<8x1xf32>
    %472 = vector.broadcast %471 : vector<8x1xf32> to vector<8x8xf32>
    %473 = arith.mulf %468, %472 : vector<8x8xf32>
    %474 = arith.truncf %473 : vector<8x8xf32> to vector<8x8xbf16>
    %475 = arith.truncf %459 : vector<8x8xf32> to vector<8x8xbf16>
    %cst_335 = arith.constant dense<0.000000e+00> : vector<8x8xf32>
    %476 = tpu.matmul %474, %475, %cst_335 {dimension_numbers = #tpu.dot_dimension_numbers<[1], [0], [0], [1], [0, 0, 1, 1], [], []>} : vector<8x8xbf16>, vector<8x8xbf16>, vector<8x8xf32> -> vector<8x8xf32>
    %c1_336 = arith.constant 1 : index
    %c3_337 = arith.constant 3 : index
    %c0_338 = arith.constant 0 : index
    %c0_339 = arith.constant 0 : index
    %477 = vector.load %arg10[%c1_336, %c3_337, %c0_338, %c0_339] : memref<2x4x8x32xf32, #tpu.memory_space<vmem>>, vector<1x1x8x32xf32>
    %478 = vector.shape_cast %477 : vector<1x1x8x32xf32> to vector<8x32xf32>
    %479 = arith.truncf %476 : vector<8x8xf32> to vector<8x8xbf16>
    %480 = arith.truncf %478 : vector<8x32xf32> to vector<8x32xbf16>
    %cst_340 = arith.constant dense<0.000000e+00> : vector<8x32xf32>
    %481 = tpu.matmul %479, %480, %cst_340 {dimension_numbers = #tpu.dot_dimension_numbers<[1], [0], [0], [1], [0, 0, 1, 1], [], []>} : vector<8x8xbf16>, vector<8x32xbf16>, vector<8x32xf32> -> vector<8x32xf32>
    %482 = arith.addf %433, %481 : vector<8x32xf32>
    %c1_341 = arith.constant 1 : index
    %c0_342 = arith.constant 0 : index
    %c0_343 = arith.constant 0 : index
    %483 = vector.load %arg11[%c1_341, %c0_342, %c0_343] : memref<2x1x32xf32, #tpu.memory_space<vmem>>, vector<1x1x32xf32>
    %484 = vector.shape_cast %483 : vector<1x1x32xf32> to vector<1x32xf32>
    %485 = vector.broadcast %484 : vector<1x32xf32> to vector<8x32xf32>
    %486 = arith.addf %482, %485 : vector<8x32xf32>
    %487 = arith.addf %486, %284 : vector<8x32xf32>
    %c1_344 = arith.constant 1 : index
    %c0_345 = arith.constant 0 : index
    %c0_346 = arith.constant 0 : index
    %488 = vector.load %arg16[%c1_344, %c0_345, %c0_346] : memref<2x1x32xf32, #tpu.memory_space<vmem>>, vector<1x1x32xf32>
    %489 = vector.shape_cast %488 : vector<1x1x32xf32> to vector<1x32xf32>
    %c1_347 = arith.constant 1 : index
    %c0_348 = arith.constant 0 : index
    %c0_349 = arith.constant 0 : index
    %490 = vector.load %arg17[%c1_347, %c0_348, %c0_349] : memref<2x1x32xf32, #tpu.memory_space<vmem>>, vector<1x1x32xf32>
    %491 = vector.shape_cast %490 : vector<1x1x32xf32> to vector<1x32xf32>
    %cst_350 = arith.constant dense<0.000000e+00> : vector<8xf32>
    %492 = vector.multi_reduction <add>, %487, %cst_350 [1] : vector<8x32xf32> to vector<8xf32>
    %493 = vector.shape_cast %492 : vector<8xf32> to vector<8x1xf32>
    %cst_351 = arith.constant 3.200000e+01 : f32
    %494 = vector.broadcast %cst_351 : f32 to vector<8x1xf32>
    %495 = arith.divf %493, %494 : vector<8x1xf32>
    %496 = vector.broadcast %495 : vector<8x1xf32> to vector<8x32xf32>
    %497 = arith.subf %487, %496 : vector<8x32xf32>
    %498 = arith.mulf %497, %497 : vector<8x32xf32>
    %cst_352 = arith.constant dense<0.000000e+00> : vector<8xf32>
    %499 = vector.multi_reduction <add>, %498, %cst_352 [1] : vector<8x32xf32> to vector<8xf32>
    %500 = vector.shape_cast %499 : vector<8xf32> to vector<8x1xf32>
    %cst_353 = arith.constant 3.200000e+01 : f32
    %501 = vector.broadcast %cst_353 : f32 to vector<8x1xf32>
    %502 = arith.divf %500, %501 : vector<8x1xf32>
    %503 = vector.broadcast %495 : vector<8x1xf32> to vector<8x32xf32>
    %504 = arith.subf %487, %503 : vector<8x32xf32>
    %cst_354 = arith.constant 9.99999974E-6 : f32
    %505 = vector.broadcast %cst_354 : f32 to vector<8x1xf32>
    %506 = arith.addf %502, %505 : vector<8x1xf32>
    %507 = math.rsqrt %506 : vector<8x1xf32>
    %508 = vector.broadcast %507 : vector<8x1xf32> to vector<8x32xf32>
    %509 = arith.mulf %504, %508 : vector<8x32xf32>
    %510 = vector.broadcast %489 : vector<1x32xf32> to vector<8x32xf32>
    %511 = arith.mulf %509, %510 : vector<8x32xf32>
    %512 = vector.broadcast %491 : vector<1x32xf32> to vector<8x32xf32>
    %513 = arith.addf %511, %512 : vector<8x32xf32>
    %514 = arith.truncf %513 : vector<8x32xf32> to vector<8x32xbf16>
    %c1_355 = arith.constant 1 : index
    %c0_356 = arith.constant 0 : index
    %c0_357 = arith.constant 0 : index
    %515 = vector.load %arg12[%c1_355, %c0_356, %c0_357] : memref<2x32x32xf32, #tpu.memory_space<vmem>>, vector<1x32x32xf32>
    %516 = vector.shape_cast %515 : vector<1x32x32xf32> to vector<32x32xf32>
    %517 = arith.truncf %516 : vector<32x32xf32> to vector<32x32xbf16>
    %cst_358 = arith.constant dense<0.000000e+00> : vector<8x32xf32>
    %518 = tpu.matmul %514, %517, %cst_358 {dimension_numbers = #tpu.dot_dimension_numbers<[1], [0], [0], [1], [0, 0, 1, 1], [], []>} : vector<8x32xbf16>, vector<32x32xbf16>, vector<8x32xf32> -> vector<8x32xf32>
    %c1_359 = arith.constant 1 : index
    %c0_360 = arith.constant 0 : index
    %c0_361 = arith.constant 0 : index
    %519 = vector.load %arg13[%c1_359, %c0_360, %c0_361] : memref<2x1x32xf32, #tpu.memory_space<vmem>>, vector<1x1x32xf32>
    %520 = vector.shape_cast %519 : vector<1x1x32xf32> to vector<1x32xf32>
    %521 = vector.broadcast %520 : vector<1x32xf32> to vector<8x32xf32>
    %522 = arith.addf %518, %521 : vector<8x32xf32>
    %cst_362 = arith.constant 0.000000e+00 : f32
    %523 = vector.broadcast %cst_362 : f32 to vector<8x32xf32>
    %524 = arith.maximumf %522, %523 : vector<8x32xf32>
    %c1_363 = arith.constant 1 : index
    %c0_364 = arith.constant 0 : index
    %c0_365 = arith.constant 0 : index
    %525 = vector.load %arg14[%c1_363, %c0_364, %c0_365] : memref<2x32x32xf32, #tpu.memory_space<vmem>>, vector<1x32x32xf32>
    %526 = vector.shape_cast %525 : vector<1x32x32xf32> to vector<32x32xf32>
    %527 = arith.truncf %524 : vector<8x32xf32> to vector<8x32xbf16>
    %528 = arith.truncf %526 : vector<32x32xf32> to vector<32x32xbf16>
    %cst_366 = arith.constant dense<0.000000e+00> : vector<8x32xf32>
    %529 = tpu.matmul %527, %528, %cst_366 {dimension_numbers = #tpu.dot_dimension_numbers<[1], [0], [0], [1], [0, 0, 1, 1], [], []>} : vector<8x32xbf16>, vector<32x32xbf16>, vector<8x32xf32> -> vector<8x32xf32>
    %c1_367 = arith.constant 1 : index
    %c0_368 = arith.constant 0 : index
    %c0_369 = arith.constant 0 : index
    %530 = vector.load %arg15[%c1_367, %c0_368, %c0_369] : memref<2x1x32xf32, #tpu.memory_space<vmem>>, vector<1x1x32xf32>
    %531 = vector.shape_cast %530 : vector<1x1x32xf32> to vector<1x32xf32>
    %532 = vector.broadcast %531 : vector<1x32xf32> to vector<8x32xf32>
    %533 = arith.addf %529, %532 : vector<8x32xf32>
    %534 = arith.addf %533, %513 : vector<8x32xf32>
    %c1_370 = arith.constant 1 : index
    %c0_371 = arith.constant 0 : index
    %c0_372 = arith.constant 0 : index
    %535 = vector.load %arg18[%c1_370, %c0_371, %c0_372] : memref<2x1x32xf32, #tpu.memory_space<vmem>>, vector<1x1x32xf32>
    %536 = vector.shape_cast %535 : vector<1x1x32xf32> to vector<1x32xf32>
    %c1_373 = arith.constant 1 : index
    %c0_374 = arith.constant 0 : index
    %c0_375 = arith.constant 0 : index
    %537 = vector.load %arg19[%c1_373, %c0_374, %c0_375] : memref<2x1x32xf32, #tpu.memory_space<vmem>>, vector<1x1x32xf32>
    %538 = vector.shape_cast %537 : vector<1x1x32xf32> to vector<1x32xf32>
    %cst_376 = arith.constant dense<0.000000e+00> : vector<8xf32>
    %539 = vector.multi_reduction <add>, %534, %cst_376 [1] : vector<8x32xf32> to vector<8xf32>
    %540 = vector.shape_cast %539 : vector<8xf32> to vector<8x1xf32>
    %cst_377 = arith.constant 3.200000e+01 : f32
    %541 = vector.broadcast %cst_377 : f32 to vector<8x1xf32>
    %542 = arith.divf %540, %541 : vector<8x1xf32>
    %543 = vector.broadcast %542 : vector<8x1xf32> to vector<8x32xf32>
    %544 = arith.subf %534, %543 : vector<8x32xf32>
    %545 = arith.mulf %544, %544 : vector<8x32xf32>
    %cst_378 = arith.constant dense<0.000000e+00> : vector<8xf32>
    %546 = vector.multi_reduction <add>, %545, %cst_378 [1] : vector<8x32xf32> to vector<8xf32>
    %547 = vector.shape_cast %546 : vector<8xf32> to vector<8x1xf32>
    %cst_379 = arith.constant 3.200000e+01 : f32
    %548 = vector.broadcast %cst_379 : f32 to vector<8x1xf32>
    %549 = arith.divf %547, %548 : vector<8x1xf32>
    %550 = vector.broadcast %542 : vector<8x1xf32> to vector<8x32xf32>
    %551 = arith.subf %534, %550 : vector<8x32xf32>
    %cst_380 = arith.constant 9.99999974E-6 : f32
    %552 = vector.broadcast %cst_380 : f32 to vector<8x1xf32>
    %553 = arith.addf %549, %552 : vector<8x1xf32>
    %554 = math.rsqrt %553 : vector<8x1xf32>
    %555 = vector.broadcast %554 : vector<8x1xf32> to vector<8x32xf32>
    %556 = arith.mulf %551, %555 : vector<8x32xf32>
    %557 = vector.broadcast %536 : vector<1x32xf32> to vector<8x32xf32>
    %558 = arith.mulf %556, %557 : vector<8x32xf32>
    %559 = vector.broadcast %538 : vector<1x32xf32> to vector<8x32xf32>
    %560 = arith.addf %558, %559 : vector<8x32xf32>
    %c0_381 = arith.constant 0 : index
    %c0_382 = arith.constant 0 : index
    %561 = vector.load %arg20[%c0_381, %c0_382] : memref<1x32xf32, #tpu.memory_space<vmem>>, vector<1x32xf32>
    %c0_383 = arith.constant 0 : index
    %c0_384 = arith.constant 0 : index
    %562 = vector.load %arg21[%c0_383, %c0_384] : memref<1x32xf32, #tpu.memory_space<vmem>>, vector<1x32xf32>
    %cst_385 = arith.constant dense<0.000000e+00> : vector<8xf32>
    %563 = vector.multi_reduction <add>, %560, %cst_385 [1] : vector<8x32xf32> to vector<8xf32>
    %564 = vector.shape_cast %563 : vector<8xf32> to vector<8x1xf32>
    %cst_386 = arith.constant 3.200000e+01 : f32
    %565 = vector.broadcast %cst_386 : f32 to vector<8x1xf32>
    %566 = arith.divf %564, %565 : vector<8x1xf32>
    %567 = vector.broadcast %566 : vector<8x1xf32> to vector<8x32xf32>
    %568 = arith.subf %560, %567 : vector<8x32xf32>
    %569 = arith.mulf %568, %568 : vector<8x32xf32>
    %cst_387 = arith.constant dense<0.000000e+00> : vector<8xf32>
    %570 = vector.multi_reduction <add>, %569, %cst_387 [1] : vector<8x32xf32> to vector<8xf32>
    %571 = vector.shape_cast %570 : vector<8xf32> to vector<8x1xf32>
    %cst_388 = arith.constant 3.200000e+01 : f32
    %572 = vector.broadcast %cst_388 : f32 to vector<8x1xf32>
    %573 = arith.divf %571, %572 : vector<8x1xf32>
    %574 = vector.broadcast %566 : vector<8x1xf32> to vector<8x32xf32>
    %575 = arith.subf %560, %574 : vector<8x32xf32>
    %cst_389 = arith.constant 9.99999974E-6 : f32
    %576 = vector.broadcast %cst_389 : f32 to vector<8x1xf32>
    %577 = arith.addf %573, %576 : vector<8x1xf32>
    %578 = math.rsqrt %577 : vector<8x1xf32>
    %579 = vector.broadcast %578 : vector<8x1xf32> to vector<8x32xf32>
    %580 = arith.mulf %575, %579 : vector<8x32xf32>
    %581 = vector.broadcast %561 : vector<1x32xf32> to vector<8x32xf32>
    %582 = arith.mulf %580, %581 : vector<8x32xf32>
    %583 = vector.broadcast %562 : vector<1x32xf32> to vector<8x32xf32>
    %584 = arith.addf %582, %583 : vector<8x32xf32>
    %c0_390 = arith.constant 0 : index
    %c0_391 = arith.constant 0 : index
    %585 = vector.load %arg22[%c0_390, %c0_391] : memref<32x4xf32, #tpu.memory_space<vmem>>, vector<32x4xf32>
    %586 = arith.truncf %584 : vector<8x32xf32> to vector<8x32xbf16>
    %587 = arith.truncf %585 : vector<32x4xf32> to vector<32x4xbf16>
    %cst_392 = arith.constant dense<0.000000e+00> : vector<8x4xf32>
    %588 = tpu.matmul %586, %587, %cst_392 {dimension_numbers = #tpu.dot_dimension_numbers<[1], [0], [0], [1], [0, 0, 1, 1], [], []>} : vector<8x32xbf16>, vector<32x4xbf16>, vector<8x4xf32> -> vector<8x4xf32>
    %c0_393 = arith.constant 0 : index
    %c0_394 = arith.constant 0 : index
    %589 = vector.load %arg23[%c0_393, %c0_394] : memref<1x4xf32, #tpu.memory_space<vmem>>, vector<1x4xf32>
    %590 = vector.broadcast %589 : vector<1x4xf32> to vector<8x4xf32>
    %591 = arith.addf %588, %590 : vector<8x4xf32>
    %c0_395 = arith.constant 0 : index
    %c0_396 = arith.constant 0 : index
    %c0_397 = arith.constant 0 : index
    %592 = vector.load %arg24[%c0_395, %c0_396, %c0_397] : memref<1x8x4xf32, #tpu.memory_space<vmem>>, vector<1x8x4xf32>
    %593 = vector.shape_cast %592 : vector<1x8x4xf32> to vector<8x4xf32>
    %594 = vector.shape_cast %591 : vector<8x4xf32> to vector<1x8x4xf32>
    tpu.vector_store %arg24[%c0_395, %c0_396, %c0_397], %594 {strides = array<i32>} : memref<1x8x4xf32, #tpu.memory_space<vmem>>, vector<1x8x4xf32>,
    return
  }
  func.func @transform_0(%arg0: i32) -> (i32, i32, i32) {
    %c0_i32 = arith.constant 0 : i32
    %c0_i32_0 = arith.constant 0 : i32
    %c0_i32_1 = arith.constant 0 : i32
    return %arg0, %c0_i32, %c0_i32_0 : i32, i32, i32
  }
  func.func @transform_1(%arg0: i32) -> (i32, i32) {
    %c0_i32 = arith.constant 0 : i32
    %c0_i32_0 = arith.constant 0 : i32
    %c0_i32_1 = arith.constant 0 : i32
    return %c0_i32, %c0_i32_0 : i32, i32
  }
  func.func @transform_2(%arg0: i32) -> (i32, i32) {
    %c0_i32 = arith.constant 0 : i32
    %c0_i32_0 = arith.constant 0 : i32
    %c0_i32_1 = arith.constant 0 : i32
    return %c0_i32, %c0_i32_0 : i32, i32
  }
  func.func @transform_3(%arg0: i32) -> (i32, i32, i32, i32) {
    %c0_i32 = arith.constant 0 : i32
    %c0_i32_0 = arith.constant 0 : i32
    %c0_i32_1 = arith.constant 0 : i32
    %c0_i32_2 = arith.constant 0 : i32
    %c0_i32_3 = arith.constant 0 : i32
    return %c0_i32, %c0_i32_0, %c0_i32_1, %c0_i32_2 : i32, i32, i32, i32
  }
  func.func @transform_4(%arg0: i32) -> (i32, i32, i32, i32) {
    %c0_i32 = arith.constant 0 : i32
    %c0_i32_0 = arith.constant 0 : i32
    %c0_i32_1 = arith.constant 0 : i32
    %c0_i32_2 = arith.constant 0 : i32
    %c0_i32_3 = arith.constant 0 : i32
    return %c0_i32, %c0_i32_0, %c0_i32_1, %c0_i32_2 : i32, i32, i32, i32
  }
  func.func @transform_5(%arg0: i32) -> (i32, i32, i32, i32) {
    %c0_i32 = arith.constant 0 : i32
    %c0_i32_0 = arith.constant 0 : i32
    %c0_i32_1 = arith.constant 0 : i32
    %c0_i32_2 = arith.constant 0 : i32
    %c0_i32_3 = arith.constant 0 : i32
    return %c0_i32, %c0_i32_0, %c0_i32_1, %c0_i32_2 : i32, i32, i32, i32
  }
  func.func @transform_6(%arg0: i32) -> (i32, i32, i32, i32) {
    %c0_i32 = arith.constant 0 : i32
    %c0_i32_0 = arith.constant 0 : i32
    %c0_i32_1 = arith.constant 0 : i32
    %c0_i32_2 = arith.constant 0 : i32
    %c0_i32_3 = arith.constant 0 : i32
    return %c0_i32, %c0_i32_0, %c0_i32_1, %c0_i32_2 : i32, i32, i32, i32
  }
  func.func @transform_7(%arg0: i32) -> (i32, i32, i32, i32) {
    %c0_i32 = arith.constant 0 : i32
    %c0_i32_0 = arith.constant 0 : i32
    %c0_i32_1 = arith.constant 0 : i32
    %c0_i32_2 = arith.constant 0 : i32
    %c0_i32_3 = arith.constant 0 : i32
    return %c0_i32, %c0_i32_0, %c0_i32_1, %c0_i32_2 : i32, i32, i32, i32
  }
  func.func @transform_8(%arg0: i32) -> (i32, i32, i32, i32) {
    %c0_i32 = arith.constant 0 : i32
    %c0_i32_0 = arith.constant 0 : i32
    %c0_i32_1 = arith.constant 0 : i32
    %c0_i32_2 = arith.constant 0 : i32
    %c0_i32_3 = arith.constant 0 : i32
    return %c0_i32, %c0_i32_0, %c0_i32_1, %c0_i32_2 : i32, i32, i32, i32
  }
  func.func @transform_9(%arg0: i32) -> (i32, i32, i32, i32) {
    %c0_i32 = arith.constant 0 : i32
    %c0_i32_0 = arith.constant 0 : i32
    %c0_i32_1 = arith.constant 0 : i32
    %c0_i32_2 = arith.constant 0 : i32
    %c0_i32_3 = arith.constant 0 : i32
    return %c0_i32, %c0_i32_0, %c0_i32_1, %c0_i32_2 : i32, i32, i32, i32
  }
  func.func @transform_10(%arg0: i32) -> (i32, i32, i32) {
    %c0_i32 = arith.constant 0 : i32
    %c0_i32_0 = arith.constant 0 : i32
    %c0_i32_1 = arith.constant 0 : i32
    %c0_i32_2 = arith.constant 0 : i32
    return %c0_i32, %c0_i32_0, %c0_i32_1 : i32, i32, i32
  }
  func.func @transform_11(%arg0: i32) -> (i32, i32, i32) {
    %c0_i32 = arith.constant 0 : i32
    %c0_i32_0 = arith.constant 0 : i32
    %c0_i32_1 = arith.constant 0 : i32
    %c0_i32_2 = arith.constant 0 : i32
    return %c0_i32, %c0_i32_0, %c0_i32_1 : i32, i32, i32
  }
  func.func @transform_12(%arg0: i32) -> (i32, i32, i32) {
    %c0_i32 = arith.constant 0 : i32
    %c0_i32_0 = arith.constant 0 : i32
    %c0_i32_1 = arith.constant 0 : i32
    %c0_i32_2 = arith.constant 0 : i32
    return %c0_i32, %c0_i32_0, %c0_i32_1 : i32, i32, i32
  }
  func.func @transform_13(%arg0: i32) -> (i32, i32, i32) {
    %c0_i32 = arith.constant 0 : i32
    %c0_i32_0 = arith.constant 0 : i32
    %c0_i32_1 = arith.constant 0 : i32
    %c0_i32_2 = arith.constant 0 : i32
    return %c0_i32, %c0_i32_0, %c0_i32_1 : i32, i32, i32
  }
  func.func @transform_14(%arg0: i32) -> (i32, i32, i32) {
    %c0_i32 = arith.constant 0 : i32
    %c0_i32_0 = arith.constant 0 : i32
    %c0_i32_1 = arith.constant 0 : i32
    %c0_i32_2 = arith.constant 0 : i32
    return %c0_i32, %c0_i32_0, %c0_i32_1 : i32, i32, i32
  }
  func.func @transform_15(%arg0: i32) -> (i32, i32, i32) {
    %c0_i32 = arith.constant 0 : i32
    %c0_i32_0 = arith.constant 0 : i32
    %c0_i32_1 = arith.constant 0 : i32
    %c0_i32_2 = arith.constant 0 : i32
    return %c0_i32, %c0_i32_0, %c0_i32_1 : i32, i32, i32
  }
  func.func @transform_16(%arg0: i32) -> (i32, i32, i32) {
    %c0_i32 = arith.constant 0 : i32
    %c0_i32_0 = arith.constant 0 : i32
    %c0_i32_1 = arith.constant 0 : i32
    %c0_i32_2 = arith.constant 0 : i32
    return %c0_i32, %c0_i32_0, %c0_i32_1 : i32, i32, i32
  }
  func.func @transform_17(%arg0: i32) -> (i32, i32, i32) {
    %c0_i32 = arith.constant 0 : i32
    %c0_i32_0 = arith.constant 0 : i32
    %c0_i32_1 = arith.constant 0 : i32
    %c0_i32_2 = arith.constant 0 : i32
    return %c0_i32, %c0_i32_0, %c0_i32_1 : i32, i32, i32
  }
  func.func @transform_18(%arg0: i32) -> (i32, i32, i32) {
    %c0_i32 = arith.constant 0 : i32
    %c0_i32_0 = arith.constant 0 : i32
    %c0_i32_1 = arith.constant 0 : i32
    %c0_i32_2 = arith.constant 0 : i32
    return %c0_i32, %c0_i32_0, %c0_i32_1 : i32, i32, i32
  }
  func.func @transform_19(%arg0: i32) -> (i32, i32) {
    %c0_i32 = arith.constant 0 : i32
    %c0_i32_0 = arith.constant 0 : i32
    %c0_i32_1 = arith.constant 0 : i32
    return %c0_i32, %c0_i32_0 : i32, i32
  }
  func.func @transform_20(%arg0: i32) -> (i32, i32) {
    %c0_i32 = arith.constant 0 : i32
    %c0_i32_0 = arith.constant 0 : i32
    %c0_i32_1 = arith.constant 0 : i32
    return %c0_i32, %c0_i32_0 : i32, i32
  }
  func.func @transform_21(%arg0: i32) -> (i32, i32) {
    %c0_i32 = arith.constant 0 : i32
    %c0_i32_0 = arith.constant 0 : i32
    %c0_i32_1 = arith.constant 0 : i32
    return %c0_i32, %c0_i32_0 : i32, i32
  }
  func.func @transform_22(%arg0: i32) -> (i32, i32) {
    %c0_i32 = arith.constant 0 : i32
    %c0_i32_0 = arith.constant 0 : i32
    %c0_i32_1 = arith.constant 0 : i32
    return %c0_i32, %c0_i32_0 : i32, i32
  }
  func.func @transform_23(%arg0: i32) -> (i32, i32, i32) {
    %c0_i32 = arith.constant 0 : i32
    %c0_i32_0 = arith.constant 0 : i32
    %c0_i32_1 = arith.constant 0 : i32
    return %arg0, %c0_i32, %c0_i32_0 : i32, i32, i32
  }
}

</mosaic_0001>

<llo_original>
// kernel: bert_forward.1
$region0: #{bert_forward.1}
  #allocation0 [shape = 'u32[]', space=smem, size = 0x4, offset = 0x4, fixed_abs, tag = 'smem constant byte address 0x4 - core index']
  #allocation1 [shape = 'u32[144,128]{1,0:T(1,128)}', space=vmem, size = 0x12000, scoped, tag = 'internal scratch']
  %s0 = inlined_call_operand.vmem [shape: f32[2,8,6], index: 0, kind: input, shape index: {}]
  %s1 = inlined_call_operand.vmem [shape: f32[6,32], index: 1, kind: input, shape index: {}]
  %s2 = inlined_call_operand.vmem [shape: f32[1,32], index: 2, kind: input, shape index: {}]
  %s3 = inlined_call_operand.vmem [shape: f32[2,4,32,8], index: 3, kind: input, shape index: {}]
  %s4 = inlined_call_operand.vmem [shape: f32[2,4,1,8], index: 4, kind: input, shape index: {}]
  %s5 = inlined_call_operand.vmem [shape: f32[2,4,32,8], index: 5, kind: input, shape index: {}]
  %s6 = inlined_call_operand.vmem [shape: f32[2,4,1,8], index: 6, kind: input, shape index: {}]
  %s7 = inlined_call_operand.vmem [shape: f32[2,4,32,8], index: 7, kind: input, shape index: {}]
  %s8 = inlined_call_operand.vmem [shape: f32[2,4,1,8], index: 8, kind: input, shape index: {}]
  %s9 = inlined_call_operand.vmem [shape: f32[2,4,8,32], index: 9, kind: input, shape index: {}]
  %s10 = inlined_call_operand.vmem [shape: f32[2,1,32], index: 10, kind: input, shape index: {}]
  %s11 = inlined_call_operand.vmem [shape: f32[2,32,32], index: 11, kind: input, shape index: {}]
  %s12 = inlined_call_operand.vmem [shape: f32[2,1,32], index: 12, kind: input, shape index: {}]
  %s13 = inlined_call_operand.vmem [shape: f32[2,32,32], index: 13, kind: input, shape index: {}]
  %s14 = inlined_call_operand.vmem [shape: f32[2,1,32], index: 14, kind: input, shape index: {}]
  %s15 = inlined_call_operand.vmem [shape: f32[2,1,32], index: 15, kind: input, shape index: {}]
  %s16 = inlined_call_operand.vmem [shape: f32[2,1,32], index: 16, kind: input, shape index: {}]
  %s17 = inlined_call_operand.vmem [shape: f32[2,1,32], index: 17, kind: input, shape index: {}]
  %s18 = inlined_call_operand.vmem [shape: f32[2,1,32], index: 18, kind: input, shape index: {}]
  %s19 = inlined_call_operand.vmem [shape: f32[1,32], index: 19, kind: input, shape index: {}]
  %s20 = inlined_call_operand.vmem [shape: f32[1,32], index: 20, kind: input, shape index: {}]
  %s21 = inlined_call_operand.vmem [shape: f32[32,4], index: 21, kind: input, shape index: {}]
  %s22 = inlined_call_operand.vmem [shape: f32[1,4], index: 22, kind: input, shape index: {}]
  %s23 = inlined_call_operand.vmem [shape: f32[2,8,4], index: 23, kind: output, shape index: {}]
  %s24 = sld [smem:[#allocation0]]
  $region125: #{bert_forward.1} parent=0
    _
  %s26 = ssub.s32 1, %s24
  %s27 = scalar_select 0, %s26, %s24
  loop: start=0, step=1, limit=4
  $region2: #{bert_forward.1} parent=0 // loop_pre_header
    _
  $region3: #{bert_forward.1} parent=0 // loop_header
    %s29 = sphi 0, %s33
    %p30 = scmp.ge.s32.totalorder %s29, 4
    %s39 = sphi 0, %s41
    %s42 = sphi 0, %s39
    %s43 = sphi 0, %s42
    %s59 = sphi 0, %s43
    %s63 = sphi 0, %s63
    %s65 = sphi 0, %s63
    %s66 = sphi 0, %s65
    %s80 = sphi 0, %s66
    %s84 = sphi 0, %s84
    %s86 = sphi 0, %s84
    %s87 = sphi 0, %s86
    %s101 = sphi 0, %s87
    %s105 = sphi 0, %s105
    %s107 = sphi 0, %s105
    %s108 = sphi 0, %s107
    %s122 = sphi 0, %s108
    %s126 = sphi 0, %s126
    %s128 = sphi 0, %s126
    %s129 = sphi 0, %s128
    %s143 = sphi 0, %s129
    %s147 = sphi 0, %s147
    %s149 = sphi 0, %s147
    %s150 = sphi 0, %s149
    %s164 = sphi 0, %s150
    %s168 = sphi 0, %s168
    %s170 = sphi 0, %s168
    %s171 = sphi 0, %s170
    %s185 = sphi 0, %s171
    %s189 = sphi 0, %s189
    %s191 = sphi 0, %s189
    %s192 = sphi 0, %s191
    %s206 = sphi 0, %s192
    %s210 = sphi 0, %s210
    %s212 = sphi 0, %s210
    %s213 = sphi 0, %s212
    %s227 = sphi 0, %s213
    %s231 = sphi 0, %s231
    %s233 = sphi 0, %s231
    %s234 = sphi 0, %s233
    %s248 = sphi 0, %s234
    %s252 = sphi 0, %s252
    %s254 = sphi 0, %s252
    %s255 = sphi 0, %s254
    %s269 = sphi 0, %s255
    %s273 = sphi 0, %s273
    %s275 = sphi 0, %s273
    %s276 = sphi 0, %s275
    %s290 = sphi 0, %s276
    %s294 = sphi 0, %s294
    %s296 = sphi 0, %s294
    %s297 = sphi 0, %s296
    %s311 = sphi 0, %s297
    %s315 = sphi 0, %s315
    %s317 = sphi 0, %s315
    %s318 = sphi 0, %s317
    %s332 = sphi 0, %s318
    %s336 = sphi 0, %s336
    %s338 = sphi 0, %s336
    %s339 = sphi 0, %s338
    %s353 = sphi 0, %s339
    %s357 = sphi 0, %s357
    %s359 = sphi 0, %s357
    %s360 = sphi 0, %s359
    %s374 = sphi 0, %s360
    %s378 = sphi 0, %s378
    %s380 = sphi 0, %s378
    %s381 = sphi 0, %s380
    %s395 = sphi 0, %s381
    %s399 = sphi 0, %s399
    %s401 = sphi 0, %s399
    %s402 = sphi 0, %s401
    %s416 = sphi 0, %s402
    %s420 = sphi 0, %s420
    %s422 = sphi 0, %s420
    %s423 = sphi 0, %s422
    %s437 = sphi 0, %s423
    %s441 = sphi 0, %s441
    %s443 = sphi 0, %s441
    %s444 = sphi 0, %s443
    %s458 = sphi 0, %s444
    %s462 = sphi 0, %s462
    %s464 = sphi 0, %s462
    %s465 = sphi 0, %s464
    %s479 = sphi 0, %s465
    %s483 = sphi 0, %s483
    %s485 = sphi 0, %s483
    %s486 = sphi 0, %s485
    %s500 = sphi 0, %s486
    %s504 = sphi 0, %s504
    %s506 = sphi 0, %s504
    %s507 = sphi 0, %s506
    %s521 = sphi 0, %s507
    %s527 = sphi 0, %s529
    %s530 = sphi 0, %s527
    %s531 = sphi 0, %s530
    %s547 = sphi 0, %s531
  $region4: #{bert_forward.1} parent=0 // loop_header_branch
    %32 = sbr.rel (%p30) target = $region8
  $region5: #{bert_forward.1} parent=0 // loop_body
    %s34 = ssub.s32 %s29, 1
    %s35 = ssub.s32 %s29, 2
    %s36 = sadd.s32 %s29, 1
    %s37 = ssub.s32 %s29, %s36
    %p38 = scmp.eq.s32.totalorder %s37, 0
    %s40 = sadd.s32 %s39, 1
    %s41 = scalar_select %p38, %s39, %s40
    %p44 = pneg %p38
    %p45 = scmp.eq.s32.totalorder %s29, 1
    %p46 = por %p44, %p45
    %p47 = scmp.ne.s32.totalorder %s39, %s42
    %p48 = scmp.eq.s32.totalorder %s29, 0
    %p49 = por %p47, %p48
    %p50 = scmp.ne.s32.totalorder %s39, %s42
    %p51 = scmp.eq.s32.totalorder %s34, 1
    %p52 = por %p50, %p51
    %p53 = scmp.ne.s32.totalorder %s42, %s43
    %p54 = scmp.eq.s32.totalorder %s34, 0
    %p55 = por %p53, %p54
    %p56 = scmp.ne.s32.totalorder %s42, %s43
    %p57 = scmp.eq.s32.totalorder %s35, 1
    %p58 = por %p56, %p57
    %p60 = scmp.ne.s32.totalorder %s43, %s59
    %p61 = scmp.eq.s32.totalorder %s35, 0
    %p62 = por %p60, %p61
    %s64 = sadd.s32 %s63, 1
    %p67 = scmp.eq.s32.totalorder %s29, 1
    %p68 = scmp.ne.s32.totalorder %s63, %s65
    %p69 = scmp.eq.s32.totalorder %s29, 0
    %p70 = por %p68, %p69
    %p71 = scmp.ne.s32.totalorder %s63, %s65
    %p72 = scmp.eq.s32.totalorder %s34, 1
    %p73 = por %p71, %p72
    %p74 = scmp.ne.s32.totalorder %s65, %s66
    %p75 = scmp.eq.s32.totalorder %s34, 0
    %p76 = por %p74, %p75
    %p77 = scmp.ne.s32.totalorder %s65, %s66
    %p78 = scmp.eq.s32.totalorder %s35, 1
    %p79 = por %p77, %p78
    %p81 = scmp.ne.s32.totalorder %s66, %s80
    %p82 = scmp.eq.s32.totalorder %s35, 0
    %p83 = por %p81, %p82
    %s85 = sadd.s32 %s84, 1
    %p88 = scmp.eq.s32.totalorder %s29, 1
    %p89 = scmp.ne.s32.totalorder %s84, %s86
    %p90 = scmp.eq.s32.totalorder %s29, 0
    %p91 = por %p89, %p90
    %p92 = scmp.ne.s32.totalorder %s84, %s86
    %p93 = scmp.eq.s32.totalorder %s34, 1
    %p94 = por %p92, %p93
    %p95 = scmp.ne.s32.totalorder %s86, %s87
    %p96 = scmp.eq.s32.totalorder %s34, 0
    %p97 = por %p95, %p96
    %p98 = scmp.ne.s32.totalorder %s86, %s87
    %p99 = scmp.eq.s32.totalorder %s35, 1
    %p100 = por %p98, %p99
    %p102 = scmp.ne.s32.totalorder %s87, %s101
    %p103 = scmp.eq.s32.totalorder %s35, 0
    %p104 = por %p102, %p103
    %s106 = sadd.s32 %s105, 1
    %p109 = scmp.eq.s32.totalorder %s29, 1
    %p110 = scmp.ne.s32.totalorder %s105, %s107
    %p111 = scmp.eq.s32.totalorder %s29, 0
    %p112 = por %p110, %p111
    %p113 = scmp.ne.s32.totalorder %s105, %s107
    %p114 = scmp.eq.s32.totalorder %s34, 1
    %p115 = por %p113, %p114
    %p116 = scmp.ne.s32.totalorder %s107, %s108
    %p117 = scmp.eq.s32.totalorder %s34, 0
    %p118 = por %p116, %p117
    %p119 = scmp.ne.s32.totalorder %s107, %s108
    %p120 = scmp.eq.s32.totalorder %s35, 1
    %p121 = por %p119, %p120
    %p123 = scmp.ne.s32.totalorder %s108, %s122
    %p124 = scmp.eq.s32.totalorder %s35, 0
    %p125 = por %p123, %p124
    %s127 = sadd.s32 %s126, 1
    %p130 = scmp.eq.s32.totalorder %s29, 1
    %p131 = scmp.ne.s32.totalorder %s126, %s128
    %p132 = scmp.eq.s32.totalorder %s29, 0
    %p133 = por %p131, %p132
    %p134 = scmp.ne.s32.totalorder %s126, %s128
    %p135 = scmp.eq.s32.totalorder %s34, 1
    %p136 = por %p134, %p135
    %p137 = scmp.ne.s32.totalorder %s128, %s129
    %p138 = scmp.eq.s32.totalorder %s34, 0
    %p139 = por %p137, %p138
    %p140 = scmp.ne.s32.totalorder %s128, %s129
    %p141 = scmp.eq.s32.totalorder %s35, 1
    %p142 = por %p140, %p141
    %p144 = scmp.ne.s32.totalorder %s129, %s143
    %p145 = scmp.eq.s32.totalorder %s35, 0
    %p146 = por %p144, %p145
    %s148 = sadd.s32 %s147, 1
    %p151 = scmp.eq.s32.totalorder %s29, 1
    %p152 = scmp.ne.s32.totalorder %s147, %s149
    %p153 = scmp.eq.s32.totalorder %s29, 0
    %p154 = por %p152, %p153
    %p155 = scmp.ne.s32.totalorder %s147, %s149
    %p156 = scmp.eq.s32.totalorder %s34, 1
    %p157 = por %p155, %p156
    %p158 = scmp.ne.s32.totalorder %s149, %s150
    %p159 = scmp.eq.s32.totalorder %s34, 0
    %p160 = por %p158, %p159
    %p161 = scmp.ne.s32.totalorder %s149, %s150
    %p162 = scmp.eq.s32.totalorder %s35, 1
    %p163 = por %p161, %p162
    %p165 = scmp.ne.s32.totalorder %s150, %s164
    %p166 = scmp.eq.s32.totalorder %s35, 0
    %p167 = por %p165, %p166
    %s169 = sadd.s32 %s168, 1
    %p172 = scmp.eq.s32.totalorder %s29, 1
    %p173 = scmp.ne.s32.totalorder %s168, %s170
    %p174 = scmp.eq.s32.totalorder %s29, 0
    %p175 = por %p173, %p174
    %p176 = scmp.ne.s32.totalorder %s168, %s170
    %p177 = scmp.eq.s32.totalorder %s34, 1
    %p178 = por %p176, %p177
    %p179 = scmp.ne.s32.totalorder %s170, %s171
    %p180 = scmp.eq.s32.totalorder %s34, 0
    %p181 = por %p179, %p180
    %p182 = scmp.ne.s32.totalorder %s170, %s171
    %p183 = scmp.eq.s32.totalorder %s35, 1
    %p184 = por %p182, %p183
    %p186 = scmp.ne.s32.totalorder %s171, %s185
    %p187 = scmp.eq.s32.totalorder %s35, 0
    %p188 = por %p186, %p187
    %s190 = sadd.s32 %s189, 1
    %p193 = scmp.eq.s32.totalorder %s29, 1
    %p194 = scmp.ne.s32.totalorder %s189, %s191
    %p195 = scmp.eq.s32.totalorder %s29, 0
    %p196 = por %p194, %p195
    %p197 = scmp.ne.s32.totalorder %s189, %s191
    %p198 = scmp.eq.s32.totalorder %s34, 1
    %p199 = por %p197, %p198
    %p200 = scmp.ne.s32.totalorder %s191, %s192
    %p201 = scmp.eq.s32.totalorder %s34, 0
    %p202 = por %p200, %p201
    %p203 = scmp.ne.s32.totalorder %s191, %s192
    %p204 = scmp.eq.s32.totalorder %s35, 1
    %p205 = por %p203, %p204
    %p207 = scmp.ne.s32.totalorder %s192, %s206
    %p208 = scmp.eq.s32.totalorder %s35, 0
    %p209 = por %p207, %p208
    %s211 = sadd.s32 %s210, 1
    %p214 = scmp.eq.s32.totalorder %s29, 1
    %p215 = scmp.ne.s32.totalorder %s210, %s212
    %p216 = scmp.eq.s32.totalorder %s29, 0
    %p217 = por %p215, %p216
    %p218 = scmp.ne.s32.totalorder %s210, %s212
    %p219 = scmp.eq.s32.totalorder %s34, 1
    %p220 = por %p218, %p219
    %p221 = scmp.ne.s32.totalorder %s212, %s213
    %p222 = scmp.eq.s32.totalorder %s34, 0
    %p223 = por %p221, %p222
    %p224 = scmp.ne.s32.totalorder %s212, %s213
    %p225 = scmp.eq.s32.totalorder %s35, 1
    %p226 = por %p224, %p225
    %p228 = scmp.ne.s32.totalorder %s213, %s227
    %p229 = scmp.eq.s32.totalorder %s35, 0
    %p230 = por %p228, %p229
    %s232 = sadd.s32 %s231, 1
    %p235 = scmp.eq.s32.totalorder %s29, 1
    %p236 = scmp.ne.s32.totalorder %s231, %s233
    %p237 = scmp.eq.s32.totalorder %s29, 0
    %p238 = por %p236, %p237
    %p239 = scmp.ne.s32.totalorder %s231, %s233
    %p240 = scmp.eq.s32.totalorder %s34, 1
    %p241 = por %p239, %p240
    %p242 = scmp.ne.s32.totalorder %s233, %s234
    %p243 = scmp.eq.s32.totalorder %s34, 0
    %p244 = por %p242, %p243
    %p245 = scmp.ne.s32.totalorder %s233, %s234
    %p246 = scmp.eq.s32.totalorder %s35, 1
    %p247 = por %p245, %p246
    %p249 = scmp.ne.s32.totalorder %s234, %s248
    %p250 = scmp.eq.s32.totalorder %s35, 0
    %p251 = por %p249, %p250
    %s253 = sadd.s32 %s252, 1
    %p256 = scmp.eq.s32.totalorder %s29, 1
    %p257 = scmp.ne.s32.totalorder %s252, %s254
    %p258 = scmp.eq.s32.totalorder %s29, 0
    %p259 = por %p257, %p258
    %p260 = scmp.ne.s32.totalorder %s252, %s254
    %p261 = scmp.eq.s32.totalorder %s34, 1
    %p262 = por %p260, %p261
    %p263 = scmp.ne.s32.totalorder %s254, %s255
    %p264 = scmp.eq.s32.totalorder %s34, 0
    %p265 = por %p263, %p264
    %p266 = scmp.ne.s32.totalorder %s254, %s255
    %p267 = scmp.eq.s32.totalorder %s35, 1
    %p268 = por %p266, %p267
    %p270 = scmp.ne.s32.totalorder %s255, %s269
    %p271 = scmp.eq.s32.totalorder %s35, 0
    %p272 = por %p270, %p271
    %s274 = sadd.s32 %s273, 1
    %p277 = scmp.eq.s32.totalorder %s29, 1
    %p278 = scmp.ne.s32.totalorder %s273, %s275
    %p279 = scmp.eq.s32.totalorder %s29, 0
    %p280 = por %p278, %p279
    %p281 = scmp.ne.s32.totalorder %s273, %s275
    %p282 = scmp.eq.s32.totalorder %s34, 1
    %p283 = por %p281, %p282
    %p284 = scmp.ne.s32.totalorder %s275, %s276
    %p285 = scmp.eq.s32.totalorder %s34, 0
    %p286 = por %p284, %p285
    %p287 = scmp.ne.s32.totalorder %s275, %s276
    %p288 = scmp.eq.s32.totalorder %s35, 1
    %p289 = por %p287, %p288
    %p291 = scmp.ne.s32.totalorder %s276, %s290
    %p292 = scmp.eq.s32.totalorder %s35, 0
    %p293 = por %p291, %p292
    %s295 = sadd.s32 %s294, 1
    %p298 = scmp.eq.s32.totalorder %s29, 1
    %p299 = scmp.ne.s32.totalorder %s294, %s296
    %p300 = scmp.eq.s32.totalorder %s29, 0
    %p301 = por %p299, %p300
    %p302 = scmp.ne.s32.totalorder %s294, %s296
    %p303 = scmp.eq.s32.totalorder %s34, 1
    %p304 = por %p302, %p303
    %p305 = scmp.ne.s32.totalorder %s296, %s297
    %p306 = scmp.eq.s32.totalorder %s34, 0
    %p307 = por %p305, %p306
    %p308 = scmp.ne.s32.totalorder %s296, %s297
    %p309 = scmp.eq.s32.totalorder %s35, 1
    %p310 = por %p308, %p309
    %p312 = scmp.ne.s32.totalorder %s297, %s311
    %p313 = scmp.eq.s32.totalorder %s35, 0
    %p314 = por %p312, %p313
    %s316 = sadd.s32 %s315, 1
    %p319 = scmp.eq.s32.totalorder %s29, 1
    %p320 = scmp.ne.s32.totalorder %s315, %s317
    %p321 = scmp.eq.s32.totalorder %s29, 0
    %p322 = por %p320, %p321
    %p323 = scmp.ne.s32.totalorder %s315, %s317
    %p324 = scmp.eq.s32.totalorder %s34, 1
    %p325 = por %p323, %p324
    %p326 = scmp.ne.s32.totalorder %s317, %s318
    %p327 = scmp.eq.s32.totalorder %s34, 0
    %p328 = por %p326, %p327
    %p329 = scmp.ne.s32.totalorder %s317, %s318
    %p330 = scmp.eq.s32.totalorder %s35, 1
    %p331 = por %p329, %p330
    %p333 = scmp.ne.s32.totalorder %s318, %s332
    %p334 = scmp.eq.s32.totalorder %s35, 0
    %p335 = por %p333, %p334
    %s337 = sadd.s32 %s336, 1
    %p340 = scmp.eq.s32.totalorder %s29, 1
    %p341 = scmp.ne.s32.totalorder %s336, %s338
    %p342 = scmp.eq.s32.totalorder %s29, 0
    %p343 = por %p341, %p342
    %p344 = scmp.ne.s32.totalorder %s336, %s338
    %p345 = scmp.eq.s32.totalorder %s34, 1
    %p346 = por %p344, %p345
    %p347 = scmp.ne.s32.totalorder %s338, %s339
    %p348 = scmp.eq.s32.totalorder %s34, 0
    %p349 = por %p347, %p348
    %p350 = scmp.ne.s32.totalorder %s338, %s339
    %p351 = scmp.eq.s32.totalorder %s35, 1
    %p352 = por %p350, %p351
    %p354 = scmp.ne.s32.totalorder %s339, %s353
    %p355 = scmp.eq.s32.totalorder %s35, 0
    %p356 = por %p354, %p355
    %s358 = sadd.s32 %s357, 1
    %p361 = scmp.eq.s32.totalorder %s29, 1
    %p362 = scmp.ne.s32.totalorder %s357, %s359
    %p363 = scmp.eq.s32.totalorder %s29, 0
    %p364 = por %p362, %p363
    %p365 = scmp.ne.s32.totalorder %s357, %s359
    %p366 = scmp.eq.s32.totalorder %s34, 1
    %p367 = por %p365, %p366
    %p368 = scmp.ne.s32.totalorder %s359, %s360
    %p369 = scmp.eq.s32.totalorder %s34, 0
    %p370 = por %p368, %p369
    %p371 = scmp.ne.s32.totalorder %s359, %s360
    %p372 = scmp.eq.s32.totalorder %s35, 1
    %p373 = por %p371, %p372
    %p375 = scmp.ne.s32.totalorder %s360, %s374
    %p376 = scmp.eq.s32.totalorder %s35, 0
    %p377 = por %p375, %p376
    %s379 = sadd.s32 %s378, 1
    %p382 = scmp.eq.s32.totalorder %s29, 1
    %p383 = scmp.ne.s32.totalorder %s378, %s380
    %p384 = scmp.eq.s32.totalorder %s29, 0
    %p385 = por %p383, %p384
    %p386 = scmp.ne.s32.totalorder %s378, %s380
    %p387 = scmp.eq.s32.totalorder %s34, 1
    %p388 = por %p386, %p387
    %p389 = scmp.ne.s32.totalorder %s380, %s381
    %p390 = scmp.eq.s32.totalorder %s34, 0
    %p391 = por %p389, %p390
    %p392 = scmp.ne.s32.totalorder %s380, %s381
    %p393 = scmp.eq.s32.totalorder %s35, 1
    %p394 = por %p392, %p393
    %p396 = scmp.ne.s32.totalorder %s381, %s395
    %p397 = scmp.eq.s32.totalorder %s35, 0
    %p398 = por %p396, %p397
    %s400 = sadd.s32 %s399, 1
    %p403 = scmp.eq.s32.totalorder %s29, 1
    %p404 = scmp.ne.s32.totalorder %s399, %s401
    %p405 = scmp.eq.s32.totalorder %s29, 0
    %p406 = por %p404, %p405
    %p407 = scmp.ne.s32.totalorder %s399, %s401
    %p408 = scmp.eq.s32.totalorder %s34, 1
    %p409 = por %p407, %p408
    %p410 = scmp.ne.s32.totalorder %s401, %s402
    %p411 = scmp.eq.s32.totalorder %s34, 0
    %p412 = por %p410, %p411
    %p413 = scmp.ne.s32.totalorder %s401, %s402
    %p414 = scmp.eq.s32.totalorder %s35, 1
    %p415 = por %p413, %p414
    %p417 = scmp.ne.s32.totalorder %s402, %s416
    %p418 = scmp.eq.s32.totalorder %s35, 0
    %p419 = por %p417, %p418
    %s421 = sadd.s32 %s420, 1
    %p424 = scmp.eq.s32.totalorder %s29, 1
    %p425 = scmp.ne.s32.totalorder %s420, %s422
    %p426 = scmp.eq.s32.totalorder %s29, 0
    %p427 = por %p425, %p426
    %p428 = scmp.ne.s32.totalorder %s420, %s422
    %p429 = scmp.eq.s32.totalorder %s34, 1
    %p430 = por %p428, %p429
    %p431 = scmp.ne.s32.totalorder %s422, %s423
    %p432 = scmp.eq.s32.totalorder %s34, 0
    %p433 = por %p431, %p432
    %p434 = scmp.ne.s32.totalorder %s422, %s423
    %p435 = scmp.eq.s32.totalorder %s35, 1
    %p436 = por %p434, %p435
    %p438 = scmp.ne.s32.totalorder %s423, %s437
    %p439 = scmp.eq.s32.totalorder %s35, 0
    %p440 = por %p438, %p439
    %s442 = sadd.s32 %s441, 1
    %p445 = scmp.eq.s32.totalorder %s29, 1
    %p446 = scmp.ne.s32.totalorder %s441, %s443
    %p447 = scmp.eq.s32.totalorder %s29, 0
    %p448 = por %p446, %p447
    %p449 = scmp.ne.s32.totalorder %s441, %s443
    %p450 = scmp.eq.s32.totalorder %s34, 1
    %p451 = por %p449, %p450
    %p452 = scmp.ne.s32.totalorder %s443, %s444
    %p453 = scmp.eq.s32.totalorder %s34, 0
    %p454 = por %p452, %p453
    %p455 = scmp.ne.s32.totalorder %s443, %s444
    %p456 = scmp.eq.s32.totalorder %s35, 1
    %p457 = por %p455, %p456
    %p459 = scmp.ne.s32.totalorder %s444, %s458
    %p460 = scmp.eq.s32.totalorder %s35, 0
    %p461 = por %p459, %p460
    %s463 = sadd.s32 %s462, 1
    %p466 = scmp.eq.s32.totalorder %s29, 1
    %p467 = scmp.ne.s32.totalorder %s462, %s464
    %p468 = scmp.eq.s32.totalorder %s29, 0
    %p469 = por %p467, %p468
    %p470 = scmp.ne.s32.totalorder %s462, %s464
    %p471 = scmp.eq.s32.totalorder %s34, 1
    %p472 = por %p470, %p471
    %p473 = scmp.ne.s32.totalorder %s464, %s465
    %p474 = scmp.eq.s32.totalorder %s34, 0
    %p475 = por %p473, %p474
    %p476 = scmp.ne.s32.totalorder %s464, %s465
    %p477 = scmp.eq.s32.totalorder %s35, 1
    %p478 = por %p476, %p477
    %p480 = scmp.ne.s32.totalorder %s465, %s479
    %p481 = scmp.eq.s32.totalorder %s35, 0
    %p482 = por %p480, %p481
    %s484 = sadd.s32 %s483, 1
    %p487 = scmp.eq.s32.totalorder %s29, 1
    %p488 = scmp.ne.s32.totalorder %s483, %s485
    %p489 = scmp.eq.s32.totalorder %s29, 0
    %p490 = por %p488, %p489
    %p491 = scmp.ne.s32.totalorder %s483, %s485
    %p492 = scmp.eq.s32.totalorder %s34, 1
    %p493 = por %p491, %p492
    %p494 = scmp.ne.s32.totalorder %s485, %s486
    %p495 = scmp.eq.s32.totalorder %s34, 0
    %p496 = por %p494, %p495
    %p497 = scmp.ne.s32.totalorder %s485, %s486
    %p498 = scmp.eq.s32.totalorder %s35, 1
    %p499 = por %p497, %p498
    %p501 = scmp.ne.s32.totalorder %s486, %s500
    %p502 = scmp.eq.s32.totalorder %s35, 0
    %p503 = por %p501, %p502
    %s505 = sadd.s32 %s504, 1
    %p508 = scmp.eq.s32.totalorder %s29, 1
    %p509 = scmp.ne.s32.totalorder %s504, %s506
    %p510 = scmp.eq.s32.totalorder %s29, 0
    %p511 = por %p509, %p510
    %p512 = scmp.ne.s32.totalorder %s504, %s506
    %p513 = scmp.eq.s32.totalorder %s34, 1
    %p514 = por %p512, %p513
    %p515 = scmp.ne.s32.totalorder %s506, %s507
    %p516 = scmp.eq.s32.totalorder %s34, 0
    %p517 = por %p515, %p516
    %p518 = scmp.ne.s32.totalorder %s506, %s507
    %p519 = scmp.eq.s32.totalorder %s35, 1
    %p520 = por %p518, %p519
    %p522 = scmp.ne.s32.totalorder %s507, %s521
    %p523 = scmp.eq.s32.totalorder %s35, 0
    %p524 = por %p522, %p523
    %s525 = ssub.s32 %s29, %s36
    %p526 = scmp.eq.s32.totalorder %s525, 0
    %s528 = sadd.s32 %s527, 1
    %s529 = scalar_select %p526, %s527, %s528
    %p532 = pneg %p526
    %p533 = scmp.eq.s32.totalorder %s29, 1
    %p534 = por %p532, %p533
    %p535 = scmp.ne.s32.totalorder %s527, %s530
    %p536 = scmp.eq.s32.totalorder %s29, 0
    %p537 = por %p535, %p536
    %p538 = scmp.ne.s32.totalorder %s527, %s530
    %p539 = scmp.eq.s32.totalorder %s34, 1
    %p540 = por %p538, %p539
    %p541 = scmp.ne.s32.totalorder %s530, %s531
    %p542 = scmp.eq.s32.totalorder %s34, 0
    %p543 = por %p541, %p542
    %p544 = scmp.ne.s32.totalorder %s530, %s531
    %p545 = scmp.eq.s32.totalorder %s35, 1
    %p546 = por %p544, %p545
    %p548 = scmp.ne.s32.totalorder %s531, %s547
    %p549 = scmp.eq.s32.totalorder %s35, 0
    %p550 = por %p548, %p549
    %p551 = scmp.le.s32.totalorder 1, %s29
    %p552 = scmp.lt.s32.totalorder %s29, 3
    %p553 = pnand %p551, %p552
    %p554 = pneg %p553
    // Predicated region
    $region9: #{bert_forward.1} parent=5 // pred_check
      _
    $region10: #{bert_forward.1} parent=5 // pred_check_branch
      %556 = sbr.rel (%p553) target = $region12
    $region11: #{bert_forward.1} parent=5 // pred_region
      %s557 = ssub.s32 %s29, 1
      // Predicated region
      $region13: #{bert_forward.1} parent=11 // pred_check
        %p558 = pneg %p76
      $region14: #{bert_forward.1} parent=11 // pred_check_branch
        %560 = sbr.rel (%p558) target = $region16
      $region15: #{bert_forward.1} parent=11 // pred_region
        _
      $region16: #{bert_forward.1} parent=11 // pred_fallthru
        _
      // Predicated region
      $region17: #{bert_forward.1} parent=11 // pred_check
        %p561 = pneg %p97
      $region18: #{bert_forward.1} parent=11 // pred_check_branch
        %563 = sbr.rel (%p561) target = $region20
      $region19: #{bert_forward.1} parent=11 // pred_region
        _
      $region20: #{bert_forward.1} parent=11 // pred_fallthru
        _
      // Predicated region
      $region21: #{bert_forward.1} parent=11 // pred_check
        %p564 = pneg %p118
      $region22: #{bert_forward.1} parent=11 // pred_check_branch
        %566 = sbr.rel (%p564) target = $region24
      $region23: #{bert_forward.1} parent=11 // pred_region
        _
      $region24: #{bert_forward.1} parent=11 // pred_fallthru
        _
      // Predicated region
      $region25: #{bert_forward.1} parent=11 // pred_check
        %p567 = pneg %p139
      $region26: #{bert_forward.1} parent=11 // pred_check_branch
        %569 = sbr.rel (%p567) target = $region28
      $region27: #{bert_forward.1} parent=11 // pred_region
        _
      $region28: #{bert_forward.1} parent=11 // pred_fallthru
        _
      // Predicated region
      $region29: #{bert_forward.1} parent=11 // pred_check
        %p570 = pneg %p160
      $region30: #{bert_forward.1} parent=11 // pred_check_branch
        %572 = sbr.rel (%p570) target = $region32
      $region31: #{bert_forward.1} parent=11 // pred_region
        _
      $region32: #{bert_forward.1} parent=11 // pred_fallthru
        _
      // Predicated region
      $region33: #{bert_forward.1} parent=11 // pred_check
        %p573 = pneg %p181
      $region34: #{bert_forward.1} parent=11 // pred_check_branch
        %575 = sbr.rel (%p573) target = $region36
      $region35: #{bert_forward.1} parent=11 // pred_region
        _
      $region36: #{bert_forward.1} parent=11 // pred_fallthru
        _
      // Predicated region
      $region37: #{bert_forward.1} parent=11 // pred_check
        %p576 = pneg %p202
      $region38: #{bert_forward.1} parent=11 // pred_check_branch
        %578 = sbr.rel (%p576) target = $region40
      $region39: #{bert_forward.1} parent=11 // pred_region
        _
      $region40: #{bert_forward.1} parent=11 // pred_fallthru
        _
      // Predicated region
      $region41: #{bert_forward.1} parent=11 // pred_check
        %p579 = pneg %p223
      $region42: #{bert_forward.1} parent=11 // pred_check_branch
        %581 = sbr.rel (%p579) target = $region44
      $region43: #{bert_forward.1} parent=11 // pred_region
        _
      $region44: #{bert_forward.1} parent=11 // pred_fallthru
        _
      // Predicated region
      $region45: #{bert_forward.1} parent=11 // pred_check
        %p582 = pneg %p244
      $region46: #{bert_forward.1} parent=11 // pred_check_branch
        %584 = sbr.rel (%p582) target = $region48
      $region47: #{bert_forward.1} parent=11 // pred_region
        _
      $region48: #{bert_forward.1} parent=11 // pred_fallthru
        _
      // Predicated region
      $region49: #{bert_forward.1} parent=11 // pred_check
        %p585 = pneg %p265
      $region50: #{bert_forward.1} parent=11 // pred_check_branch
        %587 = sbr.rel (%p585) target = $region52
      $region51: #{bert_forward.1} parent=11 // pred_region
        _
      $region52: #{bert_forward.1} parent=11 // pred_fallthru
        _
      // Predicated region
      $region53: #{bert_forward.1} parent=11 // pred_check
        %p588 = pneg %p286
      $region54: #{bert_forward.1} parent=11 // pred_check_branch
        %590 = sbr.rel (%p588) target = $region56
      $region55: #{bert_forward.1} parent=11 // pred_region
        _
      $region56: #{bert_forward.1} parent=11 // pred_fallthru
        _
      // Predicated region
      $region57: #{bert_forward.1} parent=11 // pred_check
        %p591 = pneg %p307
      $region58: #{bert_forward.1} parent=11 // pred_check_branch
        %593 = sbr.rel (%p591) target = $region60
      $region59: #{bert_forward.1} parent=11 // pred_region
        _
      $region60: #{bert_forward.1} parent=11 // pred_fallthru
        _
      // Predicated region
      $region61: #{bert_forward.1} parent=11 // pred_check
        %p594 = pneg %p328
      $region62: #{bert_forward.1} parent=11 // pred_check_branch
        %596 = sbr.rel (%p594) target = $region64
      $region63: #{bert_forward.1} parent=11 // pred_region
        _
      $region64: #{bert_forward.1} parent=11 // pred_fallthru
        _
      // Predicated region
      $region65: #{bert_forward.1} parent=11 // pred_check
        %p597 = pneg %p349
      $region66: #{bert_forward.1} parent=11 // pred_check_branch
        %599 = sbr.rel (%p597) target = $region68
      $region67: #{bert_forward.1} parent=11 // pred_region
        _
      $region68: #{bert_forward.1} parent=11 // pred_fallthru
        _
      // Predicated region
      $region69: #{bert_forward.1} parent=11 // pred_check
        %p600 = pneg %p370
      $region70: #{bert_forward.1} parent=11 // pred_check_branch
        %602 = sbr.rel (%p600) target = $region72
      $region71: #{bert_forward.1} parent=11 // pred_region
        _
      $region72: #{bert_forward.1} parent=11 // pred_fallthru
        _
      // Predicated region
      $region73: #{bert_forward.1} parent=11 // pred_check
        %p603 = pneg %p391
      $region74: #{bert_forward.1} parent=11 // pred_check_branch
        %605 = sbr.rel (%p603) target = $region76
      $region75: #{bert_forward.1} parent=11 // pred_region
        _
      $region76: #{bert_forward.1} parent=11 // pred_fallthru
        _
      // Predicated region
      $region77: #{bert_forward.1} parent=11 // pred_check
        %p606 = pneg %p412
      $region78: #{bert_forward.1} parent=11 // pred_check_branch
        %608 = sbr.rel (%p606) target = $region80
      $region79: #{bert_forward.1} parent=11 // pred_region
        _
      $region80: #{bert_forward.1} parent=11 // pred_fallthru
        _
      // Predicated region
      $region81: #{bert_forward.1} parent=11 // pred_check
        %p609 = pneg %p433
      $region82: #{bert_forward.1} parent=11 // pred_check_branch
        %611 = sbr.rel (%p609) target = $region84
      $region83: #{bert_forward.1} parent=11 // pred_region
        _
      $region84: #{bert_forward.1} parent=11 // pred_fallthru
        _
      // Predicated region
      $region85: #{bert_forward.1} parent=11 // pred_check
        %p612 = pneg %p454
      $region86: #{bert_forward.1} parent=11 // pred_check_branch
        %614 = sbr.rel (%p612) target = $region88
      $region87: #{bert_forward.1} parent=11 // pred_region
        _
      $region88: #{bert_forward.1} parent=11 // pred_fallthru
        _
      // Predicated region
      $region89: #{bert_forward.1} parent=11 // pred_check
        %p615 = pneg %p475
      $region90: #{bert_forward.1} parent=11 // pred_check_branch
        %617 = sbr.rel (%p615) target = $region92
      $region91: #{bert_forward.1} parent=11 // pred_region
        _
      $region92: #{bert_forward.1} parent=11 // pred_fallthru
        _
      // Predicated region
      $region93: #{bert_forward.1} parent=11 // pred_check
        %p618 = pneg %p496
      $region94: #{bert_forward.1} parent=11 // pred_check_branch
        %620 = sbr.rel (%p618) target = $region96
      $region95: #{bert_forward.1} parent=11 // pred_region
        _
      $region96: #{bert_forward.1} parent=11 // pred_fallthru
        _
      // Predicated region
      $region97: #{bert_forward.1} parent=11 // pred_check
        %p621 = pneg %p517
      $region98: #{bert_forward.1} parent=11 // pred_check_branch
        %623 = sbr.rel (%p621) target = $region100
      $region99: #{bert_forward.1} parent=11 // pred_region
        _
      $region100: #{bert_forward.1} parent=11 // pred_fallthru
        _
    $region12: #{bert_forward.1} parent=5 // pred_fallthru
      _
    %p624 = scmp.lt.s32.totalorder %s29, 2
    // Predicated region
    $region101: #{bert_forward.1} parent=5 // pred_check
      %p625 = pneg %p624
    $region102: #{bert_forward.1} parent=5 // pred_check_branch
      %627 = sbr.rel (%p625) target = $region104
    $region103: #{bert_forward.1} parent=5 // pred_region
      // Predicated region
      $region105: #{bert_forward.1} parent=103 // pred_check
        %p628 = pneg %p49
      $region106: #{bert_forward.1} parent=103 // pred_check_branch
        %630 = sbr.rel (%p628) target = $region108
      $region107: #{bert_forward.1} parent=103 // pred_region
        %p631 = scmp.lt.s32.totalorder %s29, 1
        %s632 = scalar_select %p631, %s29, 1
        %s633 = smul.addr %s632, 8
        %s634 = scalar_lea.vmem %s0, %s633
      $region108: #{bert_forward.1} parent=103 // pred_fallthru
        _
    $region104: #{bert_forward.1} parent=5 // pred_fallthru
      _
    %p635 = scmp.le.s32.totalorder 1, %s29
    %p636 = scmp.lt.s32.totalorder %s29, 3
    %p637 = pnand %p635, %p636
    %p638 = pneg %p637
    // Predicated region
    $region109: #{bert_forward.1} parent=5 // pred_check
      _
    $region110: #{bert_forward.1} parent=5 // pred_check_branch
      %640 = sbr.rel (%p637) target = $region112
    $region111: #{bert_forward.1} parent=5 // pred_region
      %s641 = ssub.s32 %s29, 1
      %p642 = scmp.lt.s32.totalorder %s34, 1
      %s643 = scalar_select %p642, %s34, 1
      %s644 = smul.addr %s643, 8
      %s645 = scalar_lea.vmem %s0, %s644
      %p646 = pneg %p55
      %p647 = pneg %p52
      %p648 = pneg %p76
      %p649 = pneg %p73
      %p650 = pneg %p97
      %p651 = pneg %p94
      %p652 = pneg %p118
      %p653 = pneg %p115
      %p654 = pneg %p139
      %p655 = pneg %p136
      %p656 = pneg %p160
      %p657 = pneg %p157
      %p658 = pneg %p181
      %p659 = pneg %p178
      %p660 = pneg %p202
      %p661 = pneg %p199
      %p662 = pneg %p223
      %p663 = pneg %p220
      %p664 = pneg %p244
      %p665 = pneg %p241
      %p666 = pneg %p265
      %p667 = pneg %p262
      %p668 = pneg %p286
      %p669 = pneg %p283
      %p670 = pneg %p307
      %p671 = pneg %p304
      %p672 = pneg %p328
      %p673 = pneg %p325
      %p674 = pneg %p349
      %p675 = pneg %p346
      %p676 = pneg %p370
      %p677 = pneg %p367
      %p678 = pneg %p391
      %p679 = pneg %p388
      %p680 = pneg %p412
      %p681 = pneg %p409
      %p682 = pneg %p433
      %p683 = pneg %p430
      %p684 = pneg %p454
      %p685 = pneg %p451
      %p686 = pneg %p475
      %p687 = pneg %p472
      %p688 = pneg %p496
      %p689 = pneg %p493
      %p690 = pneg %p517
      %p691 = pneg %p514
      %p692 = pneg %p543
      %p693 = pneg %p540
      %p694 = scmp.lt.s32.totalorder %s34, 1
      %s695 = scalar_select %p694, %s34, 1
      %s696 = smul.addr %s695, 8
      %s697 = scalar_lea.vmem %s23, %s696
      %p698 = scmp.lt.s32.totalorder %s34, 1
      %s699 = scalar_select %p698, %s34, 1
      %s700 = smul.addr %s699, 8
      %s701 = scalar_lea.vmem %s0, %s700
      %p702 = scmp.lt.s32.totalorder %s34, 1
      %s703 = scalar_select %p702, %s34, 1
      %s704 = smul.addr %s703, 8
      %s705 = scalar_lea.vmem %s23, %s704
      %v707 = vld [vmem:[%s701] sm:$0xff]
      %v708 = vld [vmem:[%s1] sm:$0x3f]
      %v709 = vpack.c.bf16 %v707, %v707
      %v710 = vpack.c.bf16 %v708, %v708
      %v711 = vld [vmem:[%s2] sm:$0x1]
      %v713 = vlaneseq
      %v714 = vshrl.u32 %v713, 7
      %v715 = vsub.s32 0, %v714
      %v716 = vrot.slane %v711, %v715
      %vm718 = vcmask 48128
      %v720 = vsel %vm718, %v709, 0
      %vm722 = vcmask 1042432
      %v724 = vsel %vm722, %v710, 0
      %726 = vmatprep.subr.bf16.mxu0 0
      %727 = vmatpush1.bf16.msra.mxu0 %v724
      %728 = vmatprep.subr.bf16.mxu0 0
      %729 = vmatpush1.bf16.msra.mxu0 0
      %730 = vmatprep.subr.bf16.mxu0 0
      %731 = vmatpush1.bf16.msra.mxu0 0
      %732 = vmatprep.subr.bf16.mxu0 0
      %733 = vmatpush1.bf16.msra.mxu0 0
      %734 = vmatprep.subr.bf16.mxu0 0
      %735 = vmatpush1.bf16.msra.mxu0 0
      %736 = vmatprep.subr.bf16.mxu0 0
      %737 = vmatpush1.bf16.msra.mxu0 0
      %738 = vmatprep.subr.bf16.mxu0 0
      %739 = vmatpush1.bf16.msra.mxu0 0
      %740 = vmatprep.subr.bf16.mxu0 0
      %741 = vmatpush1.bf16.msra.mxu0 0
      %742 = vmatprep.subr.bf16.mxu0 0
      %743 = vmatpush1.bf16.msra.mxu0 0
      %744 = vmatprep.subr.bf16.mxu0 0
      %745 = vmatpush1.bf16.msra.mxu0 0
      %746 = vmatprep.subr.bf16.mxu0 0
      %747 = vmatpush1.bf16.msra.mxu0 0
      %748 = vmatprep.subr.bf16.mxu0 0
      %749 = vmatpush1.bf16.msra.mxu0 0
      %750 = vmatprep.subr.bf16.mxu0 0
      %751 = vmatpush1.bf16.msra.mxu0 0
      %752 = vmatprep.subr.bf16.mxu0 0
      %753 = vmatpush1.bf16.msra.mxu0 0
      %754 = vmatprep.subr.bf16.mxu0 0
      %755 = vmatpush1.bf16.msra.mxu0 0
      %756 = vmatprep.subr.bf16.mxu0 0
      %757 = vmatpush1.bf16.msra.mxu0 0
      %758 = vmatprep.mubr.bf16.mxu0 0
      %759 = vmatmul.mubr.bf16.gmra.mrb[0].mxu0 %v720
      %v760 = vpop.f32.mrb[0].mxu0
      %v761 = vadd.f32 %v716, %v760
      %v762 = vpop.f32.mrb[0].mxu0
      %v763 = vpop.f32.mrb[0].mxu0
      %v764 = vpop.f32.mrb[0].mxu0
      %765 = vdwg.mxu0
      %v766 = vpack.c.bf16 %v761, %v761
      %v767 = vld [vmem:[%s3] sm:$0xff]
      %v768 = vld [vmem:[%s3 + $0x8] sm:$0xff]
      %v769 = vld [vmem:[%s3 + $0x10] sm:$0xff]
      %v770 = vld [vmem:[%s3 + $0x18] sm:$0xff]
      %v771 = vpack.c.bf16 %v768, %v767
      %v772 = vpack.c.bf16 %v770, %v769
      %v773 = vld [vmem:[%s4] sm:$0x1]
      %v775 = vlaneseq
      %v776 = vshrl.u32 %v775, 7
      %v777 = vsub.s32 0, %v776
      %v778 = vrot.slane %v773, %v777
      %vm780 = vcmask 261120
      %v782 = vsel %vm780, %v766, 0
      %784 = vmatprep.subr.bf16.mxu0 0
      %785 = vmatpush1.bf16.msra.mxu0 %v771
      %786 = vmatprep.subr.bf16.mxu0 0
      %787 = vmatpush1.bf16.msra.mxu0 %v772
      %788 = vmatprep.subr.bf16.mxu0 0
      %789 = vmatpush1.bf16.msra.mxu0 0
      %790 = vmatprep.subr.bf16.mxu0 0
      %791 = vmatpush1.bf16.msra.mxu0 0
      %792 = vmatprep.subr.bf16.mxu0 0
      %793 = vmatpush1.bf16.msra.mxu0 0
      %794 = vmatprep.subr.bf16.mxu0 0
      %795 = vmatpush1.bf16.msra.mxu0 0
      %796 = vmatprep.subr.bf16.mxu0 0
      %797 = vmatpush1.bf16.msra.mxu0 0
      %798 = vmatprep.subr.bf16.mxu0 0
      %799 = vmatpush1.bf16.msra.mxu0 0
      %800 = vmatprep.subr.bf16.mxu0 0
      %801 = vmatpush1.bf16.msra.mxu0 0
      %802 = vmatprep.subr.bf16.mxu0 0
      %803 = vmatpush1.bf16.msra.mxu0 0
      %804 = vmatprep.subr.bf16.mxu0 0
      %805 = vmatpush1.bf16.msra.mxu0 0
      %806 = vmatprep.subr.bf16.mxu0 0
      %807 = vmatpush1.bf16.msra.mxu0 0
      %808 = vmatprep.subr.bf16.mxu0 0
      %809 = vmatpush1.bf16.msra.mxu0 0
      %810 = vmatprep.subr.bf16.mxu0 0
      %811 = vmatpush1.bf16.msra.mxu0 0
      %812 = vmatprep.subr.bf16.mxu0 0
      %813 = vmatpush1.bf16.msra.mxu0 0
      %814 = vmatprep.subr.bf16.mxu0 0
      %815 = vmatpush1.bf16.msra.mxu0 0
      %816 = vmatprep.mubr.bf16.mxu0 0
      %817 = vmatmul.mubr.bf16.gmra.mrb[0].mxu0 %v782
      %v818 = vpop.f32.mrb[0].mxu0
      %v819 = vadd.f32 %v778, %v818
      %v820 = vpop.f32.mrb[0].mxu0
      %v821 = vpop.f32.mrb[0].mxu0
      %v822 = vpop.f32.mrb[0].mxu0
      %823 = vdwg.mxu0
      %v824 = vmul.f32 %v819, 0.35355338
      %v825 = vld [vmem:[%s5] sm:$0xff]
      %v826 = vld [vmem:[%s5 + $0x8] sm:$0xff]
      %v827 = vld [vmem:[%s5 + $0x10] sm:$0xff]
      %v828 = vld [vmem:[%s5 + $0x18] sm:$0xff]
      %v829 = vpack.c.bf16 %v826, %v825
      %v830 = vpack.c.bf16 %v828, %v827
      %v831 = vld [vmem:[%s6] sm:$0x1]
      %v833 = vlaneseq
      %v834 = vshrl.u32 %v833, 7
      %v835 = vsub.s32 0, %v834
      %v836 = vrot.slane %v831, %v835
      %838 = vmatprep.subr.bf16.mxu0 0
      %839 = vmatpush1.bf16.msra.mxu0 %v829
      %840 = vmatprep.subr.bf16.mxu0 0
      %841 = vmatpush1.bf16.msra.mxu0 %v830
      %842 = vmatprep.subr.bf16.mxu0 0
      %843 = vmatpush1.bf16.msra.mxu0 0
      %844 = vmatprep.subr.bf16.mxu0 0
      %845 = vmatpush1.bf16.msra.mxu0 0
      %846 = vmatprep.subr.bf16.mxu0 0
      %847 = vmatpush1.bf16.msra.mxu0 0
      %848 = vmatprep.subr.bf16.mxu0 0
      %849 = vmatpush1.bf16.msra.mxu0 0
      %850 = vmatprep.subr.bf16.mxu0 0
      %851 = vmatpush1.bf16.msra.mxu0 0
      %852 = vmatprep.subr.bf16.mxu0 0
      %853 = vmatpush1.bf16.msra.mxu0 0
      %854 = vmatprep.subr.bf16.mxu0 0
      %855 = vmatpush1.bf16.msra.mxu0 0
      %856 = vmatprep.subr.bf16.mxu0 0
      %857 = vmatpush1.bf16.msra.mxu0 0
      %858 = vmatprep.subr.bf16.mxu0 0
      %859 = vmatpush1.bf16.msra.mxu0 0
      %860 = vmatprep.subr.bf16.mxu0 0
      %861 = vmatpush1.bf16.msra.mxu0 0
      %862 = vmatprep.subr.bf16.mxu0 0
      %863 = vmatpush1.bf16.msra.mxu0 0
      %864 = vmatprep.subr.bf16.mxu0 0
      %865 = vmatpush1.bf16.msra.mxu0 0
      %866 = vmatprep.subr.bf16.mxu0 0
      %867 = vmatpush1.bf16.msra.mxu0 0
      %868 = vmatprep.subr.bf16.mxu0 0
      %869 = vmatpush1.bf16.msra.mxu0 0
      %870 = vmatprep.mubr.bf16.mxu0 0
      %871 = vmatmul.mubr.bf16.gmra.mrb[0].mxu0 %v782
      %v872 = vpop.f32.mrb[0].mxu0
      %v873 = vadd.f32 %v836, %v872
      %v874 = vpop.f32.mrb[0].mxu0
      %v875 = vpop.f32.mrb[0].mxu0
      %v876 = vpop.f32.mrb[0].mxu0
      %877 = vdwg.mxu0
      %v878 = vld [vmem:[%s7] sm:$0xff]
      %v879 = vld [vmem:[%s7 + $0x8] sm:$0xff]
      %v880 = vld [vmem:[%s7 + $0x10] sm:$0xff]
      %v881 = vld [vmem:[%s7 + $0x18] sm:$0xff]
      %v882 = vpack.c.bf16 %v879, %v878
      %v883 = vpack.c.bf16 %v881, %v880
      %v884 = vld [vmem:[%s8] sm:$0x1]
      %v886 = vlaneseq
      %v887 = vshrl.u32 %v886, 7
      %v888 = vsub.s32 0, %v887
      %v889 = vrot.slane %v884, %v888
      %891 = vmatprep.subr.bf16.mxu0 0
      %892 = vmatpush1.bf16.msra.mxu0 %v882
      %893 = vmatprep.subr.bf16.mxu0 0
      %894 = vmatpush1.bf16.msra.mxu0 %v883
      %895 = vmatprep.subr.bf16.mxu0 0
      %896 = vmatpush1.bf16.msra.mxu0 0
      %897 = vmatprep.subr.bf16.mxu0 0
      %898 = vmatpush1.bf16.msra.mxu0 0
      %899 = vmatprep.subr.bf16.mxu0 0
      %900 = vmatpush1.bf16.msra.mxu0 0
      %901 = vmatprep.subr.bf16.mxu0 0
      %902 = vmatpush1.bf16.msra.mxu0 0
      %903 = vmatprep.subr.bf16.mxu0 0
      %904 = vmatpush1.bf16.msra.mxu0 0
      %905 = vmatprep.subr.bf16.mxu0 0
      %906 = vmatpush1.bf16.msra.mxu0 0
      %907 = vmatprep.subr.bf16.mxu0 0
      %908 = vmatpush1.bf16.msra.mxu0 0
      %909 = vmatprep.subr.bf16.mxu0 0
      %910 = vmatpush1.bf16.msra.mxu0 0
      %911 = vmatprep.subr.bf16.mxu0 0
      %912 = vmatpush1.bf16.msra.mxu0 0
      %913 = vmatprep.subr.bf16.mxu0 0
      %914 = vmatpush1.bf16.msra.mxu0 0
      %915 = vmatprep.subr.bf16.mxu0 0
      %916 = vmatpush1.bf16.msra.mxu0 0
      %917 = vmatprep.subr.bf16.mxu0 0
      %918 = vmatpush1.bf16.msra.mxu0 0
      %919 = vmatprep.subr.bf16.mxu0 0
      %920 = vmatpush1.bf16.msra.mxu0 0
      %921 = vmatprep.subr.bf16.mxu0 0
      %922 = vmatpush1.bf16.msra.mxu0 0
      %923 = vmatprep.mubr.bf16.mxu0 0
      %924 = vmatmul.mubr.bf16.gmra.mrb[0].mxu0 %v782
      %v925 = vpop.f32.mrb[0].mxu0
      %v926 = vadd.f32 %v889, %v925
      %v927 = vpop.f32.mrb[0].mxu0
      %v928 = vpop.f32.mrb[0].mxu0
      %v929 = vpop.f32.mrb[0].mxu0
      %930 = vdwg.mxu0
      %931 = vxpose.xlu0.b32.start [1/16] %v873, 128
      %932 = vxpose.xlu0.b32.cont [2/16] 0.0, 128
      %933 = vxpose.xlu0.b32.cont [3/16] 0.0, 128
      %934 = vxpose.xlu0.b32.cont [4/16] 0.0, 128
      %935 = vxpose.xlu0.b32.cont [5/16] 0.0, 128
      %936 = vxpose.xlu0.b32.cont [6/16] 0.0, 128
      %937 = vxpose.xlu0.b32.cont [7/16] 0.0, 128
      %938 = vxpose.xlu0.b32.cont [8/16] 0.0, 128
      %939 = vxpose.xlu0.b32.cont [9/16] 0.0, 128
      %940 = vxpose.xlu0.b32.cont [10/16] 0.0, 128
      %941 = vxpose.xlu0.b32.cont [11/16] 0.0, 128
      %942 = vxpose.xlu0.b32.cont [12/16] 0.0, 128
      %943 = vxpose.xlu0.b32.cont [13/16] 0.0, 128
      %944 = vxpose.xlu0.b32.cont [14/16] 0.0, 128
      %945 = vxpose.xlu0.b32.cont [15/16] 0.0, 128
      %946 = vxpose.xlu0.b32.end [16/16] 0.0, 128
      %v947 = vpop.trf.xlu0
      %v948 = vpop.trf.xlu0
      %v949 = vpop.trf.xlu0
      %v950 = vpop.trf.xlu0
      %v951 = vpop.trf.xlu0
      %v952 = vpop.trf.xlu0
      %v953 = vpop.trf.xlu0
      %v954 = vpop.trf.xlu0
      %v955 = vpop.trf.xlu0
      %v956 = vpop.trf.xlu0
      %v957 = vpop.trf.xlu0
      %v958 = vpop.trf.xlu0
      %v959 = vpop.trf.xlu0
      %v960 = vpop.trf.xlu0
      %v961 = vpop.trf.xlu0
      %v962 = vpop.trf.xlu0
      %v963 = vpack.c.bf16 %v824, %v824
      %v964 = vpack.c.bf16 %v947, %v947
      %vm965 = vcmask 64512
      %v967 = vsel %vm965, %v963, 0
      %vm969 = vcmask 1043456
      %v971 = vsel %vm969, %v964, 0
      %973 = vmatprep.subr.bf16.mxu0 0
      %974 = vmatpush1.bf16.msra.mxu0 %v971
      %975 = vmatprep.subr.bf16.mxu0 0
      %976 = vmatpush1.bf16.msra.mxu0 0
      %977 = vmatprep.subr.bf16.mxu0 0
      %978 = vmatpush1.bf16.msra.mxu0 0
      %979 = vmatprep.subr.bf16.mxu0 0
      %980 = vmatpush1.bf16.msra.mxu0 0
      %981 = vmatprep.subr.bf16.mxu0 0
      %982 = vmatpush1.bf16.msra.mxu0 0
      %983 = vmatprep.subr.bf16.mxu0 0
      %984 = vmatpush1.bf16.msra.mxu0 0
      %985 = vmatprep.subr.bf16.mxu0 0
      %986 = vmatpush1.bf16.msra.mxu0 0
      %987 = vmatprep.subr.bf16.mxu0 0
      %988 = vmatpush1.bf16.msra.mxu0 0
      %989 = vmatprep.subr.bf16.mxu0 0
      %990 = vmatpush1.bf16.msra.mxu0 0
      %991 = vmatprep.subr.bf16.mxu0 0
      %992 = vmatpush1.bf16.msra.mxu0 0
      %993 = vmatprep.subr.bf16.mxu0 0
      %994 = vmatpush1.bf16.msra.mxu0 0
      %995 = vmatprep.subr.bf16.mxu0 0
      %996 = vmatpush1.bf16.msra.mxu0 0
      %997 = vmatprep.subr.bf16.mxu0 0
      %998 = vmatpush1.bf16.msra.mxu0 0
      %999 = vmatprep.subr.bf16.mxu0 0
      %1000 = vmatpush1.bf16.msra.mxu0 0
      %1001 = vmatprep.subr.bf16.mxu0 0
      %1002 = vmatpush1.bf16.msra.mxu0 0
      %1003 = vmatprep.subr.bf16.mxu0 0
      %1004 = vmatpush1.bf16.msra.mxu0 0
      %1005 = vmatprep.mubr.bf16.mxu0 0
      %1006 = vmatmul.mubr.bf16.gmra.mrb[0].mxu0 %v967
      %v1007 = vpop.f32.mrb[0].mxu0
      %v1008 = vadd.f32 0.0, %v1007
      %v1009 = vpop.f32.mrb[0].mxu0
      %v1010 = vpop.f32.mrb[0].mxu0
      %v1011 = vpop.f32.mrb[0].mxu0
      %1012 = vdwg.mxu0
      %v1013 = vsel %vm965, %v1008, -inf
      %1014 = vmax.xlane.f32.xlu0 %v1013
      %v1015 = vpop.xlane.xlu0 %1014
      %v1016 = vsub.f32 %v1008, %v1015
      %v1017 = vmul.f32 %v1016, 1.442695
      %v1018 = vpow.pop %v1017
      %v1019 = vsel %vm965, %v1018, 0.0
      %1020 = vadd.xlane.f32.xlu0 %v1019
      %v1021 = vpop.xlane.xlu0 %1020
      %v1022 = vrcp.pop %v1021
      %v1023 = vmul.f32 %v1018, %v1022
      %v1024 = vpack.c.bf16 %v1023, %v1023
      %v1025 = vpack.c.bf16 %v926, %v926
      %v1027 = vsel %vm965, %v1024, 0
      %v1030 = vsel %vm969, %v1025, 0
      %1032 = vmatprep.subr.bf16.mxu0 0
      %1033 = vmatpush1.bf16.msra.mxu0 %v1030
      %1034 = vmatprep.subr.bf16.mxu0 0
      %1035 = vmatpush1.bf16.msra.mxu0 0
      %1036 = vmatprep.subr.bf16.mxu0 0
      %1037 = vmatpush1.bf16.msra.mxu0 0
      %1038 = vmatprep.subr.bf16.mxu0 0
      %1039 = vmatpush1.bf16.msra.mxu0 0
      %1040 = vmatprep.subr.bf16.mxu0 0
      %1041 = vmatpush1.bf16.msra.mxu0 0
      %1042 = vmatprep.subr.bf16.mxu0 0
      %1043 = vmatpush1.bf16.msra.mxu0 0
      %1044 = vmatprep.subr.bf16.mxu0 0
      %1045 = vmatpush1.bf16.msra.mxu0 0
      %1046 = vmatprep.subr.bf16.mxu0 0
      %1047 = vmatpush1.bf16.msra.mxu0 0
      %1048 = vmatprep.subr.bf16.mxu0 0
      %1049 = vmatpush1.bf16.msra.mxu0 0
      %1050 = vmatprep.subr.bf16.mxu0 0
      %1051 = vmatpush1.bf16.msra.mxu0 0
      %1052 = vmatprep.subr.bf16.mxu0 0
      %1053 = vmatpush1.bf16.msra.mxu0 0
      %1054 = vmatprep.subr.bf16.mxu0 0
      %1055 = vmatpush1.bf16.msra.mxu0 0
      %1056 = vmatprep.subr.bf16.mxu0 0
      %1057 = vmatpush1.bf16.msra.mxu0 0
      %1058 = vmatprep.subr.bf16.mxu0 0
      %1059 = vmatpush1.bf16.msra.mxu0 0
      %1060 = vmatprep.subr.bf16.mxu0 0
      %1061 = vmatpush1.bf16.msra.mxu0 0
      %1062 = vmatprep.subr.bf16.mxu0 0
      %1063 = vmatpush1.bf16.msra.mxu0 0
      %1064 = vmatprep.mubr.bf16.mxu0 0
      %1065 = vmatmul.mubr.bf16.gmra.mrb[0].mxu0 %v1027
      %v1066 = vpop.f32.mrb[0].mxu0
      %v1067 = vadd.f32 0.0, %v1066
      %v1068 = vpop.f32.mrb[0].mxu0
      %v1069 = vpop.f32.mrb[0].mxu0
      %v1070 = vpop.f32.mrb[0].mxu0
      %1071 = vdwg.mxu0
      %v1072 = vld [vmem:[%s9] sm:$0xff]
      %v1073 = vpack.c.bf16 %v1067, %v1067
      %v1074 = vpack.c.bf16 %v1072, %v1072
      %s1075 = scalar_lea.vmem %s3, 32
      %v1076 = vld [vmem:[%s1075] sm:$0xff]
      %v1077 = vld [vmem:[%s1075 + $0x8] sm:$0xff]
      %v1078 = vld [vmem:[%s1075 + $0x10] sm:$0xff]
      %v1079 = vld [vmem:[%s1075 + $0x18] sm:$0xff]
      %v1080 = vpack.c.bf16 %v1077, %v1076
      %v1081 = vpack.c.bf16 %v1079, %v1078
      %s1082 = scalar_lea.vmem %s4, 1
      %v1083 = vld [vmem:[%s1082] sm:$0x1]
      %v1085 = vlaneseq
      %v1086 = vshrl.u32 %v1085, 7
      %v1087 = vsub.s32 0, %v1086
      %v1088 = vrot.slane %v1083, %v1087
      %1090 = vmatprep.subr.bf16.mxu0 0
      %1091 = vmatpush1.bf16.msra.mxu0 %v1080
      %1092 = vmatprep.subr.bf16.mxu0 0
      %1093 = vmatpush1.bf16.msra.mxu0 %v1081
      %1094 = vmatprep.subr.bf16.mxu0 0
      %1095 = vmatpush1.bf16.msra.mxu0 0
      %1096 = vmatprep.subr.bf16.mxu0 0
      %1097 = vmatpush1.bf16.msra.mxu0 0
      %1098 = vmatprep.subr.bf16.mxu0 0
      %1099 = vmatpush1.bf16.msra.mxu0 0
      %1100 = vmatprep.subr.bf16.mxu0 0
      %1101 = vmatpush1.bf16.msra.mxu0 0
      %1102 = vmatprep.subr.bf16.mxu0 0
      %1103 = vmatpush1.bf16.msra.mxu0 0
      %1104 = vmatprep.subr.bf16.mxu0 0
      %1105 = vmatpush1.bf16.msra.mxu0 0
      %1106 = vmatprep.subr.bf16.mxu0 0
      %1107 = vmatpush1.bf16.msra.mxu0 0
      %1108 = vmatprep.subr.bf16.mxu0 0
      %1109 = vmatpush1.bf16.msra.mxu0 0
      %1110 = vmatprep.subr.bf16.mxu0 0
      %1111 = vmatpush1.bf16.msra.mxu0 0
      %1112 = vmatprep.subr.bf16.mxu0 0
      %1113 = vmatpush1.bf16.msra.mxu0 0
      %1114 = vmatprep.subr.bf16.mxu0 0
      %1115 = vmatpush1.bf16.msra.mxu0 0
      %1116 = vmatprep.subr.bf16.mxu0 0
      %1117 = vmatpush1.bf16.msra.mxu0 0
      %1118 = vmatprep.subr.bf16.mxu0 0
      %1119 = vmatpush1.bf16.msra.mxu0 0
      %1120 = vmatprep.subr.bf16.mxu0 0
      %1121 = vmatpush1.bf16.msra.mxu0 0
      %1122 = vmatprep.mubr.bf16.mxu0 0
      %1123 = vmatmul.mubr.bf16.gmra.mrb[0].mxu0 %v782
      %v1124 = vpop.f32.mrb[0].mxu0
      %v1125 = vadd.f32 %v1088, %v1124
      %v1126 = vpop.f32.mrb[0].mxu0
      %v1127 = vpop.f32.mrb[0].mxu0
      %v1128 = vpop.f32.mrb[0].mxu0
      %1129 = vdwg.mxu0
      %v1130 = vmul.f32 %v1125, 0.35355338
      %s1131 = scalar_lea.vmem %s5, 32
      %v1132 = vld [vmem:[%s1131] sm:$0xff]
      %v1133 = vld [vmem:[%s1131 + $0x8] sm:$0xff]
      %v1134 = vld [vmem:[%s1131 + $0x10] sm:$0xff]
      %v1135 = vld [vmem:[%s1131 + $0x18] sm:$0xff]
      %v1136 = vpack.c.bf16 %v1133, %v1132
      %v1137 = vpack.c.bf16 %v1135, %v1134
      %s1138 = scalar_lea.vmem %s6, 1
      %v1139 = vld [vmem:[%s1138] sm:$0x1]
      %v1141 = vlaneseq
      %v1142 = vshrl.u32 %v1141, 7
      %v1143 = vsub.s32 0, %v1142
      %v1144 = vrot.slane %v1139, %v1143
      %1146 = vmatprep.subr.bf16.mxu0 0
      %1147 = vmatpush1.bf16.msra.mxu0 %v1136
      %1148 = vmatprep.subr.bf16.mxu0 0
      %1149 = vmatpush1.bf16.msra.mxu0 %v1137
      %1150 = vmatprep.subr.bf16.mxu0 0
      %1151 = vmatpush1.bf16.msra.mxu0 0
      %1152 = vmatprep.subr.bf16.mxu0 0
      %1153 = vmatpush1.bf16.msra.mxu0 0
      %1154 = vmatprep.subr.bf16.mxu0 0
      %1155 = vmatpush1.bf16.msra.mxu0 0
      %1156 = vmatprep.subr.bf16.mxu0 0
      %1157 = vmatpush1.bf16.msra.mxu0 0
      %1158 = vmatprep.subr.bf16.mxu0 0
      %1159 = vmatpush1.bf16.msra.mxu0 0
      %1160 = vmatprep.subr.bf16.mxu0 0
      %1161 = vmatpush1.bf16.msra.mxu0 0
      %1162 = vmatprep.subr.bf16.mxu0 0
      %1163 = vmatpush1.bf16.msra.mxu0 0
      %1164 = vmatprep.subr.bf16.mxu0 0
      %1165 = vmatpush1.bf16.msra.mxu0 0
      %1166 = vmatprep.subr.bf16.mxu0 0
      %1167 = vmatpush1.bf16.msra.mxu0 0
      %1168 = vmatprep.subr.bf16.mxu0 0
      %1169 = vmatpush1.bf16.msra.mxu0 0
      %1170 = vmatprep.subr.bf16.mxu0 0
      %1171 = vmatpush1.bf16.msra.mxu0 0
      %1172 = vmatprep.subr.bf16.mxu0 0
      %1173 = vmatpush1.bf16.msra.mxu0 0
      %1174 = vmatprep.subr.bf16.mxu0 0
      %1175 = vmatpush1.bf16.msra.mxu0 0
      %1176 = vmatprep.subr.bf16.mxu0 0
      %1177 = vmatpush1.bf16.msra.mxu0 0
      %1178 = vmatprep.mubr.bf16.mxu0 0
      %1179 = vmatmul.mubr.bf16.gmra.mrb[0].mxu0 %v782
      %v1180 = vpop.f32.mrb[0].mxu0
      %v1181 = vadd.f32 %v1144, %v1180
      %v1182 = vpop.f32.mrb[0].mxu0
      %v1183 = vpop.f32.mrb[0].mxu0
      %v1184 = vpop.f32.mrb[0].mxu0
      %1185 = vdwg.mxu0
      %s1186 = scalar_lea.vmem %s7, 32
      %v1187 = vld [vmem:[%s1186] sm:$0xff]
      %v1188 = vld [vmem:[%s1186 + $0x8] sm:$0xff]
      %v1189 = vld [vmem:[%s1186 + $0x10] sm:$0xff]
      %v1190 = vld [vmem:[%s1186 + $0x18] sm:$0xff]
      %v1191 = vpack.c.bf16 %v1188, %v1187
      %v1192 = vpack.c.bf16 %v1190, %v1189
      %s1193 = scalar_lea.vmem %s8, 1
      %v1194 = vld [vmem:[%s1193] sm:$0x1]
      %v1196 = vlaneseq
      %v1197 = vshrl.u32 %v1196, 7
      %v1198 = vsub.s32 0, %v1197
      %v1199 = vrot.slane %v1194, %v1198
      %1201 = vmatprep.subr.bf16.mxu0 0
      %1202 = vmatpush1.bf16.msra.mxu0 %v1191
      %1203 = vmatprep.subr.bf16.mxu0 0
      %1204 = vmatpush1.bf16.msra.mxu0 %v1192
      %1205 = vmatprep.subr.bf16.mxu0 0
      %1206 = vmatpush1.bf16.msra.mxu0 0
      %1207 = vmatprep.subr.bf16.mxu0 0
      %1208 = vmatpush1.bf16.msra.mxu0 0
      %1209 = vmatprep.subr.bf16.mxu0 0
      %1210 = vmatpush1.bf16.msra.mxu0 0
      %1211 = vmatprep.subr.bf16.mxu0 0
      %1212 = vmatpush1.bf16.msra.mxu0 0
      %1213 = vmatprep.subr.bf16.mxu0 0
      %1214 = vmatpush1.bf16.msra.mxu0 0
      %1215 = vmatprep.subr.bf16.mxu0 0
      %1216 = vmatpush1.bf16.msra.mxu0 0
      %1217 = vmatprep.subr.bf16.mxu0 0
      %1218 = vmatpush1.bf16.msra.mxu0 0
      %1219 = vmatprep.subr.bf16.mxu0 0
      %1220 = vmatpush1.bf16.msra.mxu0 0
      %1221 = vmatprep.subr.bf16.mxu0 0
      %1222 = vmatpush1.bf16.msra.mxu0 0
      %1223 = vmatprep.subr.bf16.mxu0 0
      %1224 = vmatpush1.bf16.msra.mxu0 0
      %1225 = vmatprep.subr.bf16.mxu0 0
      %1226 = vmatpush1.bf16.msra.mxu0 0
      %1227 = vmatprep.subr.bf16.mxu0 0
      %1228 = vmatpush1.bf16.msra.mxu0 0
      %1229 = vmatprep.subr.bf16.mxu0 0
      %1230 = vmatpush1.bf16.msra.mxu0 0
      %1231 = vmatprep.subr.bf16.mxu0 0
      %1232 = vmatpush1.bf16.msra.mxu0 0
      %1233 = vmatprep.mubr.bf16.mxu0 0
      %1234 = vmatmul.mubr.bf16.gmra.mrb[0].mxu0 %v782
      %v1235 = vpop.f32.mrb[0].mxu0
      %v1236 = vadd.f32 %v1199, %v1235
      %v1237 = vpop.f32.mrb[0].mxu0
      %v1238 = vpop.f32.mrb[0].mxu0
      %v1239 = vpop.f32.mrb[0].mxu0
      %1240 = vdwg.mxu0
      %1241 = vxpose.xlu0.b32.start [1/16] %v1181, 128
      %1242 = vxpose.xlu0.b32.cont [2/16] 0.0, 128
      %1243 = vxpose.xlu0.b32.cont [3/16] 0.0, 128
      %1244 = vxpose.xlu0.b32.cont [4/16] 0.0, 128
      %1245 = vxpose.xlu0.b32.cont [5/16] 0.0, 128
      %1246 = vxpose.xlu0.b32.cont [6/16] 0.0, 128
      %1247 = vxpose.xlu0.b32.cont [7/16] 0.0, 128
      %1248 = vxpose.xlu0.b32.cont [8/16] 0.0, 128
      %1249 = vxpose.xlu0.b32.cont [9/16] 0.0, 128
      %1250 = vxpose.xlu0.b32.cont [10/16] 0.0, 128
      %1251 = vxpose.xlu0.b32.cont [11/16] 0.0, 128
      %1252 = vxpose.xlu0.b32.cont [12/16] 0.0, 128
      %1253 = vxpose.xlu0.b32.cont [13/16] 0.0, 128
      %1254 = vxpose.xlu0.b32.cont [14/16] 0.0, 128
      %1255 = vxpose.xlu0.b32.cont [15/16] 0.0, 128
      %1256 = vxpose.xlu0.b32.end [16/16] 0.0, 128
      %v1257 = vpop.trf.xlu0
      %v1258 = vpop.trf.xlu0
      %v1259 = vpop.trf.xlu0
      %v1260 = vpop.trf.xlu0
      %v1261 = vpop.trf.xlu0
      %v1262 = vpop.trf.xlu0
      %v1263 = vpop.trf.xlu0
      %v1264 = vpop.trf.xlu0
      %v1265 = vpop.trf.xlu0
      %v1266 = vpop.trf.xlu0
      %v1267 = vpop.trf.xlu0
      %v1268 = vpop.trf.xlu0
      %v1269 = vpop.trf.xlu0
      %v1270 = vpop.trf.xlu0
      %v1271 = vpop.trf.xlu0
      %v1272 = vpop.trf.xlu0
      %v1273 = vpack.c.bf16 %v1130, %v1130
      %v1274 = vpack.c.bf16 %v1257, %v1257
      %v1276 = vsel %vm965, %v1273, 0
      %v1279 = vsel %vm969, %v1274, 0
      %1281 = vmatprep.subr.bf16.mxu0 0
      %1282 = vmatpush1.bf16.msra.mxu0 %v1279
      %1283 = vmatprep.subr.bf16.mxu0 0
      %1284 = vmatpush1.bf16.msra.mxu0 0
      %1285 = vmatprep.subr.bf16.mxu0 0
      %1286 = vmatpush1.bf16.msra.mxu0 0
      %1287 = vmatprep.subr.bf16.mxu0 0
      %1288 = vmatpush1.bf16.msra.mxu0 0
      %1289 = vmatprep.subr.bf16.mxu0 0
      %1290 = vmatpush1.bf16.msra.mxu0 0
      %1291 = vmatprep.subr.bf16.mxu0 0
      %1292 = vmatpush1.bf16.msra.mxu0 0
      %1293 = vmatprep.subr.bf16.mxu0 0
      %1294 = vmatpush1.bf16.msra.mxu0 0
      %1295 = vmatprep.subr.bf16.mxu0 0
      %1296 = vmatpush1.bf16.msra.mxu0 0
      %1297 = vmatprep.subr.bf16.mxu0 0
      %1298 = vmatpush1.bf16.msra.mxu0 0
      %1299 = vmatprep.subr.bf16.mxu0 0
      %1300 = vmatpush1.bf16.msra.mxu0 0
      %1301 = vmatprep.subr.bf16.mxu0 0
      %1302 = vmatpush1.bf16.msra.mxu0 0
      %1303 = vmatprep.subr.bf16.mxu0 0
      %1304 = vmatpush1.bf16.msra.mxu0 0
      %1305 = vmatprep.subr.bf16.mxu0 0
      %1306 = vmatpush1.bf16.msra.mxu0 0
      %1307 = vmatprep.subr.bf16.mxu0 0
      %1308 = vmatpush1.bf16.msra.mxu0 0
      %1309 = vmatprep.subr.bf16.mxu0 0
      %1310 = vmatpush1.bf16.msra.mxu0 0
      %1311 = vmatprep.subr.bf16.mxu0 0
      %1312 = vmatpush1.bf16.msra.mxu0 0
      %1313 = vmatprep.mubr.bf16.mxu0 0
      %1314 = vmatmul.mubr.bf16.gmra.mrb[0].mxu0 %v1276
      %v1315 = vpop.f32.mrb[0].mxu0
      %v1316 = vadd.f32 0.0, %v1315
      %v1317 = vpop.f32.mrb[0].mxu0
      %v1318 = vpop.f32.mrb[0].mxu0
      %v1319 = vpop.f32.mrb[0].mxu0
      %1320 = vdwg.mxu0
      %v1321 = vsel %vm965, %v1316, -inf
      %1322 = vmax.xlane.f32.xlu0 %v1321
      %v1323 = vpop.xlane.xlu0 %1322
      %v1324 = vsub.f32 %v1316, %v1323
      %v1325 = vmul.f32 %v1324, 1.442695
      %v1326 = vpow.pop %v1325
      %v1327 = vsel %vm965, %v1326, 0.0
      %1328 = vadd.xlane.f32.xlu0 %v1327
      %v1329 = vpop.xlane.xlu0 %1328
      %v1330 = vrcp.pop %v1329
      %v1331 = vmul.f32 %v1326, %v1330
      %v1332 = vpack.c.bf16 %v1331, %v1331
      %v1333 = vpack.c.bf16 %v1236, %v1236
      %v1335 = vsel %vm965, %v1332, 0
      %v1338 = vsel %vm969, %v1333, 0
      %1340 = vmatprep.subr.bf16.mxu0 0
      %1341 = vmatpush1.bf16.msra.mxu0 %v1338
      %1342 = vmatprep.subr.bf16.mxu0 0
      %1343 = vmatpush1.bf16.msra.mxu0 0
      %1344 = vmatprep.subr.bf16.mxu0 0
      %1345 = vmatpush1.bf16.msra.mxu0 0
      %1346 = vmatprep.subr.bf16.mxu0 0
      %1347 = vmatpush1.bf16.msra.mxu0 0
      %1348 = vmatprep.subr.bf16.mxu0 0
      %1349 = vmatpush1.bf16.msra.mxu0 0
      %1350 = vmatprep.subr.bf16.mxu0 0
      %1351 = vmatpush1.bf16.msra.mxu0 0
      %1352 = vmatprep.subr.bf16.mxu0 0
      %1353 = vmatpush1.bf16.msra.mxu0 0
      %1354 = vmatprep.subr.bf16.mxu0 0
      %1355 = vmatpush1.bf16.msra.mxu0 0
      %1356 = vmatprep.subr.bf16.mxu0 0
      %1357 = vmatpush1.bf16.msra.mxu0 0
      %1358 = vmatprep.subr.bf16.mxu0 0
      %1359 = vmatpush1.bf16.msra.mxu0 0
      %1360 = vmatprep.subr.bf16.mxu0 0
      %1361 = vmatpush1.bf16.msra.mxu0 0
      %1362 = vmatprep.subr.bf16.mxu0 0
      %1363 = vmatpush1.bf16.msra.mxu0 0
      %1364 = vmatprep.subr.bf16.mxu0 0
      %1365 = vmatpush1.bf16.msra.mxu0 0
      %1366 = vmatprep.subr.bf16.mxu0 0
      %1367 = vmatpush1.bf16.msra.mxu0 0
      %1368 = vmatprep.subr.bf16.mxu0 0
      %1369 = vmatpush1.bf16.msra.mxu0 0
      %1370 = vmatprep.subr.bf16.mxu0 0
      %1371 = vmatpush1.bf16.msra.mxu0 0
      %1372 = vmatprep.mubr.bf16.mxu0 0
      %1373 = vmatmul.mubr.bf16.gmra.mrb[0].mxu0 %v1335
      %v1374 = vpop.f32.mrb[0].mxu0
      %v1375 = vadd.f32 0.0, %v1374
      %v1376 = vpop.f32.mrb[0].mxu0
      %v1377 = vpop.f32.mrb[0].mxu0
      %v1378 = vpop.f32.mrb[0].mxu0
      %1379 = vdwg.mxu0
      %s1380 = scalar_lea.vmem %s9, 8
      %v1381 = vld [vmem:[%s1380] sm:$0xff]
      %v1382 = vpack.c.bf16 %v1375, %v1375
      %v1383 = vpack.c.bf16 %v1381, %v1381
      %v1385 = vsel %vm965, %v1382, 0
      %v1388 = vsel %vm969, %v1383, 0
      %1390 = vmatprep.subr.bf16.mxu0 0
      %1391 = vmatpush1.bf16.msra.mxu0 %v1388
      %1392 = vmatprep.subr.bf16.mxu0 0
      %1393 = vmatpush1.bf16.msra.mxu0 0
      %1394 = vmatprep.subr.bf16.mxu0 0
      %1395 = vmatpush1.bf16.msra.mxu0 0
      %1396 = vmatprep.subr.bf16.mxu0 0
      %1397 = vmatpush1.bf16.msra.mxu0 0
      %1398 = vmatprep.subr.bf16.mxu0 0
      %1399 = vmatpush1.bf16.msra.mxu0 0
      %1400 = vmatprep.subr.bf16.mxu0 0
      %1401 = vmatpush1.bf16.msra.mxu0 0
      %1402 = vmatprep.subr.bf16.mxu0 0
      %1403 = vmatpush1.bf16.msra.mxu0 0
      %1404 = vmatprep.subr.bf16.mxu0 0
      %1405 = vmatpush1.bf16.msra.mxu0 0
      %1406 = vmatprep.subr.bf16.mxu0 0
      %1407 = vmatpush1.bf16.msra.mxu0 0
      %1408 = vmatprep.subr.bf16.mxu0 0
      %1409 = vmatpush1.bf16.msra.mxu0 0
      %1410 = vmatprep.subr.bf16.mxu0 0
      %1411 = vmatpush1.bf16.msra.mxu0 0
      %1412 = vmatprep.subr.bf16.mxu0 0
      %1413 = vmatpush1.bf16.msra.mxu0 0
      %1414 = vmatprep.subr.bf16.mxu0 0
      %1415 = vmatpush1.bf16.msra.mxu0 0
      %1416 = vmatprep.subr.bf16.mxu0 0
      %1417 = vmatpush1.bf16.msra.mxu0 0
      %1418 = vmatprep.subr.bf16.mxu0 0
      %1419 = vmatpush1.bf16.msra.mxu0 0
      %1420 = vmatprep.subr.bf16.mxu0 0
      %1421 = vmatpush1.bf16.msra.mxu0 0
      %1422 = vmatprep.mubr.bf16.mxu0 0
      %1423 = vmatmul.mubr.bf16.gmra.mrb[0].mxu0 %v1385
      %v1424 = vpop.f32.mrb[0].mxu0
      %v1425 = vadd.f32 0.0, %v1424
      %v1426 = vpop.f32.mrb[0].mxu0
      %v1427 = vpop.f32.mrb[0].mxu0
      %v1428 = vpop.f32.mrb[0].mxu0
      %1429 = vdwg.mxu0
      %v1431 = vsel %vm965, %v1073, 0
      %v1434 = vsel %vm969, %v1074, 0
      %1436 = vmatprep.subr.bf16.mxu0 0
      %1437 = vmatpush1.bf16.msra.mxu0 %v1434
      %1438 = vmatprep.subr.bf16.mxu0 0
      %1439 = vmatpush1.bf16.msra.mxu0 0
      %1440 = vmatprep.subr.bf16.mxu0 0
      %1441 = vmatpush1.bf16.msra.mxu0 0
      %1442 = vmatprep.subr.bf16.mxu0 0
      %1443 = vmatpush1.bf16.msra.mxu0 0
      %1444 = vmatprep.subr.bf16.mxu0 0
      %1445 = vmatpush1.bf16.msra.mxu0 0
      %1446 = vmatprep.subr.bf16.mxu0 0
      %1447 = vmatpush1.bf16.msra.mxu0 0
      %1448 = vmatprep.subr.bf16.mxu0 0
      %1449 = vmatpush1.bf16.msra.mxu0 0
      %1450 = vmatprep.subr.bf16.mxu0 0
      %1451 = vmatpush1.bf16.msra.mxu0 0
      %1452 = vmatprep.subr.bf16.mxu0 0
      %1453 = vmatpush1.bf16.msra.mxu0 0
      %1454 = vmatprep.subr.bf16.mxu0 0
      %1455 = vmatpush1.bf16.msra.mxu0 0
      %1456 = vmatprep.subr.bf16.mxu0 0
      %1457 = vmatpush1.bf16.msra.mxu0 0
      %1458 = vmatprep.subr.bf16.mxu0 0
      %1459 = vmatpush1.bf16.msra.mxu0 0
      %1460 = vmatprep.subr.bf16.mxu0 0
      %1461 = vmatpush1.bf16.msra.mxu0 0
      %1462 = vmatprep.subr.bf16.mxu0 0
      %1463 = vmatpush1.bf16.msra.mxu0 0
      %1464 = vmatprep.subr.bf16.mxu0 0
      %1465 = vmatpush1.bf16.msra.mxu0 0
      %1466 = vmatprep.subr.bf16.mxu0 0
      %1467 = vmatpush1.bf16.msra.mxu0 0
      %1468 = vmatprep.mubr.bf16.mxu0 0
      %1469 = vmatmul.mubr.bf16.gmra.mrb[0].mxu0 %v1431
      %v1470 = vpop.f32.mrb[0].mxu0
      %v1471 = vadd.f32 %v1425, %v1470
      %v1472 = vpop.f32.mrb[0].mxu0
      %v1473 = vpop.f32.mrb[0].mxu0
      %v1474 = vpop.f32.mrb[0].mxu0
      %1475 = vdwg.mxu0
      %s1476 = scalar_lea.vmem %s3, 64
      %v1477 = vld [vmem:[%s1476] sm:$0xff]
      %v1478 = vld [vmem:[%s1476 + $0x8] sm:$0xff]
      %v1479 = vld [vmem:[%s1476 + $0x10] sm:$0xff]
      %v1480 = vld [vmem:[%s1476 + $0x18] sm:$0xff]
      %v1481 = vpack.c.bf16 %v1478, %v1477
      %v1482 = vpack.c.bf16 %v1480, %v1479
      %s1483 = scalar_lea.vmem %s4, 2
      %v1484 = vld [vmem:[%s1483] sm:$0x1]
      %v1486 = vlaneseq
      %v1487 = vshrl.u32 %v1486, 7
      %v1488 = vsub.s32 0, %v1487
      %v1489 = vrot.slane %v1484, %v1488
      %1491 = vmatprep.subr.bf16.mxu0 0
      %1492 = vmatpush1.bf16.msra.mxu0 %v1481
      %1493 = vmatprep.subr.bf16.mxu0 0
      %1494 = vmatpush1.bf16.msra.mxu0 %v1482
      %1495 = vmatprep.subr.bf16.mxu0 0
      %1496 = vmatpush1.bf16.msra.mxu0 0
      %1497 = vmatprep.subr.bf16.mxu0 0
      %1498 = vmatpush1.bf16.msra.mxu0 0
      %1499 = vmatprep.subr.bf16.mxu0 0
      %1500 = vmatpush1.bf16.msra.mxu0 0
      %1501 = vmatprep.subr.bf16.mxu0 0
      %1502 = vmatpush1.bf16.msra.mxu0 0
      %1503 = vmatprep.subr.bf16.mxu0 0
      %1504 = vmatpush1.bf16.msra.mxu0 0
      %1505 = vmatprep.subr.bf16.mxu0 0
      %1506 = vmatpush1.bf16.msra.mxu0 0
      %1507 = vmatprep.subr.bf16.mxu0 0
      %1508 = vmatpush1.bf16.msra.mxu0 0
      %1509 = vmatprep.subr.bf16.mxu0 0
      %1510 = vmatpush1.bf16.msra.mxu0 0
      %1511 = vmatprep.subr.bf16.mxu0 0
      %1512 = vmatpush1.bf16.msra.mxu0 0
      %1513 = vmatprep.subr.bf16.mxu0 0
      %1514 = vmatpush1.bf16.msra.mxu0 0
      %1515 = vmatprep.subr.bf16.mxu0 0
      %1516 = vmatpush1.bf16.msra.mxu0 0
      %1517 = vmatprep.subr.bf16.mxu0 0
      %1518 = vmatpush1.bf16.msra.mxu0 0
      %1519 = vmatprep.subr.bf16.mxu0 0
      %1520 = vmatpush1.bf16.msra.mxu0 0
      %1521 = vmatprep.subr.bf16.mxu0 0
      %1522 = vmatpush1.bf16.msra.mxu0 0
      %1523 = vmatprep.mubr.bf16.mxu0 0
      %1524 = vmatmul.mubr.bf16.gmra.mrb[0].mxu0 %v782
      %v1525 = vpop.f32.mrb[0].mxu0
      %v1526 = vadd.f32 %v1489, %v1525
      %v1527 = vpop.f32.mrb[0].mxu0
      %v1528 = vpop.f32.mrb[0].mxu0
      %v1529 = vpop.f32.mrb[0].mxu0
      %1530 = vdwg.mxu0
      %v1531 = vmul.f32 %v1526, 0.35355338
      %s1532 = scalar_lea.vmem %s5, 64
      %v1533 = vld [vmem:[%s1532] sm:$0xff]
      %v1534 = vld [vmem:[%s1532 + $0x8] sm:$0xff]
      %v1535 = vld [vmem:[%s1532 + $0x10] sm:$0xff]
      %v1536 = vld [vmem:[%s1532 + $0x18] sm:$0xff]
      %v1537 = vpack.c.bf16 %v1534, %v1533
      %v1538 = vpack.c.bf16 %v1536, %v1535
      %s1539 = scalar_lea.vmem %s6, 2
      %v1540 = vld [vmem:[%s1539] sm:$0x1]
      %v1542 = vlaneseq
      %v1543 = vshrl.u32 %v1542, 7
      %v1544 = vsub.s32 0, %v1543
      %v1545 = vrot.slane %v1540, %v1544
      %1547 = vmatprep.subr.bf16.mxu0 0
      %1548 = vmatpush1.bf16.msra.mxu0 %v1537
      %1549 = vmatprep.subr.bf16.mxu0 0
      %1550 = vmatpush1.bf16.msra.mxu0 %v1538
      %1551 = vmatprep.subr.bf16.mxu0 0
      %1552 = vmatpush1.bf16.msra.mxu0 0
      %1553 = vmatprep.subr.bf16.mxu0 0
      %1554 = vmatpush1.bf16.msra.mxu0 0
      %1555 = vmatprep.subr.bf16.mxu0 0
      %1556 = vmatpush1.bf16.msra.mxu0 0
      %1557 = vmatprep.subr.bf16.mxu0 0
      %1558 = vmatpush1.bf16.msra.mxu0 0
      %1559 = vmatprep.subr.bf16.mxu0 0
      %1560 = vmatpush1.bf16.msra.mxu0 0
      %1561 = vmatprep.subr.bf16.mxu0 0
      %1562 = vmatpush1.bf16.msra.mxu0 0
      %1563 = vmatprep.subr.bf16.mxu0 0
      %1564 = vmatpush1.bf16.msra.mxu0 0
      %1565 = vmatprep.subr.bf16.mxu0 0
      %1566 = vmatpush1.bf16.msra.mxu0 0
      %1567 = vmatprep.subr.bf16.mxu0 0
      %1568 = vmatpush1.bf16.msra.mxu0 0
      %1569 = vmatprep.subr.bf16.mxu0 0
      %1570 = vmatpush1.bf16.msra.mxu0 0
      %1571 = vmatprep.subr.bf16.mxu0 0
      %1572 = vmatpush1.bf16.msra.mxu0 0
      %1573 = vmatprep.subr.bf16.mxu0 0
      %1574 = vmatpush1.bf16.msra.mxu0 0
      %1575 = vmatprep.subr.bf16.mxu0 0
      %1576 = vmatpush1.bf16.msra.mxu0 0
      %1577 = vmatprep.subr.bf16.mxu0 0
      %1578 = vmatpush1.bf16.msra.mxu0 0
      %1579 = vmatprep.mubr.bf16.mxu0 0
      %1580 = vmatmul.mubr.bf16.gmra.mrb[0].mxu0 %v782
      %v1581 = vpop.f32.mrb[0].mxu0
      %v1582 = vadd.f32 %v1545, %v1581
      %v1583 = vpop.f32.mrb[0].mxu0
      %v1584 = vpop.f32.mrb[0].mxu0
      %v1585 = vpop.f32.mrb[0].mxu0
      %1586 = vdwg.mxu0
      %s1587 = scalar_lea.vmem %s7, 64
      %v1588 = vld [vmem:[%s1587] sm:$0xff]
      %v1589 = vld [vmem:[%s1587 + $0x8] sm:$0xff]
      %v1590 = vld [vmem:[%s1587 + $0x10] sm:$0xff]
      %v1591 = vld [vmem:[%s1587 + $0x18] sm:$0xff]
      %v1592 = vpack.c.bf16 %v1589, %v1588
      %v1593 = vpack.c.bf16 %v1591, %v1590
      %s1594 = scalar_lea.vmem %s8, 2
      %v1595 = vld [vmem:[%s1594] sm:$0x1]
      %v1597 = vlaneseq
      %v1598 = vshrl.u32 %v1597, 7
      %v1599 = vsub.s32 0, %v1598
      %v1600 = vrot.slane %v1595, %v1599
      %1602 = vmatprep.subr.bf16.mxu0 0
      %1603 = vmatpush1.bf16.msra.mxu0 %v1592
      %1604 = vmatprep.subr.bf16.mxu0 0
      %1605 = vmatpush1.bf16.msra.mxu0 %v1593
      %1606 = vmatprep.subr.bf16.mxu0 0
      %1607 = vmatpush1.bf16.msra.mxu0 0
      %1608 = vmatprep.subr.bf16.mxu0 0
      %1609 = vmatpush1.bf16.msra.mxu0 0
      %1610 = vmatprep.subr.bf16.mxu0 0
      %1611 = vmatpush1.bf16.msra.mxu0 0
      %1612 = vmatprep.subr.bf16.mxu0 0
      %1613 = vmatpush1.bf16.msra.mxu0 0
      %1614 = vmatprep.subr.bf16.mxu0 0
      %1615 = vmatpush1.bf16.msra.mxu0 0
      %1616 = vmatprep.subr.bf16.mxu0 0
      %1617 = vmatpush1.bf16.msra.mxu0 0
      %1618 = vmatprep.subr.bf16.mxu0 0
      %1619 = vmatpush1.bf16.msra.mxu0 0
      %1620 = vmatprep.subr.bf16.mxu0 0
      %1621 = vmatpush1.bf16.msra.mxu0 0
      %1622 = vmatprep.subr.bf16.mxu0 0
      %1623 = vmatpush1.bf16.msra.mxu0 0
      %1624 = vmatprep.subr.bf16.mxu0 0
      %1625 = vmatpush1.bf16.msra.mxu0 0
      %1626 = vmatprep.subr.bf16.mxu0 0
      %1627 = vmatpush1.bf16.msra.mxu0 0
      %1628 = vmatprep.subr.bf16.mxu0 0
      %1629 = vmatpush1.bf16.msra.mxu0 0
      %1630 = vmatprep.subr.bf16.mxu0 0
      %1631 = vmatpush1.bf16.msra.mxu0 0
      %1632 = vmatprep.subr.bf16.mxu0 0
      %1633 = vmatpush1.bf16.msra.mxu0 0
      %1634 = vmatprep.mubr.bf16.mxu0 0
      %1635 = vmatmul.mubr.bf16.gmra.mrb[0].mxu0 %v782
      %v1636 = vpop.f32.mrb[0].mxu0
      %v1637 = vadd.f32 %v1600, %v1636
      %v1638 = vpop.f32.mrb[0].mxu0
      %v1639 = vpop.f32.mrb[0].mxu0
      %v1640 = vpop.f32.mrb[0].mxu0
      %1641 = vdwg.mxu0
      %1642 = vxpose.xlu0.b32.start [1/16] %v1582, 128
      %1643 = vxpose.xlu0.b32.cont [2/16] 0.0, 128
      %1644 = vxpose.xlu0.b32.cont [3/16] 0.0, 128
      %1645 = vxpose.xlu0.b32.cont [4/16] 0.0, 128
      %1646 = vxpose.xlu0.b32.cont [5/16] 0.0, 128
      %1647 = vxpose.xlu0.b32.cont [6/16] 0.0, 128
      %1648 = vxpose.xlu0.b32.cont [7/16] 0.0, 128
      %1649 = vxpose.xlu0.b32.cont [8/16] 0.0, 128
      %1650 = vxpose.xlu0.b32.cont [9/16] 0.0, 128
      %1651 = vxpose.xlu0.b32.cont [10/16] 0.0, 128
      %1652 = vxpose.xlu0.b32.cont [11/16] 0.0, 128
      %1653 = vxpose.xlu0.b32.cont [12/16] 0.0, 128
      %1654 = vxpose.xlu0.b32.cont [13/16] 0.0, 128
      %1655 = vxpose.xlu0.b32.cont [14/16] 0.0, 128
      %1656 = vxpose.xlu0.b32.cont [15/16] 0.0, 128
      %1657 = vxpose.xlu0.b32.end [16/16] 0.0, 128
      %v1658 = vpop.trf.xlu0
      %v1659 = vpop.trf.xlu0
      %v1660 = vpop.trf.xlu0
      %v1661 = vpop.trf.xlu0
      %v1662 = vpop.trf.xlu0
      %v1663 = vpop.trf.xlu0
      %v1664 = vpop.trf.xlu0
      %v1665 = vpop.trf.xlu0
      %v1666 = vpop.trf.xlu0
      %v1667 = vpop.trf.xlu0
      %v1668 = vpop.trf.xlu0
      %v1669 = vpop.trf.xlu0
      %v1670 = vpop.trf.xlu0
      %v1671 = vpop.trf.xlu0
      %v1672 = vpop.trf.xlu0
      %v1673 = vpop.trf.xlu0
      %v1674 = vpack.c.bf16 %v1531, %v1531
      %v1675 = vpack.c.bf16 %v1658, %v1658
      %v1677 = vsel %vm965, %v1674, 0
      %v1680 = vsel %vm969, %v1675, 0
      %1682 = vmatprep.subr.bf16.mxu0 0
      %1683 = vmatpush1.bf16.msra.mxu0 %v1680
      %1684 = vmatprep.subr.bf16.mxu0 0
      %1685 = vmatpush1.bf16.msra.mxu0 0
      %1686 = vmatprep.subr.bf16.mxu0 0
      %1687 = vmatpush1.bf16.msra.mxu0 0
      %1688 = vmatprep.subr.bf16.mxu0 0
      %1689 = vmatpush1.bf16.msra.mxu0 0
      %1690 = vmatprep.subr.bf16.mxu0 0
      %1691 = vmatpush1.bf16.msra.mxu0 0
      %1692 = vmatprep.subr.bf16.mxu0 0
      %1693 = vmatpush1.bf16.msra.mxu0 0
      %1694 = vmatprep.subr.bf16.mxu0 0
      %1695 = vmatpush1.bf16.msra.mxu0 0
      %1696 = vmatprep.subr.bf16.mxu0 0
      %1697 = vmatpush1.bf16.msra.mxu0 0
      %1698 = vmatprep.subr.bf16.mxu0 0
      %1699 = vmatpush1.bf16.msra.mxu0 0
      %1700 = vmatprep.subr.bf16.mxu0 0
      %1701 = vmatpush1.bf16.msra.mxu0 0
      %1702 = vmatprep.subr.bf16.mxu0 0
      %1703 = vmatpush1.bf16.msra.mxu0 0
      %1704 = vmatprep.subr.bf16.mxu0 0
      %1705 = vmatpush1.bf16.msra.mxu0 0
      %1706 = vmatprep.subr.bf16.mxu0 0
      %1707 = vmatpush1.bf16.msra.mxu0 0
      %1708 = vmatprep.subr.bf16.mxu0 0
      %1709 = vmatpush1.bf16.msra.mxu0 0
      %1710 = vmatprep.subr.bf16.mxu0 0
      %1711 = vmatpush1.bf16.msra.mxu0 0
      %1712 = vmatprep.subr.bf16.mxu0 0
      %1713 = vmatpush1.bf16.msra.mxu0 0
      %1714 = vmatprep.mubr.bf16.mxu0 0
      %1715 = vmatmul.mubr.bf16.gmra.mrb[0].mxu0 %v1677
      %v1716 = vpop.f32.mrb[0].mxu0
      %v1717 = vadd.f32 0.0, %v1716
      %v1718 = vpop.f32.mrb[0].mxu0
      %v1719 = vpop.f32.mrb[0].mxu0
      %v1720 = vpop.f32.mrb[0].mxu0
      %1721 = vdwg.mxu0
      %v1722 = vsel %vm965, %v1717, -inf
      %1723 = vmax.xlane.f32.xlu0 %v1722
      %v1724 = vpop.xlane.xlu0 %1723
      %v1725 = vsub.f32 %v1717, %v1724
      %v1726 = vmul.f32 %v1725, 1.442695
      %v1727 = vpow.pop %v1726
      %v1728 = vsel %vm965, %v1727, 0.0
      %1729 = vadd.xlane.f32.xlu0 %v1728
      %v1730 = vpop.xlane.xlu0 %1729
      %v1731 = vrcp.pop %v1730
      %v1732 = vmul.f32 %v1727, %v1731
      %v1733 = vpack.c.bf16 %v1732, %v1732
      %v1734 = vpack.c.bf16 %v1637, %v1637
      %v1736 = vsel %vm965, %v1733, 0
      %v1739 = vsel %vm969, %v1734, 0
      %1741 = vmatprep.subr.bf16.mxu0 0
      %1742 = vmatpush1.bf16.msra.mxu0 %v1739
      %1743 = vmatprep.subr.bf16.mxu0 0
      %1744 = vmatpush1.bf16.msra.mxu0 0
      %1745 = vmatprep.subr.bf16.mxu0 0
      %1746 = vmatpush1.bf16.msra.mxu0 0
      %1747 = vmatprep.subr.bf16.mxu0 0
      %1748 = vmatpush1.bf16.msra.mxu0 0
      %1749 = vmatprep.subr.bf16.mxu0 0
      %1750 = vmatpush1.bf16.msra.mxu0 0
      %1751 = vmatprep.subr.bf16.mxu0 0
      %1752 = vmatpush1.bf16.msra.mxu0 0
      %1753 = vmatprep.subr.bf16.mxu0 0
      %1754 = vmatpush1.bf16.msra.mxu0 0
      %1755 = vmatprep.subr.bf16.mxu0 0
      %1756 = vmatpush1.bf16.msra.mxu0 0
      %1757 = vmatprep.subr.bf16.mxu0 0
      %1758 = vmatpush1.bf16.msra.mxu0 0
      %1759 = vmatprep.subr.bf16.mxu0 0
      %1760 = vmatpush1.bf16.msra.mxu0 0
      %1761 = vmatprep.subr.bf16.mxu0 0
      %1762 = vmatpush1.bf16.msra.mxu0 0
      %1763 = vmatprep.subr.bf16.mxu0 0
      %1764 = vmatpush1.bf16.msra.mxu0 0
      %1765 = vmatprep.subr.bf16.mxu0 0
      %1766 = vmatpush1.bf16.msra.mxu0 0
      %1767 = vmatprep.subr.bf16.mxu0 0
      %1768 = vmatpush1.bf16.msra.mxu0 0
      %1769 = vmatprep.subr.bf16.mxu0 0
      %1770 = vmatpush1.bf16.msra.mxu0 0
      %1771 = vmatprep.subr.bf16.mxu0 0
      %1772 = vmatpush1.bf16.msra.mxu0 0
      %1773 = vmatprep.mubr.bf16.mxu0 0
      %1774 = vmatmul.mubr.bf16.gmra.mrb[0].mxu0 %v1736
      %v1775 = vpop.f32.mrb[0].mxu0
      %v1776 = vadd.f32 0.0, %v1775
      %v1777 = vpop.f32.mrb[0].mxu0
      %v1778 = vpop.f32.mrb[0].mxu0
      %v1779 = vpop.f32.mrb[0].mxu0
      %1780 = vdwg.mxu0
      %s1781 = scalar_lea.vmem %s9, 16
      %v1782 = vld [vmem:[%s1781] sm:$0xff]
      %v1783 = vpack.c.bf16 %v1776, %v1776
      %v1784 = vpack.c.bf16 %v1782, %v1782
      %v1786 = vsel %vm965, %v1783, 0
      %v1789 = vsel %vm969, %v1784, 0
      %1791 = vmatprep.subr.bf16.mxu0 0
      %1792 = vmatpush1.bf16.msra.mxu0 %v1789
      %1793 = vmatprep.subr.bf16.mxu0 0
      %1794 = vmatpush1.bf16.msra.mxu0 0
      %1795 = vmatprep.subr.bf16.mxu0 0
      %1796 = vmatpush1.bf16.msra.mxu0 0
      %1797 = vmatprep.subr.bf16.mxu0 0
      %1798 = vmatpush1.bf16.msra.mxu0 0
      %1799 = vmatprep.subr.bf16.mxu0 0
      %1800 = vmatpush1.bf16.msra.mxu0 0
      %1801 = vmatprep.subr.bf16.mxu0 0
      %1802 = vmatpush1.bf16.msra.mxu0 0
      %1803 = vmatprep.subr.bf16.mxu0 0
      %1804 = vmatpush1.bf16.msra.mxu0 0
      %1805 = vmatprep.subr.bf16.mxu0 0
      %1806 = vmatpush1.bf16.msra.mxu0 0
      %1807 = vmatprep.subr.bf16.mxu0 0
      %1808 = vmatpush1.bf16.msra.mxu0 0
      %1809 = vmatprep.subr.bf16.mxu0 0
      %1810 = vmatpush1.bf16.msra.mxu0 0
      %1811 = vmatprep.subr.bf16.mxu0 0
      %1812 = vmatpush1.bf16.msra.mxu0 0
      %1813 = vmatprep.subr.bf16.mxu0 0
      %1814 = vmatpush1.bf16.msra.mxu0 0
      %1815 = vmatprep.subr.bf16.mxu0 0
      %1816 = vmatpush1.bf16.msra.mxu0 0
      %1817 = vmatprep.subr.bf16.mxu0 0
      %1818 = vmatpush1.bf16.msra.mxu0 0
      %1819 = vmatprep.subr.bf16.mxu0 0
      %1820 = vmatpush1.bf16.msra.mxu0 0
      %1821 = vmatprep.subr.bf16.mxu0 0
      %1822 = vmatpush1.bf16.msra.mxu0 0
      %1823 = vmatprep.mubr.bf16.mxu0 0
      %1824 = vmatmul.mubr.bf16.gmra.mrb[0].mxu0 %v1786
      %v1825 = vpop.f32.mrb[0].mxu0
      %v1826 = vadd.f32 0.0, %v1825
      %v1827 = vpop.f32.mrb[0].mxu0
      %v1828 = vpop.f32.mrb[0].mxu0
      %v1829 = vpop.f32.mrb[0].mxu0
      %1830 = vdwg.mxu0
      %v1831 = vadd.f32 %v1471, %v1826
      %s1832 = scalar_lea.vmem %s3, 96
      %v1833 = vld [vmem:[%s1832] sm:$0xff]
      %v1834 = vld [vmem:[%s1832 + $0x8] sm:$0xff]
      %v1835 = vld [vmem:[%s1832 + $0x10] sm:$0xff]
      %v1836 = vld [vmem:[%s1832 + $0x18] sm:$0xff]
      %v1837 = vpack.c.bf16 %v1834, %v1833
      %v1838 = vpack.c.bf16 %v1836, %v1835
      %s1839 = scalar_lea.vmem %s4, 3
      %v1840 = vld [vmem:[%s1839] sm:$0x1]
      %v1842 = vlaneseq
      %v1843 = vshrl.u32 %v1842, 7
      %v1844 = vsub.s32 0, %v1843
      %v1845 = vrot.slane %v1840, %v1844
      %1847 = vmatprep.subr.bf16.mxu0 0
      %1848 = vmatpush1.bf16.msra.mxu0 %v1837
      %1849 = vmatprep.subr.bf16.mxu0 0
      %1850 = vmatpush1.bf16.msra.mxu0 %v1838
      %1851 = vmatprep.subr.bf16.mxu0 0
      %1852 = vmatpush1.bf16.msra.mxu0 0
      %1853 = vmatprep.subr.bf16.mxu0 0
      %1854 = vmatpush1.bf16.msra.mxu0 0
      %1855 = vmatprep.subr.bf16.mxu0 0
      %1856 = vmatpush1.bf16.msra.mxu0 0
      %1857 = vmatprep.subr.bf16.mxu0 0
      %1858 = vmatpush1.bf16.msra.mxu0 0
      %1859 = vmatprep.subr.bf16.mxu0 0
      %1860 = vmatpush1.bf16.msra.mxu0 0
      %1861 = vmatprep.subr.bf16.mxu0 0
      %1862 = vmatpush1.bf16.msra.mxu0 0
      %1863 = vmatprep.subr.bf16.mxu0 0
      %1864 = vmatpush1.bf16.msra.mxu0 0
      %1865 = vmatprep.subr.bf16.mxu0 0
      %1866 = vmatpush1.bf16.msra.mxu0 0
      %1867 = vmatprep.subr.bf16.mxu0 0
      %1868 = vmatpush1.bf16.msra.mxu0 0
      %1869 = vmatprep.subr.bf16.mxu0 0
      %1870 = vmatpush1.bf16.msra.mxu0 0
      %1871 = vmatprep.subr.bf16.mxu0 0
      %1872 = vmatpush1.bf16.msra.mxu0 0
      %1873 = vmatprep.subr.bf16.mxu0 0
      %1874 = vmatpush1.bf16.msra.mxu0 0
      %1875 = vmatprep.subr.bf16.mxu0 0
      %1876 = vmatpush1.bf16.msra.mxu0 0
      %1877 = vmatprep.subr.bf16.mxu0 0
      %1878 = vmatpush1.bf16.msra.mxu0 0
      %1879 = vmatprep.mubr.bf16.mxu0 0
      %1880 = vmatmul.mubr.bf16.gmra.mrb[0].mxu0 %v782
      %v1881 = vpop.f32.mrb[0].mxu0
      %v1882 = vadd.f32 %v1845, %v1881
      %v1883 = vpop.f32.mrb[0].mxu0
      %v1884 = vpop.f32.mrb[0].mxu0
      %v1885 = vpop.f32.mrb[0].mxu0
      %1886 = vdwg.mxu0
      %v1887 = vmul.f32 %v1882, 0.35355338
      %s1888 = scalar_lea.vmem %s5, 96
      %v1889 = vld [vmem:[%s1888] sm:$0xff]
      %v1890 = vld [vmem:[%s1888 + $0x8] sm:$0xff]
      %v1891 = vld [vmem:[%s1888 + $0x10] sm:$0xff]
      %v1892 = vld [vmem:[%s1888 + $0x18] sm:$0xff]
      %v1893 = vpack.c.bf16 %v1890, %v1889
      %v1894 = vpack.c.bf16 %v1892, %v1891
      %s1895 = scalar_lea.vmem %s6, 3
      %v1896 = vld [vmem:[%s1895] sm:$0x1]
      %v1898 = vlaneseq
      %v1899 = vshrl.u32 %v1898, 7
      %v1900 = vsub.s32 0, %v1899
      %v1901 = vrot.slane %v1896, %v1900
      %1903 = vmatprep.subr.bf16.mxu0 0
      %1904 = vmatpush1.bf16.msra.mxu0 %v1893
      %1905 = vmatprep.subr.bf16.mxu0 0
      %1906 = vmatpush1.bf16.msra.mxu0 %v1894
      %1907 = vmatprep.subr.bf16.mxu0 0
      %1908 = vmatpush1.bf16.msra.mxu0 0
      %1909 = vmatprep.subr.bf16.mxu0 0
      %1910 = vmatpush1.bf16.msra.mxu0 0
      %1911 = vmatprep.subr.bf16.mxu0 0
      %1912 = vmatpush1.bf16.msra.mxu0 0
      %1913 = vmatprep.subr.bf16.mxu0 0
      %1914 = vmatpush1.bf16.msra.mxu0 0
      %1915 = vmatprep.subr.bf16.mxu0 0
      %1916 = vmatpush1.bf16.msra.mxu0 0
      %1917 = vmatprep.subr.bf16.mxu0 0
      %1918 = vmatpush1.bf16.msra.mxu0 0
      %1919 = vmatprep.subr.bf16.mxu0 0
      %1920 = vmatpush1.bf16.msra.mxu0 0
      %1921 = vmatprep.subr.bf16.mxu0 0
      %1922 = vmatpush1.bf16.msra.mxu0 0
      %1923 = vmatprep.subr.bf16.mxu0 0
      %1924 = vmatpush1.bf16.msra.mxu0 0
      %1925 = vmatprep.subr.bf16.mxu0 0
      %1926 = vmatpush1.bf16.msra.mxu0 0
      %1927 = vmatprep.subr.bf16.mxu0 0
      %1928 = vmatpush1.bf16.msra.mxu0 0
      %1929 = vmatprep.subr.bf16.mxu0 0
      %1930 = vmatpush1.bf16.msra.mxu0 0
      %1931 = vmatprep.subr.bf16.mxu0 0
      %1932 = vmatpush1.bf16.msra.mxu0 0
      %1933 = vmatprep.subr.bf16.mxu0 0
      %1934 = vmatpush1.bf16.msra.mxu0 0
      %1935 = vmatprep.mubr.bf16.mxu0 0
      %1936 = vmatmul.mubr.bf16.gmra.mrb[0].mxu0 %v782
      %v1937 = vpop.f32.mrb[0].mxu0
      %v1938 = vadd.f32 %v1901, %v1937
      %v1939 = vpop.f32.mrb[0].mxu0
      %v1940 = vpop.f32.mrb[0].mxu0
      %v1941 = vpop.f32.mrb[0].mxu0
      %1942 = vdwg.mxu0
      %s1943 = scalar_lea.vmem %s7, 96
      %v1944 = vld [vmem:[%s1943] sm:$0xff]
      %v1945 = vld [vmem:[%s1943 + $0x8] sm:$0xff]
      %v1946 = vld [vmem:[%s1943 + $0x10] sm:$0xff]
      %v1947 = vld [vmem:[%s1943 + $0x18] sm:$0xff]
      %v1948 = vpack.c.bf16 %v1945, %v1944
      %v1949 = vpack.c.bf16 %v1947, %v1946
      %s1950 = scalar_lea.vmem %s8, 3
      %v1951 = vld [vmem:[%s1950] sm:$0x1]
      %v1953 = vlaneseq
      %v1954 = vshrl.u32 %v1953, 7
      %v1955 = vsub.s32 0, %v1954
      %v1956 = vrot.slane %v1951, %v1955
      %1958 = vmatprep.subr.bf16.mxu0 0
      %1959 = vmatpush1.bf16.msra.mxu0 %v1948
      %1960 = vmatprep.subr.bf16.mxu0 0
      %1961 = vmatpush1.bf16.msra.mxu0 %v1949
      %1962 = vmatprep.subr.bf16.mxu0 0
      %1963 = vmatpush1.bf16.msra.mxu0 0
      %1964 = vmatprep.subr.bf16.mxu0 0
      %1965 = vmatpush1.bf16.msra.mxu0 0
      %1966 = vmatprep.subr.bf16.mxu0 0
      %1967 = vmatpush1.bf16.msra.mxu0 0
      %1968 = vmatprep.subr.bf16.mxu0 0
      %1969 = vmatpush1.bf16.msra.mxu0 0
      %1970 = vmatprep.subr.bf16.mxu0 0
      %1971 = vmatpush1.bf16.msra.mxu0 0
      %1972 = vmatprep.subr.bf16.mxu0 0
      %1973 = vmatpush1.bf16.msra.mxu0 0
      %1974 = vmatprep.subr.bf16.mxu0 0
      %1975 = vmatpush1.bf16.msra.mxu0 0
      %1976 = vmatprep.subr.bf16.mxu0 0
      %1977 = vmatpush1.bf16.msra.mxu0 0
      %1978 = vmatprep.subr.bf16.mxu0 0
      %1979 = vmatpush1.bf16.msra.mxu0 0
      %1980 = vmatprep.subr.bf16.mxu0 0
      %1981 = vmatpush1.bf16.msra.mxu0 0
      %1982 = vmatprep.subr.bf16.mxu0 0
      %1983 = vmatpush1.bf16.msra.mxu0 0
      %1984 = vmatprep.subr.bf16.mxu0 0
      %1985 = vmatpush1.bf16.msra.mxu0 0
      %1986 = vmatprep.subr.bf16.mxu0 0
      %1987 = vmatpush1.bf16.msra.mxu0 0
      %1988 = vmatprep.subr.bf16.mxu0 0
      %1989 = vmatpush1.bf16.msra.mxu0 0
      %1990 = vmatprep.mubr.bf16.mxu0 0
      %1991 = vmatmul.mubr.bf16.gmra.mrb[0].mxu0 %v782
      %v1992 = vpop.f32.mrb[0].mxu0
      %v1993 = vadd.f32 %v1956, %v1992
      %v1994 = vpop.f32.mrb[0].mxu0
      %v1995 = vpop.f32.mrb[0].mxu0
      %v1996 = vpop.f32.mrb[0].mxu0
      %1997 = vdwg.mxu0
      %1998 = vxpose.xlu0.b32.start [1/16] %v1938, 128
      %1999 = vxpose.xlu0.b32.cont [2/16] 0.0, 128
      %2000 = vxpose.xlu0.b32.cont [3/16] 0.0, 128
      %2001 = vxpose.xlu0.b32.cont [4/16] 0.0, 128
      %2002 = vxpose.xlu0.b32.cont [5/16] 0.0, 128
      %2003 = vxpose.xlu0.b32.cont [6/16] 0.0, 128
      %2004 = vxpose.xlu0.b32.cont [7/16] 0.0, 128
      %2005 = vxpose.xlu0.b32.cont [8/16] 0.0, 128
      %2006 = vxpose.xlu0.b32.cont [9/16] 0.0, 128
      %2007 = vxpose.xlu0.b32.cont [10/16] 0.0, 128
      %2008 = vxpose.xlu0.b32.cont [11/16] 0.0, 128
      %2009 = vxpose.xlu0.b32.cont [12/16] 0.0, 128
      %2010 = vxpose.xlu0.b32.cont [13/16] 0.0, 128
      %2011 = vxpose.xlu0.b32.cont [14/16] 0.0, 128
      %2012 = vxpose.xlu0.b32.cont [15/16] 0.0, 128
      %2013 = vxpose.xlu0.b32.end [16/16] 0.0, 128
      %v2014 = vpop.trf.xlu0
      %v2015 = vpop.trf.xlu0
      %v2016 = vpop.trf.xlu0
      %v2017 = vpop.trf.xlu0
      %v2018 = vpop.trf.xlu0
      %v2019 = vpop.trf.xlu0
      %v2020 = vpop.trf.xlu0
      %v2021 = vpop.trf.xlu0
      %v2022 = vpop.trf.xlu0
      %v2023 = vpop.trf.xlu0
      %v2024 = vpop.trf.xlu0
      %v2025 = vpop.trf.xlu0
      %v2026 = vpop.trf.xlu0
      %v2027 = vpop.trf.xlu0
      %v2028 = vpop.trf.xlu0
      %v2029 = vpop.trf.xlu0
      %v2030 = vpack.c.bf16 %v1887, %v1887
      %v2031 = vpack.c.bf16 %v2014, %v2014
      %v2033 = vsel %vm965, %v2030, 0
      %v2036 = vsel %vm969, %v2031, 0
      %2038 = vmatprep.subr.bf16.mxu0 0
      %2039 = vmatpush1.bf16.msra.mxu0 %v2036
      %2040 = vmatprep.subr.bf16.mxu0 0
      %2041 = vmatpush1.bf16.msra.mxu0 0
      %2042 = vmatprep.subr.bf16.mxu0 0
      %2043 = vmatpush1.bf16.msra.mxu0 0
      %2044 = vmatprep.subr.bf16.mxu0 0
      %2045 = vmatpush1.bf16.msra.mxu0 0
      %2046 = vmatprep.subr.bf16.mxu0 0
      %2047 = vmatpush1.bf16.msra.mxu0 0
      %2048 = vmatprep.subr.bf16.mxu0 0
      %2049 = vmatpush1.bf16.msra.mxu0 0
      %2050 = vmatprep.subr.bf16.mxu0 0
      %2051 = vmatpush1.bf16.msra.mxu0 0
      %2052 = vmatprep.subr.bf16.mxu0 0
      %2053 = vmatpush1.bf16.msra.mxu0 0
      %2054 = vmatprep.subr.bf16.mxu0 0
      %2055 = vmatpush1.bf16.msra.mxu0 0
      %2056 = vmatprep.subr.bf16.mxu0 0
      %2057 = vmatpush1.bf16.msra.mxu0 0
      %2058 = vmatprep.subr.bf16.mxu0 0
      %2059 = vmatpush1.bf16.msra.mxu0 0
      %2060 = vmatprep.subr.bf16.mxu0 0
      %2061 = vmatpush1.bf16.msra.mxu0 0
      %2062 = vmatprep.subr.bf16.mxu0 0
      %2063 = vmatpush1.bf16.msra.mxu0 0
      %2064 = vmatprep.subr.bf16.mxu0 0
      %2065 = vmatpush1.bf16.msra.mxu0 0
      %2066 = vmatprep.subr.bf16.mxu0 0
      %2067 = vmatpush1.bf16.msra.mxu0 0
      %2068 = vmatprep.subr.bf16.mxu0 0
      %2069 = vmatpush1.bf16.msra.mxu0 0
      %2070 = vmatprep.mubr.bf16.mxu0 0
      %2071 = vmatmul.mubr.bf16.gmra.mrb[0].mxu0 %v2033
      %v2072 = vpop.f32.mrb[0].mxu0
      %v2073 = vadd.f32 0.0, %v2072
      %v2074 = vpop.f32.mrb[0].mxu0
      %v2075 = vpop.f32.mrb[0].mxu0
      %v2076 = vpop.f32.mrb[0].mxu0
      %2077 = vdwg.mxu0
      %v2078 = vsel %vm965, %v2073, -inf
      %2079 = vmax.xlane.f32.xlu0 %v2078
      %v2080 = vpop.xlane.xlu0 %2079
      %v2081 = vsub.f32 %v2073, %v2080
      %v2082 = vmul.f32 %v2081, 1.442695
      %v2083 = vpow.pop %v2082
      %v2084 = vsel %vm965, %v2083, 0.0
      %2085 = vadd.xlane.f32.xlu0 %v2084
      %v2086 = vpop.xlane.xlu0 %2085
      %v2087 = vrcp.pop %v2086
      %v2088 = vmul.f32 %v2083, %v2087
      %v2089 = vpack.c.bf16 %v2088, %v2088
      %v2090 = vpack.c.bf16 %v1993, %v1993
      %v2092 = vsel %vm965, %v2089, 0
      %v2095 = vsel %vm969, %v2090, 0
      %2097 = vmatprep.subr.bf16.mxu0 0
      %2098 = vmatpush1.bf16.msra.mxu0 %v2095
      %2099 = vmatprep.subr.bf16.mxu0 0
      %2100 = vmatpush1.bf16.msra.mxu0 0
      %2101 = vmatprep.subr.bf16.mxu0 0
      %2102 = vmatpush1.bf16.msra.mxu0 0
      %2103 = vmatprep.subr.bf16.mxu0 0
      %2104 = vmatpush1.bf16.msra.mxu0 0
      %2105 = vmatprep.subr.bf16.mxu0 0
      %2106 = vmatpush1.bf16.msra.mxu0 0
      %2107 = vmatprep.subr.bf16.mxu0 0
      %2108 = vmatpush1.bf16.msra.mxu0 0
      %2109 = vmatprep.subr.bf16.mxu0 0
      %2110 = vmatpush1.bf16.msra.mxu0 0
      %2111 = vmatprep.subr.bf16.mxu0 0
      %2112 = vmatpush1.bf16.msra.mxu0 0
      %2113 = vmatprep.subr.bf16.mxu0 0
      %2114 = vmatpush1.bf16.msra.mxu0 0
      %2115 = vmatprep.subr.bf16.mxu0 0
      %2116 = vmatpush1.bf16.msra.mxu0 0
      %2117 = vmatprep.subr.bf16.mxu0 0
      %2118 = vmatpush1.bf16.msra.mxu0 0
      %2119 = vmatprep.subr.bf16.mxu0 0
      %2120 = vmatpush1.bf16.msra.mxu0 0
      %2121 = vmatprep.subr.bf16.mxu0 0
      %2122 = vmatpush1.bf16.msra.mxu0 0
      %2123 = vmatprep.subr.bf16.mxu0 0
      %2124 = vmatpush1.bf16.msra.mxu0 0
      %2125 = vmatprep.subr.bf16.mxu0 0
      %2126 = vmatpush1.bf16.msra.mxu0 0
      %2127 = vmatprep.subr.bf16.mxu0 0
      %2128 = vmatpush1.bf16.msra.mxu0 0
      %2129 = vmatprep.mubr.bf16.mxu0 0
      %2130 = vmatmul.mubr.bf16.gmra.mrb[0].mxu0 %v2092
      %v2131 = vpop.f32.mrb[0].mxu0
      %v2132 = vadd.f32 0.0, %v2131
      %v2133 = vpop.f32.mrb[0].mxu0
      %v2134 = vpop.f32.mrb[0].mxu0
      %v2135 = vpop.f32.mrb[0].mxu0
      %2136 = vdwg.mxu0
      %s2137 = scalar_lea.vmem %s9, 24
      %v2138 = vld [vmem:[%s2137] sm:$0xff]
      %v2139 = vpack.c.bf16 %v2132, %v2132
      %v2140 = vpack.c.bf16 %v2138, %v2138
      %v2142 = vsel %vm965, %v2139, 0
      %v2145 = vsel %vm969, %v2140, 0
      %2147 = vmatprep.subr.bf16.mxu0 0
      %2148 = vmatpush1.bf16.msra.mxu0 %v2145
      %2149 = vmatprep.subr.bf16.mxu0 0
      %2150 = vmatpush1.bf16.msra.mxu0 0
      %2151 = vmatprep.subr.bf16.mxu0 0
      %2152 = vmatpush1.bf16.msra.mxu0 0
      %2153 = vmatprep.subr.bf16.mxu0 0
      %2154 = vmatpush1.bf16.msra.mxu0 0
      %2155 = vmatprep.subr.bf16.mxu0 0
      %2156 = vmatpush1.bf16.msra.mxu0 0
      %2157 = vmatprep.subr.bf16.mxu0 0
      %2158 = vmatpush1.bf16.msra.mxu0 0
      %2159 = vmatprep.subr.bf16.mxu0 0
      %2160 = vmatpush1.bf16.msra.mxu0 0
      %2161 = vmatprep.subr.bf16.mxu0 0
      %2162 = vmatpush1.bf16.msra.mxu0 0
      %2163 = vmatprep.subr.bf16.mxu0 0
      %2164 = vmatpush1.bf16.msra.mxu0 0
      %2165 = vmatprep.subr.bf16.mxu0 0
      %2166 = vmatpush1.bf16.msra.mxu0 0
      %2167 = vmatprep.subr.bf16.mxu0 0
      %2168 = vmatpush1.bf16.msra.mxu0 0
      %2169 = vmatprep.subr.bf16.mxu0 0
      %2170 = vmatpush1.bf16.msra.mxu0 0
      %2171 = vmatprep.subr.bf16.mxu0 0
      %2172 = vmatpush1.bf16.msra.mxu0 0
      %2173 = vmatprep.subr.bf16.mxu0 0
      %2174 = vmatpush1.bf16.msra.mxu0 0
      %2175 = vmatprep.subr.bf16.mxu0 0
      %2176 = vmatpush1.bf16.msra.mxu0 0
      %2177 = vmatprep.subr.bf16.mxu0 0
      %2178 = vmatpush1.bf16.msra.mxu0 0
      %2179 = vmatprep.mubr.bf16.mxu0 0
      %2180 = vmatmul.mubr.bf16.gmra.mrb[0].mxu0 %v2142
      %v2181 = vpop.f32.mrb[0].mxu0
      %v2182 = vadd.f32 0.0, %v2181
      %v2183 = vpop.f32.mrb[0].mxu0
      %v2184 = vpop.f32.mrb[0].mxu0
      %v2185 = vpop.f32.mrb[0].mxu0
      %2186 = vdwg.mxu0
      %v2187 = vadd.f32 %v1831, %v2182
      %v2188 = vld [vmem:[%s10] sm:$0x1]
      %v2190 = vlaneseq
      %v2191 = vshrl.u32 %v2190, 7
      %v2192 = vsub.s32 0, %v2191
      %v2193 = vrot.slane %v2188, %v2192
      %v2195 = vadd.f32 %v2187, %v2193
      %v2196 = vadd.f32 %v2195, %v761
      %v2197 = vld [vmem:[%s15] sm:$0x1]
      %v2198 = vld [vmem:[%s16] sm:$0x1]
      %v2199 = vsel %vm780, %v2196, 0.0
      %2200 = vadd.xlane.f32.xlu0 %v2199
      %v2201 = vpop.xlane.xlu0 %2200
      %v2202 = vrcp.pop 32.0
      %v2203 = vmul.f32 %v2201, %v2202
      %v2204 = vsub.f32 %v2196, %v2203
      %v2205 = vmul.f32 %v2204, %v2204
      %v2206 = vsel %vm780, %v2205, 0.0
      %2207 = vadd.xlane.f32.xlu0 %v2206
      %v2208 = vpop.xlane.xlu0 %2207
      %v2209 = vmul.f32 %v2208, %v2202
      %v2210 = vadd.f32 %v2209, 1e-05
      %v2211 = vrsqrt.pop %v2210
      %v2212 = vmul.f32 %v2204, %v2211
      %v2214 = vlaneseq
      %v2215 = vshrl.u32 %v2214, 7
      %v2216 = vsub.s32 0, %v2215
      %v2217 = vrot.slane %v2197, %v2216
      %v2219 = vmul.f32 %v2212, %v2217
      %v2221 = vlaneseq
      %v2222 = vshrl.u32 %v2221, 7
      %v2223 = vsub.s32 0, %v2222
      %v2224 = vrot.slane %v2198, %v2223
      %v2226 = vadd.f32 %v2219, %v2224
      %v2227 = vpack.c.bf16 %v2226, %v2226
      %v2228 = vld [vmem:[%s11] sm:$0xff]
      %v2229 = vld [vmem:[%s11 + $0x8] sm:$0xff]
      %v2230 = vld [vmem:[%s11 + $0x10] sm:$0xff]
      %v2231 = vld [vmem:[%s11 + $0x18] sm:$0xff]
      %v2232 = vpack.c.bf16 %v2229, %v2228
      %v2233 = vpack.c.bf16 %v2231, %v2230
      %v2234 = vld [vmem:[%s12] sm:$0x1]
      %v2236 = vlaneseq
      %v2237 = vshrl.u32 %v2236, 7
      %v2238 = vsub.s32 0, %v2237
      %v2239 = vrot.slane %v2234, %v2238
      %v2242 = vsel %vm780, %v2227, 0
      %2244 = vmatprep.subr.bf16.mxu0 0
      %2245 = vmatpush1.bf16.msra.mxu0 %v2232
      %2246 = vmatprep.subr.bf16.mxu0 0
      %2247 = vmatpush1.bf16.msra.mxu0 %v2233
      %2248 = vmatprep.subr.bf16.mxu0 0
      %2249 = vmatpush1.bf16.msra.mxu0 0
      %2250 = vmatprep.subr.bf16.mxu0 0
      %2251 = vmatpush1.bf16.msra.mxu0 0
      %2252 = vmatprep.subr.bf16.mxu0 0
      %2253 = vmatpush1.bf16.msra.mxu0 0
      %2254 = vmatprep.subr.bf16.mxu0 0
      %2255 = vmatpush1.bf16.msra.mxu0 0
      %2256 = vmatprep.subr.bf16.mxu0 0
      %2257 = vmatpush1.bf16.msra.mxu0 0
      %2258 = vmatprep.subr.bf16.mxu0 0
      %2259 = vmatpush1.bf16.msra.mxu0 0
      %2260 = vmatprep.subr.bf16.mxu0 0
      %2261 = vmatpush1.bf16.msra.mxu0 0
      %2262 = vmatprep.subr.bf16.mxu0 0
      %2263 = vmatpush1.bf16.msra.mxu0 0
      %2264 = vmatprep.subr.bf16.mxu0 0
      %2265 = vmatpush1.bf16.msra.mxu0 0
      %2266 = vmatprep.subr.bf16.mxu0 0
      %2267 = vmatpush1.bf16.msra.mxu0 0
      %2268 = vmatprep.subr.bf16.mxu0 0
      %2269 = vmatpush1.bf16.msra.mxu0 0
      %2270 = vmatprep.subr.bf16.mxu0 0
      %2271 = vmatpush1.bf16.msra.mxu0 0
      %2272 = vmatprep.subr.bf16.mxu0 0
      %2273 = vmatpush1.bf16.msra.mxu0 0
      %2274 = vmatprep.subr.bf16.mxu0 0
      %2275 = vmatpush1.bf16.msra.mxu0 0
      %2276 = vmatprep.mubr.bf16.mxu0 0
      %2277 = vmatmul.mubr.bf16.gmra.mrb[0].mxu0 %v2242
      %v2278 = vpop.f32.mrb[0].mxu0
      %v2279 = vadd.f32 %v2239, %v2278
      %v2280 = vpop.f32.mrb[0].mxu0
      %v2281 = vpop.f32.mrb[0].mxu0
      %v2282 = vpop.f32.mrb[0].mxu0
      %2283 = vdwg.mxu0
      %v2284 = vmax.f32 %v2279, 0.0
      %v2285 = vld [vmem:[%s13] sm:$0xff]
      %v2286 = vld [vmem:[%s13 + $0x8] sm:$0xff]
      %v2287 = vld [vmem:[%s13 + $0x10] sm:$0xff]
      %v2288 = vld [vmem:[%s13 + $0x18] sm:$0xff]
      %v2289 = vpack.c.bf16 %v2284, %v2284
      %v2290 = vpack.c.bf16 %v2286, %v2285
      %v2291 = vpack.c.bf16 %v2288, %v2287
      %v2292 = vld [vmem:[%s14] sm:$0x1]
      %v2294 = vlaneseq
      %v2295 = vshrl.u32 %v2294, 7
      %v2296 = vsub.s32 0, %v2295
      %v2297 = vrot.slane %v2292, %v2296
      %v2300 = vsel %vm780, %v2289, 0
      %2302 = vmatprep.subr.bf16.mxu0 0
      %2303 = vmatpush1.bf16.msra.mxu0 %v2290
      %2304 = vmatprep.subr.bf16.mxu0 0
      %2305 = vmatpush1.bf16.msra.mxu0 %v2291
      %2306 = vmatprep.subr.bf16.mxu0 0
      %2307 = vmatpush1.bf16.msra.mxu0 0
      %2308 = vmatprep.subr.bf16.mxu0 0
      %2309 = vmatpush1.bf16.msra.mxu0 0
      %2310 = vmatprep.subr.bf16.mxu0 0
      %2311 = vmatpush1.bf16.msra.mxu0 0
      %2312 = vmatprep.subr.bf16.mxu0 0
      %2313 = vmatpush1.bf16.msra.mxu0 0
      %2314 = vmatprep.subr.bf16.mxu0 0
      %2315 = vmatpush1.bf16.msra.mxu0 0
      %2316 = vmatprep.subr.bf16.mxu0 0
      %2317 = vmatpush1.bf16.msra.mxu0 0
      %2318 = vmatprep.subr.bf16.mxu0 0
      %2319 = vmatpush1.bf16.msra.mxu0 0
      %2320 = vmatprep.subr.bf16.mxu0 0
      %2321 = vmatpush1.bf16.msra.mxu0 0
      %2322 = vmatprep.subr.bf16.mxu0 0
      %2323 = vmatpush1.bf16.msra.mxu0 0
      %2324 = vmatprep.subr.bf16.mxu0 0
      %2325 = vmatpush1.bf16.msra.mxu0 0
      %2326 = vmatprep.subr.bf16.mxu0 0
      %2327 = vmatpush1.bf16.msra.mxu0 0
      %2328 = vmatprep.subr.bf16.mxu0 0
      %2329 = vmatpush1.bf16.msra.mxu0 0
      %2330 = vmatprep.subr.bf16.mxu0 0
      %2331 = vmatpush1.bf16.msra.mxu0 0
      %2332 = vmatprep.subr.bf16.mxu0 0
      %2333 = vmatpush1.bf16.msra.mxu0 0
      %2334 = vmatprep.mubr.bf16.mxu0 0
      %2335 = vmatmul.mubr.bf16.gmra.mrb[0].mxu0 %v2300
      %v2336 = vpop.f32.mrb[0].mxu0
      %v2337 = vadd.f32 %v2297, %v2336
      %v2338 = vpop.f32.mrb[0].mxu0
      %v2339 = vpop.f32.mrb[0].mxu0
      %v2340 = vpop.f32.mrb[0].mxu0
      %2341 = vdwg.mxu0
      %v2342 = vadd.f32 %v2337, %v2226
      %v2343 = vld [vmem:[%s17] sm:$0x1]
      %v2344 = vld [vmem:[%s18] sm:$0x1]
      %v2345 = vsel %vm780, %v2342, 0.0
      %2346 = vadd.xlane.f32.xlu0 %v2345
      %v2347 = vpop.xlane.xlu0 %2346
      %v2348 = vmul.f32 %v2347, %v2202
      %v2349 = vsub.f32 %v2342, %v2348
      %v2350 = vmul.f32 %v2349, %v2349
      %v2351 = vsel %vm780, %v2350, 0.0
      %2352 = vadd.xlane.f32.xlu0 %v2351
      %v2353 = vpop.xlane.xlu0 %2352
      %v2354 = vmul.f32 %v2353, %v2202
      %v2355 = vadd.f32 %v2354, 1e-05
      %v2356 = vrsqrt.pop %v2355
      %v2357 = vmul.f32 %v2349, %v2356
      %v2359 = vlaneseq
      %v2360 = vshrl.u32 %v2359, 7
      %v2361 = vsub.s32 0, %v2360
      %v2362 = vrot.slane %v2343, %v2361
      %v2364 = vmul.f32 %v2357, %v2362
      %v2366 = vlaneseq
      %v2367 = vshrl.u32 %v2366, 7
      %v2368 = vsub.s32 0, %v2367
      %v2369 = vrot.slane %v2344, %v2368
      %v2371 = vadd.f32 %v2364, %v2369
      %v2372 = vpack.c.bf16 %v2371, %v2371
      %s2373 = scalar_lea.vmem %s3, 128
      %v2374 = vld [vmem:[%s2373] sm:$0xff]
      %v2375 = vld [vmem:[%s2373 + $0x8] sm:$0xff]
      %v2376 = vld [vmem:[%s2373 + $0x10] sm:$0xff]
      %v2377 = vld [vmem:[%s2373 + $0x18] sm:$0xff]
      %v2378 = vpack.c.bf16 %v2375, %v2374
      %v2379 = vpack.c.bf16 %v2377, %v2376
      %s2380 = scalar_lea.vmem %s4, 4
      %v2381 = vld [vmem:[%s2380] sm:$0x1]
      %v2383 = vlaneseq
      %v2384 = vshrl.u32 %v2383, 7
      %v2385 = vsub.s32 0, %v2384
      %v2386 = vrot.slane %v2381, %v2385
      %v2389 = vsel %vm780, %v2372, 0
      %2391 = vmatprep.subr.bf16.mxu0 0
      %2392 = vmatpush1.bf16.msra.mxu0 %v2378
      %2393 = vmatprep.subr.bf16.mxu0 0
      %2394 = vmatpush1.bf16.msra.mxu0 %v2379
      %2395 = vmatprep.subr.bf16.mxu0 0
      %2396 = vmatpush1.bf16.msra.mxu0 0
      %2397 = vmatprep.subr.bf16.mxu0 0
      %2398 = vmatpush1.bf16.msra.mxu0 0
      %2399 = vmatprep.subr.bf16.mxu0 0
      %2400 = vmatpush1.bf16.msra.mxu0 0
      %2401 = vmatprep.subr.bf16.mxu0 0
      %2402 = vmatpush1.bf16.msra.mxu0 0
      %2403 = vmatprep.subr.bf16.mxu0 0
      %2404 = vmatpush1.bf16.msra.mxu0 0
      %2405 = vmatprep.subr.bf16.mxu0 0
      %2406 = vmatpush1.bf16.msra.mxu0 0
      %2407 = vmatprep.subr.bf16.mxu0 0
      %2408 = vmatpush1.bf16.msra.mxu0 0
      %2409 = vmatprep.subr.bf16.mxu0 0
      %2410 = vmatpush1.bf16.msra.mxu0 0
      %2411 = vmatprep.subr.bf16.mxu0 0
      %2412 = vmatpush1.bf16.msra.mxu0 0
      %2413 = vmatprep.subr.bf16.mxu0 0
      %2414 = vmatpush1.bf16.msra.mxu0 0
      %2415 = vmatprep.subr.bf16.mxu0 0
      %2416 = vmatpush1.bf16.msra.mxu0 0
      %2417 = vmatprep.subr.bf16.mxu0 0
      %2418 = vmatpush1.bf16.msra.mxu0 0
      %2419 = vmatprep.subr.bf16.mxu0 0
      %2420 = vmatpush1.bf16.msra.mxu0 0
      %2421 = vmatprep.subr.bf16.mxu0 0
      %2422 = vmatpush1.bf16.msra.mxu0 0
      %2423 = vmatprep.mubr.bf16.mxu0 0
      %2424 = vmatmul.mubr.bf16.gmra.mrb[0].mxu0 %v2389
      %v2425 = vpop.f32.mrb[0].mxu0
      %v2426 = vadd.f32 %v2386, %v2425
      %v2427 = vpop.f32.mrb[0].mxu0
      %v2428 = vpop.f32.mrb[0].mxu0
      %v2429 = vpop.f32.mrb[0].mxu0
      %2430 = vdwg.mxu0
      %v2431 = vmul.f32 %v2426, 0.35355338
      %s2432 = scalar_lea.vmem %s5, 128
      %v2433 = vld [vmem:[%s2432] sm:$0xff]
      %v2434 = vld [vmem:[%s2432 + $0x8] sm:$0xff]
      %v2435 = vld [vmem:[%s2432 + $0x10] sm:$0xff]
      %v2436 = vld [vmem:[%s2432 + $0x18] sm:$0xff]
      %v2437 = vpack.c.bf16 %v2434, %v2433
      %v2438 = vpack.c.bf16 %v2436, %v2435
      %s2439 = scalar_lea.vmem %s6, 4
      %v2440 = vld [vmem:[%s2439] sm:$0x1]
      %v2442 = vlaneseq
      %v2443 = vshrl.u32 %v2442, 7
      %v2444 = vsub.s32 0, %v2443
      %v2445 = vrot.slane %v2440, %v2444
      %2447 = vmatprep.subr.bf16.mxu0 0
      %2448 = vmatpush1.bf16.msra.mxu0 %v2437
      %2449 = vmatprep.subr.bf16.mxu0 0
      %2450 = vmatpush1.bf16.msra.mxu0 %v2438
      %2451 = vmatprep.subr.bf16.mxu0 0
      %2452 = vmatpush1.bf16.msra.mxu0 0
      %2453 = vmatprep.subr.bf16.mxu0 0
      %2454 = vmatpush1.bf16.msra.mxu0 0
      %2455 = vmatprep.subr.bf16.mxu0 0
      %2456 = vmatpush1.bf16.msra.mxu0 0
      %2457 = vmatprep.subr.bf16.mxu0 0
      %2458 = vmatpush1.bf16.msra.mxu0 0
      %2459 = vmatprep.subr.bf16.mxu0 0
      %2460 = vmatpush1.bf16.msra.mxu0 0
      %2461 = vmatprep.subr.bf16.mxu0 0
      %2462 = vmatpush1.bf16.msra.mxu0 0
      %2463 = vmatprep.subr.bf16.mxu0 0
      %2464 = vmatpush1.bf16.msra.mxu0 0
      %2465 = vmatprep.subr.bf16.mxu0 0
      %2466 = vmatpush1.bf16.msra.mxu0 0
      %2467 = vmatprep.subr.bf16.mxu0 0
      %2468 = vmatpush1.bf16.msra.mxu0 0
      %2469 = vmatprep.subr.bf16.mxu0 0
      %2470 = vmatpush1.bf16.msra.mxu0 0
      %2471 = vmatprep.subr.bf16.mxu0 0
      %2472 = vmatpush1.bf16.msra.mxu0 0
      %2473 = vmatprep.subr.bf16.mxu0 0
      %2474 = vmatpush1.bf16.msra.mxu0 0
      %2475 = vmatprep.subr.bf16.mxu0 0
      %2476 = vmatpush1.bf16.msra.mxu0 0
      %2477 = vmatprep.subr.bf16.mxu0 0
      %2478 = vmatpush1.bf16.msra.mxu0 0
      %2479 = vmatprep.mubr.bf16.mxu0 0
      %2480 = vmatmul.mubr.bf16.gmra.mrb[0].mxu0 %v2389
      %v2481 = vpop.f32.mrb[0].mxu0
      %v2482 = vadd.f32 %v2445, %v2481
      %v2483 = vpop.f32.mrb[0].mxu0
      %v2484 = vpop.f32.mrb[0].mxu0
      %v2485 = vpop.f32.mrb[0].mxu0
      %2486 = vdwg.mxu0
      %s2487 = scalar_lea.vmem %s7, 128
      %v2488 = vld [vmem:[%s2487] sm:$0xff]
      %v2489 = vld [vmem:[%s2487 + $0x8] sm:$0xff]
      %v2490 = vld [vmem:[%s2487 + $0x10] sm:$0xff]
      %v2491 = vld [vmem:[%s2487 + $0x18] sm:$0xff]
      %v2492 = vpack.c.bf16 %v2489, %v2488
      %v2493 = vpack.c.bf16 %v2491, %v2490
      %s2494 = scalar_lea.vmem %s8, 4
      %v2495 = vld [vmem:[%s2494] sm:$0x1]
      %v2497 = vlaneseq
      %v2498 = vshrl.u32 %v2497, 7
      %v2499 = vsub.s32 0, %v2498
      %v2500 = vrot.slane %v2495, %v2499
      %2502 = vmatprep.subr.bf16.mxu0 0
      %2503 = vmatpush1.bf16.msra.mxu0 %v2492
      %2504 = vmatprep.subr.bf16.mxu0 0
      %2505 = vmatpush1.bf16.msra.mxu0 %v2493
      %2506 = vmatprep.subr.bf16.mxu0 0
      %2507 = vmatpush1.bf16.msra.mxu0 0
      %2508 = vmatprep.subr.bf16.mxu0 0
      %2509 = vmatpush1.bf16.msra.mxu0 0
      %2510 = vmatprep.subr.bf16.mxu0 0
      %2511 = vmatpush1.bf16.msra.mxu0 0
      %2512 = vmatprep.subr.bf16.mxu0 0
      %2513 = vmatpush1.bf16.msra.mxu0 0
      %2514 = vmatprep.subr.bf16.mxu0 0
      %2515 = vmatpush1.bf16.msra.mxu0 0
      %2516 = vmatprep.subr.bf16.mxu0 0
      %2517 = vmatpush1.bf16.msra.mxu0 0
      %2518 = vmatprep.subr.bf16.mxu0 0
      %2519 = vmatpush1.bf16.msra.mxu0 0
      %2520 = vmatprep.subr.bf16.mxu0 0
      %2521 = vmatpush1.bf16.msra.mxu0 0
      %2522 = vmatprep.subr.bf16.mxu0 0
      %2523 = vmatpush1.bf16.msra.mxu0 0
      %2524 = vmatprep.subr.bf16.mxu0 0
      %2525 = vmatpush1.bf16.msra.mxu0 0
      %2526 = vmatprep.subr.bf16.mxu0 0
      %2527 = vmatpush1.bf16.msra.mxu0 0
      %2528 = vmatprep.subr.bf16.mxu0 0
      %2529 = vmatpush1.bf16.msra.mxu0 0
      %2530 = vmatprep.subr.bf16.mxu0 0
      %2531 = vmatpush1.bf16.msra.mxu0 0
      %2532 = vmatprep.subr.bf16.mxu0 0
      %2533 = vmatpush1.bf16.msra.mxu0 0
      %2534 = vmatprep.mubr.bf16.mxu0 0
      %2535 = vmatmul.mubr.bf16.gmra.mrb[0].mxu0 %v2389
      %v2536 = vpop.f32.mrb[0].mxu0
      %v2537 = vadd.f32 %v2500, %v2536
      %v2538 = vpop.f32.mrb[0].mxu0
      %v2539 = vpop.f32.mrb[0].mxu0
      %v2540 = vpop.f32.mrb[0].mxu0
      %2541 = vdwg.mxu0
      %2542 = vxpose.xlu0.b32.start [1/16] %v2482, 128
      %2543 = vxpose.xlu0.b32.cont [2/16] 0.0, 128
      %2544 = vxpose.xlu0.b32.cont [3/16] 0.0, 128
      %2545 = vxpose.xlu0.b32.cont [4/16] 0.0, 128
      %2546 = vxpose.xlu0.b32.cont [5/16] 0.0, 128
      %2547 = vxpose.xlu0.b32.cont [6/16] 0.0, 128
      %2548 = vxpose.xlu0.b32.cont [7/16] 0.0, 128
      %2549 = vxpose.xlu0.b32.cont [8/16] 0.0, 128
      %2550 = vxpose.xlu0.b32.cont [9/16] 0.0, 128
      %2551 = vxpose.xlu0.b32.cont [10/16] 0.0, 128
      %2552 = vxpose.xlu0.b32.cont [11/16] 0.0, 128
      %2553 = vxpose.xlu0.b32.cont [12/16] 0.0, 128
      %2554 = vxpose.xlu0.b32.cont [13/16] 0.0, 128
      %2555 = vxpose.xlu0.b32.cont [14/16] 0.0, 128
      %2556 = vxpose.xlu0.b32.cont [15/16] 0.0, 128
      %2557 = vxpose.xlu0.b32.end [16/16] 0.0, 128
      %v2558 = vpop.trf.xlu0
      %v2559 = vpop.trf.xlu0
      %v2560 = vpop.trf.xlu0
      %v2561 = vpop.trf.xlu0
      %v2562 = vpop.trf.xlu0
      %v2563 = vpop.trf.xlu0
      %v2564 = vpop.trf.xlu0
      %v2565 = vpop.trf.xlu0
      %v2566 = vpop.trf.xlu0
      %v2567 = vpop.trf.xlu0
      %v2568 = vpop.trf.xlu0
      %v2569 = vpop.trf.xlu0
      %v2570 = vpop.trf.xlu0
      %v2571 = vpop.trf.xlu0
      %v2572 = vpop.trf.xlu0
      %v2573 = vpop.trf.xlu0
      %v2574 = vpack.c.bf16 %v2431, %v2431
      %v2575 = vpack.c.bf16 %v2558, %v2558
      %v2577 = vsel %vm965, %v2574, 0
      %v2580 = vsel %vm969, %v2575, 0
      %2582 = vmatprep.subr.bf16.mxu0 0
      %2583 = vmatpush1.bf16.msra.mxu0 %v2580
      %2584 = vmatprep.subr.bf16.mxu0 0
      %2585 = vmatpush1.bf16.msra.mxu0 0
      %2586 = vmatprep.subr.bf16.mxu0 0
      %2587 = vmatpush1.bf16.msra.mxu0 0
      %2588 = vmatprep.subr.bf16.mxu0 0
      %2589 = vmatpush1.bf16.msra.mxu0 0
      %2590 = vmatprep.subr.bf16.mxu0 0
      %2591 = vmatpush1.bf16.msra.mxu0 0
      %2592 = vmatprep.subr.bf16.mxu0 0
      %2593 = vmatpush1.bf16.msra.mxu0 0
      %2594 = vmatprep.subr.bf16.mxu0 0
      %2595 = vmatpush1.bf16.msra.mxu0 0
      %2596 = vmatprep.subr.bf16.mxu0 0
      %2597 = vmatpush1.bf16.msra.mxu0 0
      %2598 = vmatprep.subr.bf16.mxu0 0
      %2599 = vmatpush1.bf16.msra.mxu0 0
      %2600 = vmatprep.subr.bf16.mxu0 0
      %2601 = vmatpush1.bf16.msra.mxu0 0
      %2602 = vmatprep.subr.bf16.mxu0 0
      %2603 = vmatpush1.bf16.msra.mxu0 0
      %2604 = vmatprep.subr.bf16.mxu0 0
      %2605 = vmatpush1.bf16.msra.mxu0 0
      %2606 = vmatprep.subr.bf16.mxu0 0
      %2607 = vmatpush1.bf16.msra.mxu0 0
      %2608 = vmatprep.subr.bf16.mxu0 0
      %2609 = vmatpush1.bf16.msra.mxu0 0
      %2610 = vmatprep.subr.bf16.mxu0 0
      %2611 = vmatpush1.bf16.msra.mxu0 0
      %2612 = vmatprep.subr.bf16.mxu0 0
      %2613 = vmatpush1.bf16.msra.mxu0 0
      %2614 = vmatprep.mubr.bf16.mxu0 0
      %2615 = vmatmul.mubr.bf16.gmra.mrb[0].mxu0 %v2577
      %v2616 = vpop.f32.mrb[0].mxu0
      %v2617 = vadd.f32 0.0, %v2616
      %v2618 = vpop.f32.mrb[0].mxu0
      %v2619 = vpop.f32.mrb[0].mxu0
      %v2620 = vpop.f32.mrb[0].mxu0
      %2621 = vdwg.mxu0
      %v2622 = vsel %vm965, %v2617, -inf
      %2623 = vmax.xlane.f32.xlu0 %v2622
      %v2624 = vpop.xlane.xlu0 %2623
      %v2625 = vsub.f32 %v2617, %v2624
      %v2626 = vmul.f32 %v2625, 1.442695
      %v2627 = vpow.pop %v2626
      %v2628 = vsel %vm965, %v2627, 0.0
      %2629 = vadd.xlane.f32.xlu0 %v2628
      %v2630 = vpop.xlane.xlu0 %2629
      %v2631 = vrcp.pop %v2630
      %v2632 = vmul.f32 %v2627, %v2631
      %v2633 = vpack.c.bf16 %v2632, %v2632
      %v2634 = vpack.c.bf16 %v2537, %v2537
      %v2636 = vsel %vm965, %v2633, 0
      %v2639 = vsel %vm969, %v2634, 0
      %2641 = vmatprep.subr.bf16.mxu0 0
      %2642 = vmatpush1.bf16.msra.mxu0 %v2639
      %2643 = vmatprep.subr.bf16.mxu0 0
      %2644 = vmatpush1.bf16.msra.mxu0 0
      %2645 = vmatprep.subr.bf16.mxu0 0
      %2646 = vmatpush1.bf16.msra.mxu0 0
      %2647 = vmatprep.subr.bf16.mxu0 0
      %2648 = vmatpush1.bf16.msra.mxu0 0
      %2649 = vmatprep.subr.bf16.mxu0 0
      %2650 = vmatpush1.bf16.msra.mxu0 0
      %2651 = vmatprep.subr.bf16.mxu0 0
      %2652 = vmatpush1.bf16.msra.mxu0 0
      %2653 = vmatprep.subr.bf16.mxu0 0
      %2654 = vmatpush1.bf16.msra.mxu0 0
      %2655 = vmatprep.subr.bf16.mxu0 0
      %2656 = vmatpush1.bf16.msra.mxu0 0
      %2657 = vmatprep.subr.bf16.mxu0 0
      %2658 = vmatpush1.bf16.msra.mxu0 0
      %2659 = vmatprep.subr.bf16.mxu0 0
      %2660 = vmatpush1.bf16.msra.mxu0 0
      %2661 = vmatprep.subr.bf16.mxu0 0
      %2662 = vmatpush1.bf16.msra.mxu0 0
      %2663 = vmatprep.subr.bf16.mxu0 0
      %2664 = vmatpush1.bf16.msra.mxu0 0
      %2665 = vmatprep.subr.bf16.mxu0 0
      %2666 = vmatpush1.bf16.msra.mxu0 0
      %2667 = vmatprep.subr.bf16.mxu0 0
      %2668 = vmatpush1.bf16.msra.mxu0 0
      %2669 = vmatprep.subr.bf16.mxu0 0
      %2670 = vmatpush1.bf16.msra.mxu0 0
      %2671 = vmatprep.subr.bf16.mxu0 0
      %2672 = vmatpush1.bf16.msra.mxu0 0
      %2673 = vmatprep.mubr.bf16.mxu0 0
      %2674 = vmatmul.mubr.bf16.gmra.mrb[0].mxu0 %v2636
      %v2675 = vpop.f32.mrb[0].mxu0
      %v2676 = vadd.f32 0.0, %v2675
      %v2677 = vpop.f32.mrb[0].mxu0
      %v2678 = vpop.f32.mrb[0].mxu0
      %v2679 = vpop.f32.mrb[0].mxu0
      %2680 = vdwg.mxu0
      %s2681 = scalar_lea.vmem %s9, 32
      %v2682 = vld [vmem:[%s2681] sm:$0xff]
      %v2683 = vpack.c.bf16 %v2676, %v2676
      %v2684 = vpack.c.bf16 %v2682, %v2682
      %s2685 = scalar_lea.vmem %s3, 160
      %v2686 = vld [vmem:[%s2685] sm:$0xff]
      %v2687 = vld [vmem:[%s2685 + $0x8] sm:$0xff]
      %v2688 = vld [vmem:[%s2685 + $0x10] sm:$0xff]
      %v2689 = vld [vmem:[%s2685 + $0x18] sm:$0xff]
      %v2690 = vpack.c.bf16 %v2687, %v2686
      %v2691 = vpack.c.bf16 %v2689, %v2688
      %s2692 = scalar_lea.vmem %s4, 5
      %v2693 = vld [vmem:[%s2692] sm:$0x1]
      %v2695 = vlaneseq
      %v2696 = vshrl.u32 %v2695, 7
      %v2697 = vsub.s32 0, %v2696
      %v2698 = vrot.slane %v2693, %v2697
      %2700 = vmatprep.subr.bf16.mxu0 0
      %2701 = vmatpush1.bf16.msra.mxu0 %v2690
      %2702 = vmatprep.subr.bf16.mxu0 0
      %2703 = vmatpush1.bf16.msra.mxu0 %v2691
      %2704 = vmatprep.subr.bf16.mxu0 0
      %2705 = vmatpush1.bf16.msra.mxu0 0
      %2706 = vmatprep.subr.bf16.mxu0 0
      %2707 = vmatpush1.bf16.msra.mxu0 0
      %2708 = vmatprep.subr.bf16.mxu0 0
      %2709 = vmatpush1.bf16.msra.mxu0 0
      %2710 = vmatprep.subr.bf16.mxu0 0
      %2711 = vmatpush1.bf16.msra.mxu0 0
      %2712 = vmatprep.subr.bf16.mxu0 0
      %2713 = vmatpush1.bf16.msra.mxu0 0
      %2714 = vmatprep.subr.bf16.mxu0 0
      %2715 = vmatpush1.bf16.msra.mxu0 0
      %2716 = vmatprep.subr.bf16.mxu0 0
      %2717 = vmatpush1.bf16.msra.mxu0 0
      %2718 = vmatprep.subr.bf16.mxu0 0
      %2719 = vmatpush1.bf16.msra.mxu0 0
      %2720 = vmatprep.subr.bf16.mxu0 0
      %2721 = vmatpush1.bf16.msra.mxu0 0
      %2722 = vmatprep.subr.bf16.mxu0 0
      %2723 = vmatpush1.bf16.msra.mxu0 0
      %2724 = vmatprep.subr.bf16.mxu0 0
      %2725 = vmatpush1.bf16.msra.mxu0 0
      %2726 = vmatprep.subr.bf16.mxu0 0
      %2727 = vmatpush1.bf16.msra.mxu0 0
      %2728 = vmatprep.subr.bf16.mxu0 0
      %2729 = vmatpush1.bf16.msra.mxu0 0
      %2730 = vmatprep.subr.bf16.mxu0 0
      %2731 = vmatpush1.bf16.msra.mxu0 0
      %2732 = vmatprep.mubr.bf16.mxu0 0
      %2733 = vmatmul.mubr.bf16.gmra.mrb[0].mxu0 %v2389
      %v2734 = vpop.f32.mrb[0].mxu0
      %v2735 = vadd.f32 %v2698, %v2734
      %v2736 = vpop.f32.mrb[0].mxu0
      %v2737 = vpop.f32.mrb[0].mxu0
      %v2738 = vpop.f32.mrb[0].mxu0
      %2739 = vdwg.mxu0
      %v2740 = vmul.f32 %v2735, 0.35355338
      %s2741 = scalar_lea.vmem %s5, 160
      %v2742 = vld [vmem:[%s2741] sm:$0xff]
      %v2743 = vld [vmem:[%s2741 + $0x8] sm:$0xff]
      %v2744 = vld [vmem:[%s2741 + $0x10] sm:$0xff]
      %v2745 = vld [vmem:[%s2741 + $0x18] sm:$0xff]
      %v2746 = vpack.c.bf16 %v2743, %v2742
      %v2747 = vpack.c.bf16 %v2745, %v2744
      %s2748 = scalar_lea.vmem %s6, 5
      %v2749 = vld [vmem:[%s2748] sm:$0x1]
      %v2751 = vlaneseq
      %v2752 = vshrl.u32 %v2751, 7
      %v2753 = vsub.s32 0, %v2752
      %v2754 = vrot.slane %v2749, %v2753
      %2756 = vmatprep.subr.bf16.mxu0 0
      %2757 = vmatpush1.bf16.msra.mxu0 %v2746
      %2758 = vmatprep.subr.bf16.mxu0 0
      %2759 = vmatpush1.bf16.msra.mxu0 %v2747
      %2760 = vmatprep.subr.bf16.mxu0 0
      %2761 = vmatpush1.bf16.msra.mxu0 0
      %2762 = vmatprep.subr.bf16.mxu0 0
      %2763 = vmatpush1.bf16.msra.mxu0 0
      %2764 = vmatprep.subr.bf16.mxu0 0
      %2765 = vmatpush1.bf16.msra.mxu0 0
      %2766 = vmatprep.subr.bf16.mxu0 0
      %2767 = vmatpush1.bf16.msra.mxu0 0
      %2768 = vmatprep.subr.bf16.mxu0 0
      %2769 = vmatpush1.bf16.msra.mxu0 0
      %2770 = vmatprep.subr.bf16.mxu0 0
      %2771 = vmatpush1.bf16.msra.mxu0 0
      %2772 = vmatprep.subr.bf16.mxu0 0
      %2773 = vmatpush1.bf16.msra.mxu0 0
      %2774 = vmatprep.subr.bf16.mxu0 0
      %2775 = vmatpush1.bf16.msra.mxu0 0
      %2776 = vmatprep.subr.bf16.mxu0 0
      %2777 = vmatpush1.bf16.msra.mxu0 0
      %2778 = vmatprep.subr.bf16.mxu0 0
      %2779 = vmatpush1.bf16.msra.mxu0 0
      %2780 = vmatprep.subr.bf16.mxu0 0
      %2781 = vmatpush1.bf16.msra.mxu0 0
      %2782 = vmatprep.subr.bf16.mxu0 0
      %2783 = vmatpush1.bf16.msra.mxu0 0
      %2784 = vmatprep.subr.bf16.mxu0 0
      %2785 = vmatpush1.bf16.msra.mxu0 0
      %2786 = vmatprep.subr.bf16.mxu0 0
      %2787 = vmatpush1.bf16.msra.mxu0 0
      %2788 = vmatprep.mubr.bf16.mxu0 0
      %2789 = vmatmul.mubr.bf16.gmra.mrb[0].mxu0 %v2389
      %v2790 = vpop.f32.mrb[0].mxu0
      %v2791 = vadd.f32 %v2754, %v2790
      %v2792 = vpop.f32.mrb[0].mxu0
      %v2793 = vpop.f32.mrb[0].mxu0
      %v2794 = vpop.f32.mrb[0].mxu0
      %2795 = vdwg.mxu0
      %s2796 = scalar_lea.vmem %s7, 160
      %v2797 = vld [vmem:[%s2796] sm:$0xff]
      %v2798 = vld [vmem:[%s2796 + $0x8] sm:$0xff]
      %v2799 = vld [vmem:[%s2796 + $0x10] sm:$0xff]
      %v2800 = vld [vmem:[%s2796 + $0x18] sm:$0xff]
      %v2801 = vpack.c.bf16 %v2798, %v2797
      %v2802 = vpack.c.bf16 %v2800, %v2799
      %s2803 = scalar_lea.vmem %s8, 5
      %v2804 = vld [vmem:[%s2803] sm:$0x1]
      %v2806 = vlaneseq
      %v2807 = vshrl.u32 %v2806, 7
      %v2808 = vsub.s32 0, %v2807
      %v2809 = vrot.slane %v2804, %v2808
      %2811 = vmatprep.subr.bf16.mxu0 0
      %2812 = vmatpush1.bf16.msra.mxu0 %v2801
      %2813 = vmatprep.subr.bf16.mxu0 0
      %2814 = vmatpush1.bf16.msra.mxu0 %v2802
      %2815 = vmatprep.subr.bf16.mxu0 0
      %2816 = vmatpush1.bf16.msra.mxu0 0
      %2817 = vmatprep.subr.bf16.mxu0 0
      %2818 = vmatpush1.bf16.msra.mxu0 0
      %2819 = vmatprep.subr.bf16.mxu0 0
      %2820 = vmatpush1.bf16.msra.mxu0 0
      %2821 = vmatprep.subr.bf16.mxu0 0
      %2822 = vmatpush1.bf16.msra.mxu0 0
      %2823 = vmatprep.subr.bf16.mxu0 0
      %2824 = vmatpush1.bf16.msra.mxu0 0
      %2825 = vmatprep.subr.bf16.mxu0 0
      %2826 = vmatpush1.bf16.msra.mxu0 0
      %2827 = vmatprep.subr.bf16.mxu0 0
      %2828 = vmatpush1.bf16.msra.mxu0 0
      %2829 = vmatprep.subr.bf16.mxu0 0
      %2830 = vmatpush1.bf16.msra.mxu0 0
      %2831 = vmatprep.subr.bf16.mxu0 0
      %2832 = vmatpush1.bf16.msra.mxu0 0
      %2833 = vmatprep.subr.bf16.mxu0 0
      %2834 = vmatpush1.bf16.msra.mxu0 0
      %2835 = vmatprep.subr.bf16.mxu0 0
      %2836 = vmatpush1.bf16.msra.mxu0 0
      %2837 = vmatprep.subr.bf16.mxu0 0
      %2838 = vmatpush1.bf16.msra.mxu0 0
      %2839 = vmatprep.subr.bf16.mxu0 0
      %2840 = vmatpush1.bf16.msra.mxu0 0
      %2841 = vmatprep.subr.bf16.mxu0 0
      %2842 = vmatpush1.bf16.msra.mxu0 0
      %2843 = vmatprep.mubr.bf16.mxu0 0
      %2844 = vmatmul.mubr.bf16.gmra.mrb[0].mxu0 %v2389
      %v2845 = vpop.f32.mrb[0].mxu0
      %v2846 = vadd.f32 %v2809, %v2845
      %v2847 = vpop.f32.mrb[0].mxu0
      %v2848 = vpop.f32.mrb[0].mxu0
      %v2849 = vpop.f32.mrb[0].mxu0
      %2850 = vdwg.mxu0
      %2851 = vxpose.xlu0.b32.start [1/16] %v2791, 128
      %2852 = vxpose.xlu0.b32.cont [2/16] 0.0, 128
      %2853 = vxpose.xlu0.b32.cont [3/16] 0.0, 128
      %2854 = vxpose.xlu0.b32.cont [4/16] 0.0, 128
      %2855 = vxpose.xlu0.b32.cont [5/16] 0.0, 128
      %2856 = vxpose.xlu0.b32.cont [6/16] 0.0, 128
      %2857 = vxpose.xlu0.b32.cont [7/16] 0.0, 128
      %2858 = vxpose.xlu0.b32.cont [8/16] 0.0, 128
      %2859 = vxpose.xlu0.b32.cont [9/16] 0.0, 128
      %2860 = vxpose.xlu0.b32.cont [10/16] 0.0, 128
      %2861 = vxpose.xlu0.b32.cont [11/16] 0.0, 128
      %2862 = vxpose.xlu0.b32.cont [12/16] 0.0, 128
      %2863 = vxpose.xlu0.b32.cont [13/16] 0.0, 128
      %2864 = vxpose.xlu0.b32.cont [14/16] 0.0, 128
      %2865 = vxpose.xlu0.b32.cont [15/16] 0.0, 128
      %2866 = vxpose.xlu0.b32.end [16/16] 0.0, 128
      %v2867 = vpop.trf.xlu0
      %v2868 = vpop.trf.xlu0
      %v2869 = vpop.trf.xlu0
      %v2870 = vpop.trf.xlu0
      %v2871 = vpop.trf.xlu0
      %v2872 = vpop.trf.xlu0
      %v2873 = vpop.trf.xlu0
      %v2874 = vpop.trf.xlu0
      %v2875 = vpop.trf.xlu0
      %v2876 = vpop.trf.xlu0
      %v2877 = vpop.trf.xlu0
      %v2878 = vpop.trf.xlu0
      %v2879 = vpop.trf.xlu0
      %v2880 = vpop.trf.xlu0
      %v2881 = vpop.trf.xlu0
      %v2882 = vpop.trf.xlu0
      %v2883 = vpack.c.bf16 %v2740, %v2740
      %v2884 = vpack.c.bf16 %v2867, %v2867
      %v2886 = vsel %vm965, %v2883, 0
      %v2889 = vsel %vm969, %v2884, 0
      %2891 = vmatprep.subr.bf16.mxu0 0
      %2892 = vmatpush1.bf16.msra.mxu0 %v2889
      %2893 = vmatprep.subr.bf16.mxu0 0
      %2894 = vmatpush1.bf16.msra.mxu0 0
      %2895 = vmatprep.subr.bf16.mxu0 0
      %2896 = vmatpush1.bf16.msra.mxu0 0
      %2897 = vmatprep.subr.bf16.mxu0 0
      %2898 = vmatpush1.bf16.msra.mxu0 0
      %2899 = vmatprep.subr.bf16.mxu0 0
      %2900 = vmatpush1.bf16.msra.mxu0 0
      %2901 = vmatprep.subr.bf16.mxu0 0
      %2902 = vmatpush1.bf16.msra.mxu0 0
      %2903 = vmatprep.subr.bf16.mxu0 0
      %2904 = vmatpush1.bf16.msra.mxu0 0
      %2905 = vmatprep.subr.bf16.mxu0 0
      %2906 = vmatpush1.bf16.msra.mxu0 0
      %2907 = vmatprep.subr.bf16.mxu0 0
      %2908 = vmatpush1.bf16.msra.mxu0 0
      %2909 = vmatprep.subr.bf16.mxu0 0
      %2910 = vmatpush1.bf16.msra.mxu0 0
      %2911 = vmatprep.subr.bf16.mxu0 0
      %2912 = vmatpush1.bf16.msra.mxu0 0
      %2913 = vmatprep.subr.bf16.mxu0 0
      %2914 = vmatpush1.bf16.msra.mxu0 0
      %2915 = vmatprep.subr.bf16.mxu0 0
      %2916 = vmatpush1.bf16.msra.mxu0 0
      %2917 = vmatprep.subr.bf16.mxu0 0
      %2918 = vmatpush1.bf16.msra.mxu0 0
      %2919 = vmatprep.subr.bf16.mxu0 0
      %2920 = vmatpush1.bf16.msra.mxu0 0
      %2921 = vmatprep.subr.bf16.mxu0 0
      %2922 = vmatpush1.bf16.msra.mxu0 0
      %2923 = vmatprep.mubr.bf16.mxu0 0
      %2924 = vmatmul.mubr.bf16.gmra.mrb[0].mxu0 %v2886
      %v2925 = vpop.f32.mrb[0].mxu0
      %v2926 = vadd.f32 0.0, %v2925
      %v2927 = vpop.f32.mrb[0].mxu0
      %v2928 = vpop.f32.mrb[0].mxu0
      %v2929 = vpop.f32.mrb[0].mxu0
      %2930 = vdwg.mxu0
      %v2931 = vsel %vm965, %v2926, -inf
      %2932 = vmax.xlane.f32.xlu0 %v2931
      %v2933 = vpop.xlane.xlu0 %2932
      %v2934 = vsub.f32 %v2926, %v2933
      %v2935 = vmul.f32 %v2934, 1.442695
      %v2936 = vpow.pop %v2935
      %v2937 = vsel %vm965, %v2936, 0.0
      %2938 = vadd.xlane.f32.xlu0 %v2937
      %v2939 = vpop.xlane.xlu0 %2938
      %v2940 = vrcp.pop %v2939
      %v2941 = vmul.f32 %v2936, %v2940
      %v2942 = vpack.c.bf16 %v2941, %v2941
      %v2943 = vpack.c.bf16 %v2846, %v2846
      %v2945 = vsel %vm965, %v2942, 0
      %v2948 = vsel %vm969, %v2943, 0
      %2950 = vmatprep.subr.bf16.mxu0 0
      %2951 = vmatpush1.bf16.msra.mxu0 %v2948
      %2952 = vmatprep.subr.bf16.mxu0 0
      %2953 = vmatpush1.bf16.msra.mxu0 0
      %2954 = vmatprep.subr.bf16.mxu0 0
      %2955 = vmatpush1.bf16.msra.mxu0 0
      %2956 = vmatprep.subr.bf16.mxu0 0
      %2957 = vmatpush1.bf16.msra.mxu0 0
      %2958 = vmatprep.subr.bf16.mxu0 0
      %2959 = vmatpush1.bf16.msra.mxu0 0
      %2960 = vmatprep.subr.bf16.mxu0 0
      %2961 = vmatpush1.bf16.msra.mxu0 0
      %2962 = vmatprep.subr.bf16.mxu0 0
      %2963 = vmatpush1.bf16.msra.mxu0 0
      %2964 = vmatprep.subr.bf16.mxu0 0
      %2965 = vmatpush1.bf16.msra.mxu0 0
      %2966 = vmatprep.subr.bf16.mxu0 0
      %2967 = vmatpush1.bf16.msra.mxu0 0
      %2968 = vmatprep.subr.bf16.mxu0 0
      %2969 = vmatpush1.bf16.msra.mxu0 0
      %2970 = vmatprep.subr.bf16.mxu0 0
      %2971 = vmatpush1.bf16.msra.mxu0 0
      %2972 = vmatprep.subr.bf16.mxu0 0
      %2973 = vmatpush1.bf16.msra.mxu0 0
      %2974 = vmatprep.subr.bf16.mxu0 0
      %2975 = vmatpush1.bf16.msra.mxu0 0
      %2976 = vmatprep.subr.bf16.mxu0 0
      %2977 = vmatpush1.bf16.msra.mxu0 0
      %2978 = vmatprep.subr.bf16.mxu0 0
      %2979 = vmatpush1.bf16.msra.mxu0 0
      %2980 = vmatprep.subr.bf16.mxu0 0
      %2981 = vmatpush1.bf16.msra.mxu0 0
      %2982 = vmatprep.mubr.bf16.mxu0 0
      %2983 = vmatmul.mubr.bf16.gmra.mrb[0].mxu0 %v2945
      %v2984 = vpop.f32.mrb[0].mxu0
      %v2985 = vadd.f32 0.0, %v2984
      %v2986 = vpop.f32.mrb[0].mxu0
      %v2987 = vpop.f32.mrb[0].mxu0
      %v2988 = vpop.f32.mrb[0].mxu0
      %2989 = vdwg.mxu0
      %s2990 = scalar_lea.vmem %s9, 40
      %v2991 = vld [vmem:[%s2990] sm:$0xff]
      %v2992 = vpack.c.bf16 %v2985, %v2985
      %v2993 = vpack.c.bf16 %v2991, %v2991
      %v2995 = vsel %vm965, %v2992, 0
      %v2998 = vsel %vm969, %v2993, 0
      %3000 = vmatprep.subr.bf16.mxu0 0
      %3001 = vmatpush1.bf16.msra.mxu0 %v2998
      %3002 = vmatprep.subr.bf16.mxu0 0
      %3003 = vmatpush1.bf16.msra.mxu0 0
      %3004 = vmatprep.subr.bf16.mxu0 0
      %3005 = vmatpush1.bf16.msra.mxu0 0
      %3006 = vmatprep.subr.bf16.mxu0 0
      %3007 = vmatpush1.bf16.msra.mxu0 0
      %3008 = vmatprep.subr.bf16.mxu0 0
      %3009 = vmatpush1.bf16.msra.mxu0 0
      %3010 = vmatprep.subr.bf16.mxu0 0
      %3011 = vmatpush1.bf16.msra.mxu0 0
      %3012 = vmatprep.subr.bf16.mxu0 0
      %3013 = vmatpush1.bf16.msra.mxu0 0
      %3014 = vmatprep.subr.bf16.mxu0 0
      %3015 = vmatpush1.bf16.msra.mxu0 0
      %3016 = vmatprep.subr.bf16.mxu0 0
      %3017 = vmatpush1.bf16.msra.mxu0 0
      %3018 = vmatprep.subr.bf16.mxu0 0
      %3019 = vmatpush1.bf16.msra.mxu0 0
      %3020 = vmatprep.subr.bf16.mxu0 0
      %3021 = vmatpush1.bf16.msra.mxu0 0
      %3022 = vmatprep.subr.bf16.mxu0 0
      %3023 = vmatpush1.bf16.msra.mxu0 0
      %3024 = vmatprep.subr.bf16.mxu0 0
      %3025 = vmatpush1.bf16.msra.mxu0 0
      %3026 = vmatprep.subr.bf16.mxu0 0
      %3027 = vmatpush1.bf16.msra.mxu0 0
      %3028 = vmatprep.subr.bf16.mxu0 0
      %3029 = vmatpush1.bf16.msra.mxu0 0
      %3030 = vmatprep.subr.bf16.mxu0 0
      %3031 = vmatpush1.bf16.msra.mxu0 0
      %3032 = vmatprep.mubr.bf16.mxu0 0
      %3033 = vmatmul.mubr.bf16.gmra.mrb[0].mxu0 %v2995
      %v3034 = vpop.f32.mrb[0].mxu0
      %v3035 = vadd.f32 0.0, %v3034
      %v3036 = vpop.f32.mrb[0].mxu0
      %v3037 = vpop.f32.mrb[0].mxu0
      %v3038 = vpop.f32.mrb[0].mxu0
      %3039 = vdwg.mxu0
      %v3041 = vsel %vm965, %v2683, 0
      %v3044 = vsel %vm969, %v2684, 0
      %3046 = vmatprep.subr.bf16.mxu0 0
      %3047 = vmatpush1.bf16.msra.mxu0 %v3044
      %3048 = vmatprep.subr.bf16.mxu0 0
      %3049 = vmatpush1.bf16.msra.mxu0 0
      %3050 = vmatprep.subr.bf16.mxu0 0
      %3051 = vmatpush1.bf16.msra.mxu0 0
      %3052 = vmatprep.subr.bf16.mxu0 0
      %3053 = vmatpush1.bf16.msra.mxu0 0
      %3054 = vmatprep.subr.bf16.mxu0 0
      %3055 = vmatpush1.bf16.msra.mxu0 0
      %3056 = vmatprep.subr.bf16.mxu0 0
      %3057 = vmatpush1.bf16.msra.mxu0 0
      %3058 = vmatprep.subr.bf16.mxu0 0
      %3059 = vmatpush1.bf16.msra.mxu0 0
      %3060 = vmatprep.subr.bf16.mxu0 0
      %3061 = vmatpush1.bf16.msra.mxu0 0
      %3062 = vmatprep.subr.bf16.mxu0 0
      %3063 = vmatpush1.bf16.msra.mxu0 0
      %3064 = vmatprep.subr.bf16.mxu0 0
      %3065 = vmatpush1.bf16.msra.mxu0 0
      %3066 = vmatprep.subr.bf16.mxu0 0
      %3067 = vmatpush1.bf16.msra.mxu0 0
      %3068 = vmatprep.subr.bf16.mxu0 0
      %3069 = vmatpush1.bf16.msra.mxu0 0
      %3070 = vmatprep.subr.bf16.mxu0 0
      %3071 = vmatpush1.bf16.msra.mxu0 0
      %3072 = vmatprep.subr.bf16.mxu0 0
      %3073 = vmatpush1.bf16.msra.mxu0 0
      %3074 = vmatprep.subr.bf16.mxu0 0
      %3075 = vmatpush1.bf16.msra.mxu0 0
      %3076 = vmatprep.subr.bf16.mxu0 0
      %3077 = vmatpush1.bf16.msra.mxu0 0
      %3078 = vmatprep.mubr.bf16.mxu0 0
      %3079 = vmatmul.mubr.bf16.gmra.mrb[0].mxu0 %v3041
      %v3080 = vpop.f32.mrb[0].mxu0
      %v3081 = vadd.f32 %v3035, %v3080
      %v3082 = vpop.f32.mrb[0].mxu0
      %v3083 = vpop.f32.mrb[0].mxu0
      %v3084 = vpop.f32.mrb[0].mxu0
      %3085 = vdwg.mxu0
      %s3086 = scalar_lea.vmem %s3, 192
      %v3087 = vld [vmem:[%s3086] sm:$0xff]
      %v3088 = vld [vmem:[%s3086 + $0x8] sm:$0xff]
      %v3089 = vld [vmem:[%s3086 + $0x10] sm:$0xff]
      %v3090 = vld [vmem:[%s3086 + $0x18] sm:$0xff]
      %v3091 = vpack.c.bf16 %v3088, %v3087
      %v3092 = vpack.c.bf16 %v3090, %v3089
      %s3093 = scalar_lea.vmem %s4, 6
      %v3094 = vld [vmem:[%s3093] sm:$0x1]
      %v3096 = vlaneseq
      %v3097 = vshrl.u32 %v3096, 7
      %v3098 = vsub.s32 0, %v3097
      %v3099 = vrot.slane %v3094, %v3098
      %3101 = vmatprep.subr.bf16.mxu0 0
      %3102 = vmatpush1.bf16.msra.mxu0 %v3091
      %3103 = vmatprep.subr.bf16.mxu0 0
      %3104 = vmatpush1.bf16.msra.mxu0 %v3092
      %3105 = vmatprep.subr.bf16.mxu0 0
      %3106 = vmatpush1.bf16.msra.mxu0 0
      %3107 = vmatprep.subr.bf16.mxu0 0
      %3108 = vmatpush1.bf16.msra.mxu0 0
      %3109 = vmatprep.subr.bf16.mxu0 0
      %3110 = vmatpush1.bf16.msra.mxu0 0
      %3111 = vmatprep.subr.bf16.mxu0 0
      %3112 = vmatpush1.bf16.msra.mxu0 0
      %3113 = vmatprep.subr.bf16.mxu0 0
      %3114 = vmatpush1.bf16.msra.mxu0 0
      %3115 = vmatprep.subr.bf16.mxu0 0
      %3116 = vmatpush1.bf16.msra.mxu0 0
      %3117 = vmatprep.subr.bf16.mxu0 0
      %3118 = vmatpush1.bf16.msra.mxu0 0
      %3119 = vmatprep.subr.bf16.mxu0 0
      %3120 = vmatpush1.bf16.msra.mxu0 0
      %3121 = vmatprep.subr.bf16.mxu0 0
      %3122 = vmatpush1.bf16.msra.mxu0 0
      %3123 = vmatprep.subr.bf16.mxu0 0
      %3124 = vmatpush1.bf16.msra.mxu0 0
      %3125 = vmatprep.subr.bf16.mxu0 0
      %3126 = vmatpush1.bf16.msra.mxu0 0
      %3127 = vmatprep.subr.bf16.mxu0 0
      %3128 = vmatpush1.bf16.msra.mxu0 0
      %3129 = vmatprep.subr.bf16.mxu0 0
      %3130 = vmatpush1.bf16.msra.mxu0 0
      %3131 = vmatprep.subr.bf16.mxu0 0
      %3132 = vmatpush1.bf16.msra.mxu0 0
      %3133 = vmatprep.mubr.bf16.mxu0 0
      %3134 = vmatmul.mubr.bf16.gmra.mrb[0].mxu0 %v2389
      %v3135 = vpop.f32.mrb[0].mxu0
      %v3136 = vadd.f32 %v3099, %v3135
      %v3137 = vpop.f32.mrb[0].mxu0
      %v3138 = vpop.f32.mrb[0].mxu0
      %v3139 = vpop.f32.mrb[0].mxu0
      %3140 = vdwg.mxu0
      %v3141 = vmul.f32 %v3136, 0.35355338
      %s3142 = scalar_lea.vmem %s5, 192
      %v3143 = vld [vmem:[%s3142] sm:$0xff]
      %v3144 = vld [vmem:[%s3142 + $0x8] sm:$0xff]
      %v3145 = vld [vmem:[%s3142 + $0x10] sm:$0xff]
      %v3146 = vld [vmem:[%s3142 + $0x18] sm:$0xff]
      %v3147 = vpack.c.bf16 %v3144, %v3143
      %v3148 = vpack.c.bf16 %v3146, %v3145
      %s3149 = scalar_lea.vmem %s6, 6
      %v3150 = vld [vmem:[%s3149] sm:$0x1]
      %v3152 = vlaneseq
      %v3153 = vshrl.u32 %v3152, 7
      %v3154 = vsub.s32 0, %v3153
      %v3155 = vrot.slane %v3150, %v3154
      %3157 = vmatprep.subr.bf16.mxu0 0
      %3158 = vmatpush1.bf16.msra.mxu0 %v3147
      %3159 = vmatprep.subr.bf16.mxu0 0
      %3160 = vmatpush1.bf16.msra.mxu0 %v3148
      %3161 = vmatprep.subr.bf16.mxu0 0
      %3162 = vmatpush1.bf16.msra.mxu0 0
      %3163 = vmatprep.subr.bf16.mxu0 0
      %3164 = vmatpush1.bf16.msra.mxu0 0
      %3165 = vmatprep.subr.bf16.mxu0 0
      %3166 = vmatpush1.bf16.msra.mxu0 0
      %3167 = vmatprep.subr.bf16.mxu0 0
      %3168 = vmatpush1.bf16.msra.mxu0 0
      %3169 = vmatprep.subr.bf16.mxu0 0
      %3170 = vmatpush1.bf16.msra.mxu0 0
      %3171 = vmatprep.subr.bf16.mxu0 0
      %3172 = vmatpush1.bf16.msra.mxu0 0
      %3173 = vmatprep.subr.bf16.mxu0 0
      %3174 = vmatpush1.bf16.msra.mxu0 0
      %3175 = vmatprep.subr.bf16.mxu0 0
      %3176 = vmatpush1.bf16.msra.mxu0 0
      %3177 = vmatprep.subr.bf16.mxu0 0
      %3178 = vmatpush1.bf16.msra.mxu0 0
      %3179 = vmatprep.subr.bf16.mxu0 0
      %3180 = vmatpush1.bf16.msra.mxu0 0
      %3181 = vmatprep.subr.bf16.mxu0 0
      %3182 = vmatpush1.bf16.msra.mxu0 0
      %3183 = vmatprep.subr.bf16.mxu0 0
      %3184 = vmatpush1.bf16.msra.mxu0 0
      %3185 = vmatprep.subr.bf16.mxu0 0
      %3186 = vmatpush1.bf16.msra.mxu0 0
      %3187 = vmatprep.subr.bf16.mxu0 0
      %3188 = vmatpush1.bf16.msra.mxu0 0
      %3189 = vmatprep.mubr.bf16.mxu0 0
      %3190 = vmatmul.mubr.bf16.gmra.mrb[0].mxu0 %v2389
      %v3191 = vpop.f32.mrb[0].mxu0
      %v3192 = vadd.f32 %v3155, %v3191
      %v3193 = vpop.f32.mrb[0].mxu0
      %v3194 = vpop.f32.mrb[0].mxu0
      %v3195 = vpop.f32.mrb[0].mxu0
      %3196 = vdwg.mxu0
      %s3197 = scalar_lea.vmem %s7, 192
      %v3198 = vld [vmem:[%s3197] sm:$0xff]
      %v3199 = vld [vmem:[%s3197 + $0x8] sm:$0xff]
      %v3200 = vld [vmem:[%s3197 + $0x10] sm:$0xff]
      %v3201 = vld [vmem:[%s3197 + $0x18] sm:$0xff]
      %v3202 = vpack.c.bf16 %v3199, %v3198
      %v3203 = vpack.c.bf16 %v3201, %v3200
      %s3204 = scalar_lea.vmem %s8, 6
      %v3205 = vld [vmem:[%s3204] sm:$0x1]
      %v3207 = vlaneseq
      %v3208 = vshrl.u32 %v3207, 7
      %v3209 = vsub.s32 0, %v3208
      %v3210 = vrot.slane %v3205, %v3209
      %3212 = vmatprep.subr.bf16.mxu0 0
      %3213 = vmatpush1.bf16.msra.mxu0 %v3202
      %3214 = vmatprep.subr.bf16.mxu0 0
      %3215 = vmatpush1.bf16.msra.mxu0 %v3203
      %3216 = vmatprep.subr.bf16.mxu0 0
      %3217 = vmatpush1.bf16.msra.mxu0 0
      %3218 = vmatprep.subr.bf16.mxu0 0
      %3219 = vmatpush1.bf16.msra.mxu0 0
      %3220 = vmatprep.subr.bf16.mxu0 0
      %3221 = vmatpush1.bf16.msra.mxu0 0
      %3222 = vmatprep.subr.bf16.mxu0 0
      %3223 = vmatpush1.bf16.msra.mxu0 0
      %3224 = vmatprep.subr.bf16.mxu0 0
      %3225 = vmatpush1.bf16.msra.mxu0 0
      %3226 = vmatprep.subr.bf16.mxu0 0
      %3227 = vmatpush1.bf16.msra.mxu0 0
      %3228 = vmatprep.subr.bf16.mxu0 0
      %3229 = vmatpush1.bf16.msra.mxu0 0
      %3230 = vmatprep.subr.bf16.mxu0 0
      %3231 = vmatpush1.bf16.msra.mxu0 0
      %3232 = vmatprep.subr.bf16.mxu0 0
      %3233 = vmatpush1.bf16.msra.mxu0 0
      %3234 = vmatprep.subr.bf16.mxu0 0
      %3235 = vmatpush1.bf16.msra.mxu0 0
      %3236 = vmatprep.subr.bf16.mxu0 0
      %3237 = vmatpush1.bf16.msra.mxu0 0
      %3238 = vmatprep.subr.bf16.mxu0 0
      %3239 = vmatpush1.bf16.msra.mxu0 0
      %3240 = vmatprep.subr.bf16.mxu0 0
      %3241 = vmatpush1.bf16.msra.mxu0 0
      %3242 = vmatprep.subr.bf16.mxu0 0
      %3243 = vmatpush1.bf16.msra.mxu0 0
      %3244 = vmatprep.mubr.bf16.mxu0 0
      %3245 = vmatmul.mubr.bf16.gmra.mrb[0].mxu0 %v2389
      %v3246 = vpop.f32.mrb[0].mxu0
      %v3247 = vadd.f32 %v3210, %v3246
      %v3248 = vpop.f32.mrb[0].mxu0
      %v3249 = vpop.f32.mrb[0].mxu0
      %v3250 = vpop.f32.mrb[0].mxu0
      %3251 = vdwg.mxu0
      %3252 = vxpose.xlu0.b32.start [1/16] %v3192, 128
      %3253 = vxpose.xlu0.b32.cont [2/16] 0.0, 128
      %3254 = vxpose.xlu0.b32.cont [3/16] 0.0, 128
      %3255 = vxpose.xlu0.b32.cont [4/16] 0.0, 128
      %3256 = vxpose.xlu0.b32.cont [5/16] 0.0, 128
      %3257 = vxpose.xlu0.b32.cont [6/16] 0.0, 128
      %3258 = vxpose.xlu0.b32.cont [7/16] 0.0, 128
      %3259 = vxpose.xlu0.b32.cont [8/16] 0.0, 128
      %3260 = vxpose.xlu0.b32.cont [9/16] 0.0, 128
      %3261 = vxpose.xlu0.b32.cont [10/16] 0.0, 128
      %3262 = vxpose.xlu0.b32.cont [11/16] 0.0, 128
      %3263 = vxpose.xlu0.b32.cont [12/16] 0.0, 128
      %3264 = vxpose.xlu0.b32.cont [13/16] 0.0, 128
      %3265 = vxpose.xlu0.b32.cont [14/16] 0.0, 128
      %3266 = vxpose.xlu0.b32.cont [15/16] 0.0, 128
      %3267 = vxpose.xlu0.b32.end [16/16] 0.0, 128
      %v3268 = vpop.trf.xlu0
      %v3269 = vpop.trf.xlu0
      %v3270 = vpop.trf.xlu0
      %v3271 = vpop.trf.xlu0
      %v3272 = vpop.trf.xlu0
      %v3273 = vpop.trf.xlu0
      %v3274 = vpop.trf.xlu0
      %v3275 = vpop.trf.xlu0
      %v3276 = vpop.trf.xlu0
      %v3277 = vpop.trf.xlu0
      %v3278 = vpop.trf.xlu0
      %v3279 = vpop.trf.xlu0
      %v3280 = vpop.trf.xlu0
      %v3281 = vpop.trf.xlu0
      %v3282 = vpop.trf.xlu0
      %v3283 = vpop.trf.xlu0
      %v3284 = vpack.c.bf16 %v3141, %v3141
      %v3285 = vpack.c.bf16 %v3268, %v3268
      %v3287 = vsel %vm965, %v3284, 0
      %v3290 = vsel %vm969, %v3285, 0
      %3292 = vmatprep.subr.bf16.mxu0 0
      %3293 = vmatpush1.bf16.msra.mxu0 %v3290
      %3294 = vmatprep.subr.bf16.mxu0 0
      %3295 = vmatpush1.bf16.msra.mxu0 0
      %3296 = vmatprep.subr.bf16.mxu0 0
      %3297 = vmatpush1.bf16.msra.mxu0 0
      %3298 = vmatprep.subr.bf16.mxu0 0
      %3299 = vmatpush1.bf16.msra.mxu0 0
      %3300 = vmatprep.subr.bf16.mxu0 0
      %3301 = vmatpush1.bf16.msra.mxu0 0
      %3302 = vmatprep.subr.bf16.mxu0 0
      %3303 = vmatpush1.bf16.msra.mxu0 0
      %3304 = vmatprep.subr.bf16.mxu0 0
      %3305 = vmatpush1.bf16.msra.mxu0 0
      %3306 = vmatprep.subr.bf16.mxu0 0
      %3307 = vmatpush1.bf16.msra.mxu0 0
      %3308 = vmatprep.subr.bf16.mxu0 0
      %3309 = vmatpush1.bf16.msra.mxu0 0
      %3310 = vmatprep.subr.bf16.mxu0 0
      %3311 = vmatpush1.bf16.msra.mxu0 0
      %3312 = vmatprep.subr.bf16.mxu0 0
      %3313 = vmatpush1.bf16.msra.mxu0 0
      %3314 = vmatprep.subr.bf16.mxu0 0
      %3315 = vmatpush1.bf16.msra.mxu0 0
      %3316 = vmatprep.subr.bf16.mxu0 0
      %3317 = vmatpush1.bf16.msra.mxu0 0
      %3318 = vmatprep.subr.bf16.mxu0 0
      %3319 = vmatpush1.bf16.msra.mxu0 0
      %3320 = vmatprep.subr.bf16.mxu0 0
      %3321 = vmatpush1.bf16.msra.mxu0 0
      %3322 = vmatprep.subr.bf16.mxu0 0
      %3323 = vmatpush1.bf16.msra.mxu0 0
      %3324 = vmatprep.mubr.bf16.mxu0 0
      %3325 = vmatmul.mubr.bf16.gmra.mrb[0].mxu0 %v3287
      %v3326 = vpop.f32.mrb[0].mxu0
      %v3327 = vadd.f32 0.0, %v3326
      %v3328 = vpop.f32.mrb[0].mxu0
      %v3329 = vpop.f32.mrb[0].mxu0
      %v3330 = vpop.f32.mrb[0].mxu0
      %3331 = vdwg.mxu0
      %v3332 = vsel %vm965, %v3327, -inf
      %3333 = vmax.xlane.f32.xlu0 %v3332
      %v3334 = vpop.xlane.xlu0 %3333
      %v3335 = vsub.f32 %v3327, %v3334
      %v3336 = vmul.f32 %v3335, 1.442695
      %v3337 = vpow.pop %v3336
      %v3338 = vsel %vm965, %v3337, 0.0
      %3339 = vadd.xlane.f32.xlu0 %v3338
      %v3340 = vpop.xlane.xlu0 %3339
      %v3341 = vrcp.pop %v3340
      %v3342 = vmul.f32 %v3337, %v3341
      %v3343 = vpack.c.bf16 %v3342, %v3342
      %v3344 = vpack.c.bf16 %v3247, %v3247
      %v3346 = vsel %vm965, %v3343, 0
      %v3349 = vsel %vm969, %v3344, 0
      %3351 = vmatprep.subr.bf16.mxu0 0
      %3352 = vmatpush1.bf16.msra.mxu0 %v3349
      %3353 = vmatprep.subr.bf16.mxu0 0
      %3354 = vmatpush1.bf16.msra.mxu0 0
      %3355 = vmatprep.subr.bf16.mxu0 0
      %3356 = vmatpush1.bf16.msra.mxu0 0
      %3357 = vmatprep.subr.bf16.mxu0 0
      %3358 = vmatpush1.bf16.msra.mxu0 0
      %3359 = vmatprep.subr.bf16.mxu0 0
      %3360 = vmatpush1.bf16.msra.mxu0 0
      %3361 = vmatprep.subr.bf16.mxu0 0
      %3362 = vmatpush1.bf16.msra.mxu0 0
      %3363 = vmatprep.subr.bf16.mxu0 0
      %3364 = vmatpush1.bf16.msra.mxu0 0
      %3365 = vmatprep.subr.bf16.mxu0 0
      %3366 = vmatpush1.bf16.msra.mxu0 0
      %3367 = vmatprep.subr.bf16.mxu0 0
      %3368 = vmatpush1.bf16.msra.mxu0 0
      %3369 = vmatprep.subr.bf16.mxu0 0
      %3370 = vmatpush1.bf16.msra.mxu0 0
      %3371 = vmatprep.subr.bf16.mxu0 0
      %3372 = vmatpush1.bf16.msra.mxu0 0
      %3373 = vmatprep.subr.bf16.mxu0 0
      %3374 = vmatpush1.bf16.msra.mxu0 0
      %3375 = vmatprep.subr.bf16.mxu0 0
      %3376 = vmatpush1.bf16.msra.mxu0 0
      %3377 = vmatprep.subr.bf16.mxu0 0
      %3378 = vmatpush1.bf16.msra.mxu0 0
      %3379 = vmatprep.subr.bf16.mxu0 0
      %3380 = vmatpush1.bf16.msra.mxu0 0
      %3381 = vmatprep.subr.bf16.mxu0 0
      %3382 = vmatpush1.bf16.msra.mxu0 0
      %3383 = vmatprep.mubr.bf16.mxu0 0
      %3384 = vmatmul.mubr.bf16.gmra.mrb[0].mxu0 %v3346
      %v3385 = vpop.f32.mrb[0].mxu0
      %v3386 = vadd.f32 0.0, %v3385
      %v3387 = vpop.f32.mrb[0].mxu0
      %v3388 = vpop.f32.mrb[0].mxu0
      %v3389 = vpop.f32.mrb[0].mxu0
      %3390 = vdwg.mxu0
      %s3391 = scalar_lea.vmem %s9, 48
      %v3392 = vld [vmem:[%s3391] sm:$0xff]
      %v3393 = vpack.c.bf16 %v3386, %v3386
      %v3394 = vpack.c.bf16 %v3392, %v3392
      %v3396 = vsel %vm965, %v3393, 0
      %v3399 = vsel %vm969, %v3394, 0
      %3401 = vmatprep.subr.bf16.mxu0 0
      %3402 = vmatpush1.bf16.msra.mxu0 %v3399
      %3403 = vmatprep.subr.bf16.mxu0 0
      %3404 = vmatpush1.bf16.msra.mxu0 0
      %3405 = vmatprep.subr.bf16.mxu0 0
      %3406 = vmatpush1.bf16.msra.mxu0 0
      %3407 = vmatprep.subr.bf16.mxu0 0
      %3408 = vmatpush1.bf16.msra.mxu0 0
      %3409 = vmatprep.subr.bf16.mxu0 0
      %3410 = vmatpush1.bf16.msra.mxu0 0
      %3411 = vmatprep.subr.bf16.mxu0 0
      %3412 = vmatpush1.bf16.msra.mxu0 0
      %3413 = vmatprep.subr.bf16.mxu0 0
      %3414 = vmatpush1.bf16.msra.mxu0 0
      %3415 = vmatprep.subr.bf16.mxu0 0
      %3416 = vmatpush1.bf16.msra.mxu0 0
      %3417 = vmatprep.subr.bf16.mxu0 0
      %3418 = vmatpush1.bf16.msra.mxu0 0
      %3419 = vmatprep.subr.bf16.mxu0 0
      %3420 = vmatpush1.bf16.msra.mxu0 0
      %3421 = vmatprep.subr.bf16.mxu0 0
      %3422 = vmatpush1.bf16.msra.mxu0 0
      %3423 = vmatprep.subr.bf16.mxu0 0
      %3424 = vmatpush1.bf16.msra.mxu0 0
      %3425 = vmatprep.subr.bf16.mxu0 0
      %3426 = vmatpush1.bf16.msra.mxu0 0
      %3427 = vmatprep.subr.bf16.mxu0 0
      %3428 = vmatpush1.bf16.msra.mxu0 0
      %3429 = vmatprep.subr.bf16.mxu0 0
      %3430 = vmatpush1.bf16.msra.mxu0 0
      %3431 = vmatprep.subr.bf16.mxu0 0
      %3432 = vmatpush1.bf16.msra.mxu0 0
      %3433 = vmatprep.mubr.bf16.mxu0 0
      %3434 = vmatmul.mubr.bf16.gmra.mrb[0].mxu0 %v3396
      %v3435 = vpop.f32.mrb[0].mxu0
      %v3436 = vadd.f32 0.0, %v3435
      %v3437 = vpop.f32.mrb[0].mxu0
      %v3438 = vpop.f32.mrb[0].mxu0
      %v3439 = vpop.f32.mrb[0].mxu0
      %3440 = vdwg.mxu0
      %v3441 = vadd.f32 %v3081, %v3436
      %s3442 = scalar_lea.vmem %s3, 224
      %v3443 = vld [vmem:[%s3442] sm:$0xff]
      %v3444 = vld [vmem:[%s3442 + $0x8] sm:$0xff]
      %v3445 = vld [vmem:[%s3442 + $0x10] sm:$0xff]
      %v3446 = vld [vmem:[%s3442 + $0x18] sm:$0xff]
      %v3447 = vpack.c.bf16 %v3444, %v3443
      %v3448 = vpack.c.bf16 %v3446, %v3445
      %s3449 = scalar_lea.vmem %s4, 7
      %v3450 = vld [vmem:[%s3449] sm:$0x1]
      %v3452 = vlaneseq
      %v3453 = vshrl.u32 %v3452, 7
      %v3454 = vsub.s32 0, %v3453
      %v3455 = vrot.slane %v3450, %v3454
      %3457 = vmatprep.subr.bf16.mxu0 0
      %3458 = vmatpush1.bf16.msra.mxu0 %v3447
      %3459 = vmatprep.subr.bf16.mxu0 0
      %3460 = vmatpush1.bf16.msra.mxu0 %v3448
      %3461 = vmatprep.subr.bf16.mxu0 0
      %3462 = vmatpush1.bf16.msra.mxu0 0
      %3463 = vmatprep.subr.bf16.mxu0 0
      %3464 = vmatpush1.bf16.msra.mxu0 0
      %3465 = vmatprep.subr.bf16.mxu0 0
      %3466 = vmatpush1.bf16.msra.mxu0 0
      %3467 = vmatprep.subr.bf16.mxu0 0
      %3468 = vmatpush1.bf16.msra.mxu0 0
      %3469 = vmatprep.subr.bf16.mxu0 0
      %3470 = vmatpush1.bf16.msra.mxu0 0
      %3471 = vmatprep.subr.bf16.mxu0 0
      %3472 = vmatpush1.bf16.msra.mxu0 0
      %3473 = vmatprep.subr.bf16.mxu0 0
      %3474 = vmatpush1.bf16.msra.mxu0 0
      %3475 = vmatprep.subr.bf16.mxu0 0
      %3476 = vmatpush1.bf16.msra.mxu0 0
      %3477 = vmatprep.subr.bf16.mxu0 0
      %3478 = vmatpush1.bf16.msra.mxu0 0
      %3479 = vmatprep.subr.bf16.mxu0 0
      %3480 = vmatpush1.bf16.msra.mxu0 0
      %3481 = vmatprep.subr.bf16.mxu0 0
      %3482 = vmatpush1.bf16.msra.mxu0 0
      %3483 = vmatprep.subr.bf16.mxu0 0
      %3484 = vmatpush1.bf16.msra.mxu0 0
      %3485 = vmatprep.subr.bf16.mxu0 0
      %3486 = vmatpush1.bf16.msra.mxu0 0
      %3487 = vmatprep.subr.bf16.mxu0 0
      %3488 = vmatpush1.bf16.msra.mxu0 0
      %3489 = vmatprep.mubr.bf16.mxu0 0
      %3490 = vmatmul.mubr.bf16.gmra.mrb[0].mxu0 %v2389
      %v3491 = vpop.f32.mrb[0].mxu0
      %v3492 = vadd.f32 %v3455, %v3491
      %v3493 = vpop.f32.mrb[0].mxu0
      %v3494 = vpop.f32.mrb[0].mxu0
      %v3495 = vpop.f32.mrb[0].mxu0
      %3496 = vdwg.mxu0
      %v3497 = vmul.f32 %v3492, 0.35355338
      %s3498 = scalar_lea.vmem %s5, 224
      %v3499 = vld [vmem:[%s3498] sm:$0xff]
      %v3500 = vld [vmem:[%s3498 + $0x8] sm:$0xff]
      %v3501 = vld [vmem:[%s3498 + $0x10] sm:$0xff]
      %v3502 = vld [vmem:[%s3498 + $0x18] sm:$0xff]
      %v3503 = vpack.c.bf16 %v3500, %v3499
      %v3504 = vpack.c.bf16 %v3502, %v3501
      %s3505 = scalar_lea.vmem %s6, 7
      %v3506 = vld [vmem:[%s3505] sm:$0x1]
      %v3508 = vlaneseq
      %v3509 = vshrl.u32 %v3508, 7
      %v3510 = vsub.s32 0, %v3509
      %v3511 = vrot.slane %v3506, %v3510
      %3513 = vmatprep.subr.bf16.mxu0 0
      %3514 = vmatpush1.bf16.msra.mxu0 %v3503
      %3515 = vmatprep.subr.bf16.mxu0 0
      %3516 = vmatpush1.bf16.msra.mxu0 %v3504
      %3517 = vmatprep.subr.bf16.mxu0 0
      %3518 = vmatpush1.bf16.msra.mxu0 0
      %3519 = vmatprep.subr.bf16.mxu0 0
      %3520 = vmatpush1.bf16.msra.mxu0 0
      %3521 = vmatprep.subr.bf16.mxu0 0
      %3522 = vmatpush1.bf16.msra.mxu0 0
      %3523 = vmatprep.subr.bf16.mxu0 0
      %3524 = vmatpush1.bf16.msra.mxu0 0
      %3525 = vmatprep.subr.bf16.mxu0 0
      %3526 = vmatpush1.bf16.msra.mxu0 0
      %3527 = vmatprep.subr.bf16.mxu0 0
      %3528 = vmatpush1.bf16.msra.mxu0 0
      %3529 = vmatprep.subr.bf16.mxu0 0
      %3530 = vmatpush1.bf16.msra.mxu0 0
      %3531 = vmatprep.subr.bf16.mxu0 0
      %3532 = vmatpush1.bf16.msra.mxu0 0
      %3533 = vmatprep.subr.bf16.mxu0 0
      %3534 = vmatpush1.bf16.msra.mxu0 0
      %3535 = vmatprep.subr.bf16.mxu0 0
      %3536 = vmatpush1.bf16.msra.mxu0 0
      %3537 = vmatprep.subr.bf16.mxu0 0
      %3538 = vmatpush1.bf16.msra.mxu0 0
      %3539 = vmatprep.subr.bf16.mxu0 0
      %3540 = vmatpush1.bf16.msra.mxu0 0
      %3541 = vmatprep.subr.bf16.mxu0 0
      %3542 = vmatpush1.bf16.msra.mxu0 0
      %3543 = vmatprep.subr.bf16.mxu0 0
      %3544 = vmatpush1.bf16.msra.mxu0 0
      %3545 = vmatprep.mubr.bf16.mxu0 0
      %3546 = vmatmul.mubr.bf16.gmra.mrb[0].mxu0 %v2389
      %v3547 = vpop.f32.mrb[0].mxu0
      %v3548 = vadd.f32 %v3511, %v3547
      %v3549 = vpop.f32.mrb[0].mxu0
      %v3550 = vpop.f32.mrb[0].mxu0
      %v3551 = vpop.f32.mrb[0].mxu0
      %3552 = vdwg.mxu0
      %s3553 = scalar_lea.vmem %s7, 224
      %v3554 = vld [vmem:[%s3553] sm:$0xff]
      %v3555 = vld [vmem:[%s3553 + $0x8] sm:$0xff]
      %v3556 = vld [vmem:[%s3553 + $0x10] sm:$0xff]
      %v3557 = vld [vmem:[%s3553 + $0x18] sm:$0xff]
      %v3558 = vpack.c.bf16 %v3555, %v3554
      %v3559 = vpack.c.bf16 %v3557, %v3556
      %s3560 = scalar_lea.vmem %s8, 7
      %v3561 = vld [vmem:[%s3560] sm:$0x1]
      %v3563 = vlaneseq
      %v3564 = vshrl.u32 %v3563, 7
      %v3565 = vsub.s32 0, %v3564
      %v3566 = vrot.slane %v3561, %v3565
      %3568 = vmatprep.subr.bf16.mxu0 0
      %3569 = vmatpush1.bf16.msra.mxu0 %v3558
      %3570 = vmatprep.subr.bf16.mxu0 0
      %3571 = vmatpush1.bf16.msra.mxu0 %v3559
      %3572 = vmatprep.subr.bf16.mxu0 0
      %3573 = vmatpush1.bf16.msra.mxu0 0
      %3574 = vmatprep.subr.bf16.mxu0 0
      %3575 = vmatpush1.bf16.msra.mxu0 0
      %3576 = vmatprep.subr.bf16.mxu0 0
      %3577 = vmatpush1.bf16.msra.mxu0 0
      %3578 = vmatprep.subr.bf16.mxu0 0
      %3579 = vmatpush1.bf16.msra.mxu0 0
      %3580 = vmatprep.subr.bf16.mxu0 0
      %3581 = vmatpush1.bf16.msra.mxu0 0
      %3582 = vmatprep.subr.bf16.mxu0 0
      %3583 = vmatpush1.bf16.msra.mxu0 0
      %3584 = vmatprep.subr.bf16.mxu0 0
      %3585 = vmatpush1.bf16.msra.mxu0 0
      %3586 = vmatprep.subr.bf16.mxu0 0
      %3587 = vmatpush1.bf16.msra.mxu0 0
      %3588 = vmatprep.subr.bf16.mxu0 0
      %3589 = vmatpush1.bf16.msra.mxu0 0
      %3590 = vmatprep.subr.bf16.mxu0 0
      %3591 = vmatpush1.bf16.msra.mxu0 0
      %3592 = vmatprep.subr.bf16.mxu0 0
      %3593 = vmatpush1.bf16.msra.mxu0 0
      %3594 = vmatprep.subr.bf16.mxu0 0
      %3595 = vmatpush1.bf16.msra.mxu0 0
      %3596 = vmatprep.subr.bf16.mxu0 0
      %3597 = vmatpush1.bf16.msra.mxu0 0
      %3598 = vmatprep.subr.bf16.mxu0 0
      %3599 = vmatpush1.bf16.msra.mxu0 0
      %3600 = vmatprep.mubr.bf16.mxu0 0
      %3601 = vmatmul.mubr.bf16.gmra.mrb[0].mxu0 %v2389
      %v3602 = vpop.f32.mrb[0].mxu0
      %v3603 = vadd.f32 %v3566, %v3602
      %v3604 = vpop.f32.mrb[0].mxu0
      %v3605 = vpop.f32.mrb[0].mxu0
      %v3606 = vpop.f32.mrb[0].mxu0
      %3607 = vdwg.mxu0
      %3608 = vxpose.xlu0.b32.start [1/16] %v3548, 128
      %3609 = vxpose.xlu0.b32.cont [2/16] 0.0, 128
      %3610 = vxpose.xlu0.b32.cont [3/16] 0.0, 128
      %3611 = vxpose.xlu0.b32.cont [4/16] 0.0, 128
      %3612 = vxpose.xlu0.b32.cont [5/16] 0.0, 128
      %3613 = vxpose.xlu0.b32.cont [6/16] 0.0, 128
      %3614 = vxpose.xlu0.b32.cont [7/16] 0.0, 128
      %3615 = vxpose.xlu0.b32.cont [8/16] 0.0, 128
      %3616 = vxpose.xlu0.b32.cont [9/16] 0.0, 128
      %3617 = vxpose.xlu0.b32.cont [10/16] 0.0, 128
      %3618 = vxpose.xlu0.b32.cont [11/16] 0.0, 128
      %3619 = vxpose.xlu0.b32.cont [12/16] 0.0, 128
      %3620 = vxpose.xlu0.b32.cont [13/16] 0.0, 128
      %3621 = vxpose.xlu0.b32.cont [14/16] 0.0, 128
      %3622 = vxpose.xlu0.b32.cont [15/16] 0.0, 128
      %3623 = vxpose.xlu0.b32.end [16/16] 0.0, 128
      %v3624 = vpop.trf.xlu0
      %v3625 = vpop.trf.xlu0
      %v3626 = vpop.trf.xlu0
      %v3627 = vpop.trf.xlu0
      %v3628 = vpop.trf.xlu0
      %v3629 = vpop.trf.xlu0
      %v3630 = vpop.trf.xlu0
      %v3631 = vpop.trf.xlu0
      %v3632 = vpop.trf.xlu0
      %v3633 = vpop.trf.xlu0
      %v3634 = vpop.trf.xlu0
      %v3635 = vpop.trf.xlu0
      %v3636 = vpop.trf.xlu0
      %v3637 = vpop.trf.xlu0
      %v3638 = vpop.trf.xlu0
      %v3639 = vpop.trf.xlu0
      %v3640 = vpack.c.bf16 %v3497, %v3497
      %v3641 = vpack.c.bf16 %v3624, %v3624
      %v3643 = vsel %vm965, %v3640, 0
      %v3646 = vsel %vm969, %v3641, 0
      %3648 = vmatprep.subr.bf16.mxu0 0
      %3649 = vmatpush1.bf16.msra.mxu0 %v3646
      %3650 = vmatprep.subr.bf16.mxu0 0
      %3651 = vmatpush1.bf16.msra.mxu0 0
      %3652 = vmatprep.subr.bf16.mxu0 0
      %3653 = vmatpush1.bf16.msra.mxu0 0
      %3654 = vmatprep.subr.bf16.mxu0 0
      %3655 = vmatpush1.bf16.msra.mxu0 0
      %3656 = vmatprep.subr.bf16.mxu0 0
      %3657 = vmatpush1.bf16.msra.mxu0 0
      %3658 = vmatprep.subr.bf16.mxu0 0
      %3659 = vmatpush1.bf16.msra.mxu0 0
      %3660 = vmatprep.subr.bf16.mxu0 0
      %3661 = vmatpush1.bf16.msra.mxu0 0
      %3662 = vmatprep.subr.bf16.mxu0 0
      %3663 = vmatpush1.bf16.msra.mxu0 0
      %3664 = vmatprep.subr.bf16.mxu0 0
      %3665 = vmatpush1.bf16.msra.mxu0 0
      %3666 = vmatprep.subr.bf16.mxu0 0
      %3667 = vmatpush1.bf16.msra.mxu0 0
      %3668 = vmatprep.subr.bf16.mxu0 0
      %3669 = vmatpush1.bf16.msra.mxu0 0
      %3670 = vmatprep.subr.bf16.mxu0 0
      %3671 = vmatpush1.bf16.msra.mxu0 0
      %3672 = vmatprep.subr.bf16.mxu0 0
      %3673 = vmatpush1.bf16.msra.mxu0 0
      %3674 = vmatprep.subr.bf16.mxu0 0
      %3675 = vmatpush1.bf16.msra.mxu0 0
      %3676 = vmatprep.subr.bf16.mxu0 0
      %3677 = vmatpush1.bf16.msra.mxu0 0
      %3678 = vmatprep.subr.bf16.mxu0 0
      %3679 = vmatpush1.bf16.msra.mxu0 0
      %3680 = vmatprep.mubr.bf16.mxu0 0
      %3681 = vmatmul.mubr.bf16.gmra.mrb[0].mxu0 %v3643
      %v3682 = vpop.f32.mrb[0].mxu0
      %v3683 = vadd.f32 0.0, %v3682
      %v3684 = vpop.f32.mrb[0].mxu0
      %v3685 = vpop.f32.mrb[0].mxu0
      %v3686 = vpop.f32.mrb[0].mxu0
      %3687 = vdwg.mxu0
      %v3688 = vsel %vm965, %v3683, -inf
      %3689 = vmax.xlane.f32.xlu0 %v3688
      %v3690 = vpop.xlane.xlu0 %3689
      %v3691 = vsub.f32 %v3683, %v3690
      %v3692 = vmul.f32 %v3691, 1.442695
      %v3693 = vpow.pop %v3692
      %v3694 = vsel %vm965, %v3693, 0.0
      %3695 = vadd.xlane.f32.xlu0 %v3694
      %v3696 = vpop.xlane.xlu0 %3695
      %v3697 = vrcp.pop %v3696
      %v3698 = vmul.f32 %v3693, %v3697
      %v3699 = vpack.c.bf16 %v3698, %v3698
      %v3700 = vpack.c.bf16 %v3603, %v3603
      %v3702 = vsel %vm965, %v3699, 0
      %v3705 = vsel %vm969, %v3700, 0
      %3707 = vmatprep.subr.bf16.mxu0 0
      %3708 = vmatpush1.bf16.msra.mxu0 %v3705
      %3709 = vmatprep.subr.bf16.mxu0 0
      %3710 = vmatpush1.bf16.msra.mxu0 0
      %3711 = vmatprep.subr.bf16.mxu0 0
      %3712 = vmatpush1.bf16.msra.mxu0 0
      %3713 = vmatprep.subr.bf16.mxu0 0
      %3714 = vmatpush1.bf16.msra.mxu0 0
      %3715 = vmatprep.subr.bf16.mxu0 0
      %3716 = vmatpush1.bf16.msra.mxu0 0
      %3717 = vmatprep.subr.bf16.mxu0 0
      %3718 = vmatpush1.bf16.msra.mxu0 0
      %3719 = vmatprep.subr.bf16.mxu0 0
      %3720 = vmatpush1.bf16.msra.mxu0 0
      %3721 = vmatprep.subr.bf16.mxu0 0
      %3722 = vmatpush1.bf16.msra.mxu0 0
      %3723 = vmatprep.subr.bf16.mxu0 0
      %3724 = vmatpush1.bf16.msra.mxu0 0
      %3725 = vmatprep.subr.bf16.mxu0 0
      %3726 = vmatpush1.bf16.msra.mxu0 0
      %3727 = vmatprep.subr.bf16.mxu0 0
      %3728 = vmatpush1.bf16.msra.mxu0 0
      %3729 = vmatprep.subr.bf16.mxu0 0
      %3730 = vmatpush1.bf16.msra.mxu0 0
      %3731 = vmatprep.subr.bf16.mxu0 0
      %3732 = vmatpush1.bf16.msra.mxu0 0
      %3733 = vmatprep.subr.bf16.mxu0 0
      %3734 = vmatpush1.bf16.msra.mxu0 0
      %3735 = vmatprep.subr.bf16.mxu0 0
      %3736 = vmatpush1.bf16.msra.mxu0 0
      %3737 = vmatprep.subr.bf16.mxu0 0
      %3738 = vmatpush1.bf16.msra.mxu0 0
      %3739 = vmatprep.mubr.bf16.mxu0 0
      %3740 = vmatmul.mubr.bf16.gmra.mrb[0].mxu0 %v3702
      %v3741 = vpop.f32.mrb[0].mxu0
      %v3742 = vadd.f32 0.0, %v3741
      %v3743 = vpop.f32.mrb[0].mxu0
      %v3744 = vpop.f32.mrb[0].mxu0
      %v3745 = vpop.f32.mrb[0].mxu0
      %3746 = vdwg.mxu0
      %s3747 = scalar_lea.vmem %s9, 56
      %v3748 = vld [vmem:[%s3747] sm:$0xff]
      %v3749 = vpack.c.bf16 %v3742, %v3742
      %v3750 = vpack.c.bf16 %v3748, %v3748
      %v3752 = vsel %vm965, %v3749, 0
      %v3755 = vsel %vm969, %v3750, 0
      %3757 = vmatprep.subr.bf16.mxu0 0
      %3758 = vmatpush1.bf16.msra.mxu0 %v3755
      %3759 = vmatprep.subr.bf16.mxu0 0
      %3760 = vmatpush1.bf16.msra.mxu0 0
      %3761 = vmatprep.subr.bf16.mxu0 0
      %3762 = vmatpush1.bf16.msra.mxu0 0
      %3763 = vmatprep.subr.bf16.mxu0 0
      %3764 = vmatpush1.bf16.msra.mxu0 0
      %3765 = vmatprep.subr.bf16.mxu0 0
      %3766 = vmatpush1.bf16.msra.mxu0 0
      %3767 = vmatprep.subr.bf16.mxu0 0
      %3768 = vmatpush1.bf16.msra.mxu0 0
      %3769 = vmatprep.subr.bf16.mxu0 0
      %3770 = vmatpush1.bf16.msra.mxu0 0
      %3771 = vmatprep.subr.bf16.mxu0 0
      %3772 = vmatpush1.bf16.msra.mxu0 0
      %3773 = vmatprep.subr.bf16.mxu0 0
      %3774 = vmatpush1.bf16.msra.mxu0 0
      %3775 = vmatprep.subr.bf16.mxu0 0
      %3776 = vmatpush1.bf16.msra.mxu0 0
      %3777 = vmatprep.subr.bf16.mxu0 0
      %3778 = vmatpush1.bf16.msra.mxu0 0
      %3779 = vmatprep.subr.bf16.mxu0 0
      %3780 = vmatpush1.bf16.msra.mxu0 0
      %3781 = vmatprep.subr.bf16.mxu0 0
      %3782 = vmatpush1.bf16.msra.mxu0 0
      %3783 = vmatprep.subr.bf16.mxu0 0
      %3784 = vmatpush1.bf16.msra.mxu0 0
      %3785 = vmatprep.subr.bf16.mxu0 0
      %3786 = vmatpush1.bf16.msra.mxu0 0
      %3787 = vmatprep.subr.bf16.mxu0 0
      %3788 = vmatpush1.bf16.msra.mxu0 0
      %3789 = vmatprep.mubr.bf16.mxu0 0
      %3790 = vmatmul.mubr.bf16.gmra.mrb[0].mxu0 %v3752
      %v3791 = vpop.f32.mrb[0].mxu0
      %v3792 = vadd.f32 0.0, %v3791
      %v3793 = vpop.f32.mrb[0].mxu0
      %v3794 = vpop.f32.mrb[0].mxu0
      %v3795 = vpop.f32.mrb[0].mxu0
      %3796 = vdwg.mxu0
      %v3797 = vadd.f32 %v3441, %v3792
      %s3798 = scalar_lea.vmem %s10, 1
      %v3799 = vld [vmem:[%s3798] sm:$0x1]
      %v3801 = vlaneseq
      %v3802 = vshrl.u32 %v3801, 7
      %v3803 = vsub.s32 0, %v3802
      %v3804 = vrot.slane %v3799, %v3803
      %v3806 = vadd.f32 %v3797, %v3804
      %v3807 = vadd.f32 %v3806, %v2371
      %s3808 = scalar_lea.vmem %s15, 1
      %v3809 = vld [vmem:[%s3808] sm:$0x1]
      %s3810 = scalar_lea.vmem %s16, 1
      %v3811 = vld [vmem:[%s3810] sm:$0x1]
      %v3812 = vsel %vm780, %v3807, 0.0
      %3813 = vadd.xlane.f32.xlu0 %v3812
      %v3814 = vpop.xlane.xlu0 %3813
      %v3815 = vmul.f32 %v3814, %v2202
      %v3816 = vsub.f32 %v3807, %v3815
      %v3817 = vmul.f32 %v3816, %v3816
      %v3818 = vsel %vm780, %v3817, 0.0
      %3819 = vadd.xlane.f32.xlu0 %v3818
      %v3820 = vpop.xlane.xlu0 %3819
      %v3821 = vmul.f32 %v3820, %v2202
      %v3822 = vadd.f32 %v3821, 1e-05
      %v3823 = vrsqrt.pop %v3822
      %v3824 = vmul.f32 %v3816, %v3823
      %v3826 = vlaneseq
      %v3827 = vshrl.u32 %v3826, 7
      %v3828 = vsub.s32 0, %v3827
      %v3829 = vrot.slane %v3809, %v3828
      %v3831 = vmul.f32 %v3824, %v3829
      %v3833 = vlaneseq
      %v3834 = vshrl.u32 %v3833, 7
      %v3835 = vsub.s32 0, %v3834
      %v3836 = vrot.slane %v3811, %v3835
      %v3838 = vadd.f32 %v3831, %v3836
      %v3839 = vpack.c.bf16 %v3838, %v3838
      %s3840 = scalar_lea.vmem %s11, 32
      %v3841 = vld [vmem:[%s3840] sm:$0xff]
      %v3842 = vld [vmem:[%s3840 + $0x8] sm:$0xff]
      %v3843 = vld [vmem:[%s3840 + $0x10] sm:$0xff]
      %v3844 = vld [vmem:[%s3840 + $0x18] sm:$0xff]
      %v3845 = vpack.c.bf16 %v3842, %v3841
      %v3846 = vpack.c.bf16 %v3844, %v3843
      %s3847 = scalar_lea.vmem %s12, 1
      %v3848 = vld [vmem:[%s3847] sm:$0x1]
      %v3850 = vlaneseq
      %v3851 = vshrl.u32 %v3850, 7
      %v3852 = vsub.s32 0, %v3851
      %v3853 = vrot.slane %v3848, %v3852
      %v3856 = vsel %vm780, %v3839, 0
      %3858 = vmatprep.subr.bf16.mxu0 0
      %3859 = vmatpush1.bf16.msra.mxu0 %v3845
      %3860 = vmatprep.subr.bf16.mxu0 0
      %3861 = vmatpush1.bf16.msra.mxu0 %v3846
      %3862 = vmatprep.subr.bf16.mxu0 0
      %3863 = vmatpush1.bf16.msra.mxu0 0
      %3864 = vmatprep.subr.bf16.mxu0 0
      %3865 = vmatpush1.bf16.msra.mxu0 0
      %3866 = vmatprep.subr.bf16.mxu0 0
      %3867 = vmatpush1.bf16.msra.mxu0 0
      %3868 = vmatprep.subr.bf16.mxu0 0
      %3869 = vmatpush1.bf16.msra.mxu0 0
      %3870 = vmatprep.subr.bf16.mxu0 0
      %3871 = vmatpush1.bf16.msra.mxu0 0
      %3872 = vmatprep.subr.bf16.mxu0 0
      %3873 = vmatpush1.bf16.msra.mxu0 0
      %3874 = vmatprep.subr.bf16.mxu0 0
      %3875 = vmatpush1.bf16.msra.mxu0 0
      %3876 = vmatprep.subr.bf16.mxu0 0
      %3877 = vmatpush1.bf16.msra.mxu0 0
      %3878 = vmatprep.subr.bf16.mxu0 0
      %3879 = vmatpush1.bf16.msra.mxu0 0
      %3880 = vmatprep.subr.bf16.mxu0 0
      %3881 = vmatpush1.bf16.msra.mxu0 0
      %3882 = vmatprep.subr.bf16.mxu0 0
      %3883 = vmatpush1.bf16.msra.mxu0 0
      %3884 = vmatprep.subr.bf16.mxu0 0
      %3885 = vmatpush1.bf16.msra.mxu0 0
      %3886 = vmatprep.subr.bf16.mxu0 0
      %3887 = vmatpush1.bf16.msra.mxu0 0
      %3888 = vmatprep.subr.bf16.mxu0 0
      %3889 = vmatpush1.bf16.msra.mxu0 0
      %3890 = vmatprep.mubr.bf16.mxu0 0
      %3891 = vmatmul.mubr.bf16.gmra.mrb[0].mxu0 %v3856
      %v3892 = vpop.f32.mrb[0].mxu0
      %v3893 = vadd.f32 %v3853, %v3892
      %v3894 = vpop.f32.mrb[0].mxu0
      %v3895 = vpop.f32.mrb[0].mxu0
      %v3896 = vpop.f32.mrb[0].mxu0
      %3897 = vdwg.mxu0
      %v3898 = vmax.f32 %v3893, 0.0
      %s3899 = scalar_lea.vmem %s13, 32
      %v3900 = vld [vmem:[%s3899] sm:$0xff]
      %v3901 = vld [vmem:[%s3899 + $0x8] sm:$0xff]
      %v3902 = vld [vmem:[%s3899 + $0x10] sm:$0xff]
      %v3903 = vld [vmem:[%s3899 + $0x18] sm:$0xff]
      %v3904 = vpack.c.bf16 %v3898, %v3898
      %v3905 = vpack.c.bf16 %v3901, %v3900
      %v3906 = vpack.c.bf16 %v3903, %v3902
      %s3907 = scalar_lea.vmem %s14, 1
      %v3908 = vld [vmem:[%s3907] sm:$0x1]
      %v3910 = vlaneseq
      %v3911 = vshrl.u32 %v3910, 7
      %v3912 = vsub.s32 0, %v3911
      %v3913 = vrot.slane %v3908, %v3912
      %v3916 = vsel %vm780, %v3904, 0
      %3918 = vmatprep.subr.bf16.mxu0 0
      %3919 = vmatpush1.bf16.msra.mxu0 %v3905
      %3920 = vmatprep.subr.bf16.mxu0 0
      %3921 = vmatpush1.bf16.msra.mxu0 %v3906
      %3922 = vmatprep.subr.bf16.mxu0 0
      %3923 = vmatpush1.bf16.msra.mxu0 0
      %3924 = vmatprep.subr.bf16.mxu0 0
      %3925 = vmatpush1.bf16.msra.mxu0 0
      %3926 = vmatprep.subr.bf16.mxu0 0
      %3927 = vmatpush1.bf16.msra.mxu0 0
      %3928 = vmatprep.subr.bf16.mxu0 0
      %3929 = vmatpush1.bf16.msra.mxu0 0
      %3930 = vmatprep.subr.bf16.mxu0 0
      %3931 = vmatpush1.bf16.msra.mxu0 0
      %3932 = vmatprep.subr.bf16.mxu0 0
      %3933 = vmatpush1.bf16.msra.mxu0 0
      %3934 = vmatprep.subr.bf16.mxu0 0
      %3935 = vmatpush1.bf16.msra.mxu0 0
      %3936 = vmatprep.subr.bf16.mxu0 0
      %3937 = vmatpush1.bf16.msra.mxu0 0
      %3938 = vmatprep.subr.bf16.mxu0 0
      %3939 = vmatpush1.bf16.msra.mxu0 0
      %3940 = vmatprep.subr.bf16.mxu0 0
      %3941 = vmatpush1.bf16.msra.mxu0 0
      %3942 = vmatprep.subr.bf16.mxu0 0
      %3943 = vmatpush1.bf16.msra.mxu0 0
      %3944 = vmatprep.subr.bf16.mxu0 0
      %3945 = vmatpush1.bf16.msra.mxu0 0
      %3946 = vmatprep.subr.bf16.mxu0 0
      %3947 = vmatpush1.bf16.msra.mxu0 0
      %3948 = vmatprep.subr.bf16.mxu0 0
      %3949 = vmatpush1.bf16.msra.mxu0 0
      %3950 = vmatprep.mubr.bf16.mxu0 0
      %3951 = vmatmul.mubr.bf16.gmra.mrb[0].mxu0 %v3916
      %v3952 = vpop.f32.mrb[0].mxu0
      %v3953 = vadd.f32 %v3913, %v3952
      %v3954 = vpop.f32.mrb[0].mxu0
      %v3955 = vpop.f32.mrb[0].mxu0
      %v3956 = vpop.f32.mrb[0].mxu0
      %3957 = vdwg.mxu0
      %v3958 = vadd.f32 %v3953, %v3838
      %s3959 = scalar_lea.vmem %s17, 1
      %v3960 = vld [vmem:[%s3959] sm:$0x1]
      %s3961 = scalar_lea.vmem %s18, 1
      %v3962 = vld [vmem:[%s3961] sm:$0x1]
      %v3963 = vsel %vm780, %v3958, 0.0
      %3964 = vadd.xlane.f32.xlu0 %v3963
      %v3965 = vpop.xlane.xlu0 %3964
      %v3966 = vmul.f32 %v3965, %v2202
      %v3967 = vsub.f32 %v3958, %v3966
      %v3968 = vmul.f32 %v3967, %v3967
      %v3969 = vsel %vm780, %v3968, 0.0
      %3970 = vadd.xlane.f32.xlu0 %v3969
      %v3971 = vpop.xlane.xlu0 %3970
      %v3972 = vmul.f32 %v3971, %v2202
      %v3973 = vadd.f32 %v3972, 1e-05
      %v3974 = vrsqrt.pop %v3973
      %v3975 = vmul.f32 %v3967, %v3974
      %v3977 = vlaneseq
      %v3978 = vshrl.u32 %v3977, 7
      %v3979 = vsub.s32 0, %v3978
      %v3980 = vrot.slane %v3960, %v3979
      %v3982 = vmul.f32 %v3975, %v3980
      %v3984 = vlaneseq
      %v3985 = vshrl.u32 %v3984, 7
      %v3986 = vsub.s32 0, %v3985
      %v3987 = vrot.slane %v3962, %v3986
      %v3989 = vadd.f32 %v3982, %v3987
      %v3990 = vld [vmem:[%s19] sm:$0x1]
      %v3991 = vld [vmem:[%s20] sm:$0x1]
      %v3992 = vsel %vm780, %v3989, 0.0
      %3993 = vadd.xlane.f32.xlu0 %v3992
      %v3994 = vpop.xlane.xlu0 %3993
      %v3995 = vmul.f32 %v3994, %v2202
      %v3996 = vsub.f32 %v3989, %v3995
      %v3997 = vmul.f32 %v3996, %v3996
      %v3998 = vsel %vm780, %v3997, 0.0
      %3999 = vadd.xlane.f32.xlu0 %v3998
      %v4000 = vpop.xlane.xlu0 %3999
      %v4001 = vmul.f32 %v4000, %v2202
      %v4002 = vadd.f32 %v4001, 1e-05
      %v4003 = vrsqrt.pop %v4002
      %v4004 = vmul.f32 %v3996, %v4003
      %v4006 = vlaneseq
      %v4007 = vshrl.u32 %v4006, 7
      %v4008 = vsub.s32 0, %v4007
      %v4009 = vrot.slane %v3990, %v4008
      %v4011 = vmul.f32 %v4004, %v4009
      %v4013 = vlaneseq
      %v4014 = vshrl.u32 %v4013, 7
      %v4015 = vsub.s32 0, %v4014
      %v4016 = vrot.slane %v3991, %v4015
      %v4018 = vadd.f32 %v4011, %v4016
      %v4019 = vld [vmem:[%s21] sm:$0xff]
      %v4020 = vld [vmem:[%s21 + $0x8] sm:$0xff]
      %v4021 = vld [vmem:[%s21 + $0x10] sm:$0xff]
      %v4022 = vld [vmem:[%s21 + $0x18] sm:$0xff]
      %v4023 = vpack.c.bf16 %v4018, %v4018
      %v4024 = vpack.c.bf16 %v4020, %v4019
      %v4025 = vpack.c.bf16 %v4022, %v4021
      %v4026 = vld [vmem:[%s22] sm:$0x1]
      %v4028 = vlaneseq
      %v4029 = vshrl.u32 %v4028, 7
      %v4030 = vsub.s32 0, %v4029
      %v4031 = vrot.slane %v4026, %v4030
      %v4034 = vsel %vm780, %v4023, 0
      %4036 = vmatprep.subr.bf16.mxu0 0
      %4037 = vmatpush1.bf16.msra.mxu0 %v4024
      %4038 = vmatprep.subr.bf16.mxu0 0
      %4039 = vmatpush1.bf16.msra.mxu0 %v4025
      %4040 = vmatprep.subr.bf16.mxu0 0
      %4041 = vmatpush1.bf16.msra.mxu0 0
      %4042 = vmatprep.subr.bf16.mxu0 0
      %4043 = vmatpush1.bf16.msra.mxu0 0
      %4044 = vmatprep.subr.bf16.mxu0 0
      %4045 = vmatpush1.bf16.msra.mxu0 0
      %4046 = vmatprep.subr.bf16.mxu0 0
      %4047 = vmatpush1.bf16.msra.mxu0 0
      %4048 = vmatprep.subr.bf16.mxu0 0
      %4049 = vmatpush1.bf16.msra.mxu0 0
      %4050 = vmatprep.subr.bf16.mxu0 0
      %4051 = vmatpush1.bf16.msra.mxu0 0
      %4052 = vmatprep.subr.bf16.mxu0 0
      %4053 = vmatpush1.bf16.msra.mxu0 0
      %4054 = vmatprep.subr.bf16.mxu0 0
      %4055 = vmatpush1.bf16.msra.mxu0 0
      %4056 = vmatprep.subr.bf16.mxu0 0
      %4057 = vmatpush1.bf16.msra.mxu0 0
      %4058 = vmatprep.subr.bf16.mxu0 0
      %4059 = vmatpush1.bf16.msra.mxu0 0
      %4060 = vmatprep.subr.bf16.mxu0 0
      %4061 = vmatpush1.bf16.msra.mxu0 0
      %4062 = vmatprep.subr.bf16.mxu0 0
      %4063 = vmatpush1.bf16.msra.mxu0 0
      %4064 = vmatprep.subr.bf16.mxu0 0
      %4065 = vmatpush1.bf16.msra.mxu0 0
      %4066 = vmatprep.subr.bf16.mxu0 0
      %4067 = vmatpush1.bf16.msra.mxu0 0
      %4068 = vmatprep.mubr.bf16.mxu0 0
      %4069 = vmatmul.mubr.bf16.gmra.mrb[0].mxu0 %v4034
      %v4070 = vpop.f32.mrb[0].mxu0
      %v4071 = vadd.f32 %v4031, %v4070
      %v4072 = vpop.f32.mrb[0].mxu0
      %v4073 = vpop.f32.mrb[0].mxu0
      %v4074 = vpop.f32.mrb[0].mxu0
      %4075 = vdwg.mxu0
      %vm4076 = vcmask 31744
      %4077 = vst.msk [vmem:[%s705] sm:$0xff] %vm4076, %v4071
      %p4078 = scmp.lt.s32.totalorder %s34, 1
      %s4079 = scalar_select %p4078, %s34, 1
      %s4080 = smul.addr %s4079, 8
      %s4081 = scalar_lea.vmem %s23, %s4080
      // Predicated region
      $region113: #{bert_forward.1} parent=111 // pred_check
        %p4082 = pneg %p540
      $region114: #{bert_forward.1} parent=111 // pred_check_branch
        %4084 = sbr.rel (%p4082) target = $region116
      $region115: #{bert_forward.1} parent=111 // pred_region
        _
      $region116: #{bert_forward.1} parent=111 // pred_fallthru
        _
    $region112: #{bert_forward.1} parent=5 // pred_fallthru
      _
    %p4085 = scmp.le.s32.totalorder 2, %s29
    // Predicated region
    $region117: #{bert_forward.1} parent=5 // pred_check
      %p4086 = pneg %p4085
    $region118: #{bert_forward.1} parent=5 // pred_check_branch
      %4088 = sbr.rel (%p4086) target = $region120
    $region119: #{bert_forward.1} parent=5 // pred_region
      %s4089 = ssub.s32 %s29, 2
      // Predicated region
      $region121: #{bert_forward.1} parent=119 // pred_check
        %p4090 = pneg %p546
      $region122: #{bert_forward.1} parent=119 // pred_check_branch
        %4092 = sbr.rel (%p4090) target = $region124
      $region123: #{bert_forward.1} parent=119 // pred_region
        %p4093 = scmp.lt.s32.totalorder %s35, 1
        %s4094 = scalar_select %p4093, %s35, 1
        %s4095 = smul.addr %s4094, 8
        %s4096 = scalar_lea.vmem %s23, %s4095
      $region124: #{bert_forward.1} parent=119 // pred_fallthru
        _
    $region120: #{bert_forward.1} parent=5 // pred_fallthru
      _
  $region6: #{bert_forward.1} parent=0 // loop_footer
    %s33 = sadd.s32 1, %s29
  $region7: #{bert_forward.1} parent=0 // loop_footer_branch
    %28 = sbr.rel target = $region3
  $region8: #{bert_forward.1} parent=0 // loop_exit
    _

</llo_original>
